<compile_context>
chip_gen: v6e
topology: v6e:2x2x1
jax: 0.10.0
libtpu: 0.0.40
codegen_flags: <defaults>
</compile_context>

<pallas_src>
import functools

import jax
import jax.numpy as jnp
from jax.experimental import pallas as pl
from jax.experimental.pallas import tpu as pltpu

LANE = 128
N_ALIGN = 512                        # pad node count so the K tile never collapses to 128
VMEM_LIMIT = 48 * 1024 * 1024        # explicit budget, safe on v7x (64 MiB physical)
RESIDENT_BUDGET = 40 * 1024 * 1024   # cap for keeping HW_neigh fully VMEM-resident


def _round_up(x, m):
    return ((x + m - 1) // m) * m


def _pick_row_tile(n_pad):
    # n_pad is a multiple of 512.  Prefer an even number of row tiles (>= 2) so
    # the "parallel" axis balances across v7x's two TensorCores.
    if (n_pad // 512) % 2 == 0:
        return 512
    return 256


def _pick_k_tile(n_pad, max_tk=2048):
    for tk in (max_tk, 1024, 512):
        if tk <= n_pad and n_pad % tk == 0:
            return tk
    return n_pad


# ---------------------------------------------------------------------------
# Pre-pass:  HW = H_bf16 @ [W_self | W_neigh]_bf16 + [bias | 0]   (bf16 MXU)
# ---------------------------------------------------------------------------
def linear_kernel(h_ref, w_ref, b_ref, o_ref):
    o_ref[...] = (
        jnp.dot(h_ref[...], w_ref[...], preferred_element_type=jnp.float32)
        + b_ref[...]
    ).astype(o_ref.dtype)


def linear(h_bf16, w_stacked_bf16, bias2_f32, *, tm):
    n, f_in = h_bf16.shape
    f_out2 = w_stacked_bf16.shape[1]
    return pl.pallas_call(
        linear_kernel,
        out_shape=jax.ShapeDtypeStruct((n, f_out2), jnp.bfloat16),
        grid_spec=pltpu.PrefetchScalarGridSpec(
            num_scalar_prefetch=0,
            grid=(n // tm,),
            in_specs=[
                pl.BlockSpec((tm, f_in), lambda i: (i, 0)),
                pl.BlockSpec((f_in, f_out2), lambda i: (0, 0)),   # weights, fetched once
                pl.BlockSpec((1, f_out2), lambda i: (0, 0)),      # [bias | 0], fetched once
            ],
            out_specs=pl.BlockSpec((tm, f_out2), lambda i: (i, 0)),
        ),
        compiler_params=pltpu.CompilerParams(
            dimension_semantics=("parallel",),
            vmem_limit_bytes=VMEM_LIMIT),
    )(h_bf16, w_stacked_bf16, bias2_f32)


# ---------------------------------------------------------------------------
# Main pass:  out = HW_self + (1/deg) * (A01 @ HW_neigh)   (K-tiled, f32 acc)
# ---------------------------------------------------------------------------
def sage_main_kernel(a_ref, hwn_ref, hws_ref, invdeg_ref, o_ref, acc_ref, *,
                     apply_relu, tk, resident_hw):
    k = pl.program_id(1)

    @pl.when(k == 0)
    def _():
        acc_ref[...] = jnp.zeros_like(acc_ref)

    # int8 0/1 mask -> bf16 (exact); the convert rides idle VPU slots of a
    # memory-bound loop.  bf16 x bf16 on the MXU with f32 accumulation.
    a = a_ref[...].astype(jnp.float32).astype(jnp.bfloat16)
    if resident_hw:
        start = pl.multiple_of(k * tk, 256)
        hwn = hwn_ref[pl.ds(start, tk), :]
    else:
        hwn = hwn_ref[...]
    acc_ref[...] += jnp.dot(a, hwn, preferred_element_type=jnp.float32)

    @pl.when(k == pl.num_programs(1) - 1)
    def _():
        # Exact f32 per-row mean normalization; bias is already folded into
        # HW_self by the linear pre-pass.
        out = acc_ref[...] * invdeg_ref[...] + hws_ref[...].astype(jnp.float32)
        if apply_relu:
            out = jnp.maximum(out, 0.0)   # activation = ReLU
        o_ref[...] = out.astype(o_ref.dtype)


def sage_conv(adj_i8, inv_deg, h, w_stacked_bf16, bias2_f32, *,
              apply_relu, out_dtype, force_tiled=False):
    """One SAGEConv ('mean') layer on padded tensors.

    adj_i8:          [N_pad, N_pad] int8 0/1 mask (zero padded)
    inv_deg:         [N_pad, 1] f32 (1 / clamp(deg, 1))
    h:               [N_pad, F_in_pad] (bf16 or f32)
    w_stacked_bf16:  [F_in_pad, 2*F_out_pad] bf16 ([W_self | W_neigh], zero padded)
    bias2_f32:       [1, 2*F_out_pad] f32 ([bias | 0])
    returns:         [N_pad, F_out_pad] out_dtype
    """
    n = adj_i8.shape[0]
    f_out2 = w_stacked_bf16.shape[1]
    f_out = f_out2 // 2

    tm = min(_pick_row_tile(n), n)
    tk = _pick_k_tile(n)

    # Pre-pass: HW = H @ [W_self | W_neigh] + [bias | 0]  -> [N_pad, 2*F_out] bf16
    hw = linear(h.astype(jnp.bfloat16), w_stacked_bf16, bias2_f32, tm=tm)

    # Decide whether HW_neigh ([N_pad, F_out] bf16) can stay fully VMEM-resident
    # (fetched once, never re-streamed per row tile).  Budgeted for v7x's 64 MiB
    # physical VMEM: count it twice (pipeline buffers) plus the other
    # double-buffered tiles and the accumulator.
    out_bytes = jnp.dtype(out_dtype).itemsize
    fixed = (2 * tm * tk * 1                 # A int8 tiles
             + 2 * tm * f_out * 2            # HW_self tiles (bf16)
             + 2 * tm * 4                    # 1/deg tiles
             + 2 * tm * f_out * out_bytes    # output tiles
             + tm * f_out * 4)               # f32 accumulator scratch
    resident = (not force_tiled) and (fixed + 2 * n * f_out * 2 <= RESIDENT_BUDGET)

    if resident:
        # Constant block index -> Pallas DMAs this block exactly once.
        hwn_spec = pl.BlockSpec((n, f_out), lambda i, k: (0, 1))
    else:
        hwn_spec = pl.BlockSpec((tk, f_out), lambda i, k: (k, 1))

    kernel = functools.partial(sage_main_kernel, apply_relu=apply_relu,
                               tk=tk, resident_hw=resident)
    return pl.pallas_call(
        kernel,
        out_shape=jax.ShapeDtypeStruct((n, f_out), out_dtype),
        grid_spec=pltpu.PrefetchScalarGridSpec(
            num_scalar_prefetch=0,
            grid=(n // tm, n // tk),
            in_specs=[
                pl.BlockSpec((tm, tk), lambda i, k: (i, k)),      # A mask tile
                hwn_spec,                                         # HW_neigh
                pl.BlockSpec((tm, f_out), lambda i, k: (i, 0)),   # HW_self (per row tile)
                pl.BlockSpec((tm, 1), lambda i, k: (i, 0)),       # 1/deg (per row tile)
            ],
            out_specs=pl.BlockSpec((tm, f_out), lambda i, k: (i, 0)),
            scratch_shapes=[pltpu.VMEM((tm, f_out), jnp.float32)],
        ),
        compiler_params=pltpu.CompilerParams(
            dimension_semantics=("parallel", "arbitrary"),
            vmem_limit_bytes=VMEM_LIMIT),
    )(adj_i8, hw, hw, inv_deg)


# ---------------------------------------------------------------------------
# Jitted forward over all layers
# ---------------------------------------------------------------------------
@functools.partial(jax.jit, static_argnames=("force_tiled",))
def graphsage_forward(adj01, feat, padded_params, force_tiled=False):
    n, f_in = feat.shape
    n_pad = _round_up(n, N_ALIGN)
    f_in_pad = _round_up(f_in, LANE)

    # Build the streaming adjacency directly in its streaming dtype (int8 0/1);
    # keep the mean normalization as an exact f32 per-row 1/deg vector.
    adj_i8 = jnp.zeros((n_pad, n_pad), jnp.int8).at[:n, :n].set(
        adj01.astype(jnp.int8))
    deg = jnp.maximum(adj01.astype(jnp.float32).sum(axis=1), 1.0)   # DGL-style clamp
    inv_deg = jnp.ones((n_pad, 1), jnp.float32).at[:n, 0].set(1.0 / deg)

    h = jnp.zeros((n_pad, f_in_pad), jnp.bfloat16).at[:n, :f_in].set(
        feat.astype(jnp.bfloat16))

    n_layers = len(padded_params)
    for l, (w_stacked, bias2) in enumerate(padded_params):
        last = (l == n_layers - 1)
        h = sage_conv(adj_i8, inv_deg, h, w_stacked, bias2,
                      apply_relu=not last,
                      out_dtype=jnp.float32 if last else jnp.bfloat16,
                      force_tiled=force_tiled)
        # TODO(synk): dropout between layers is identity here (eval mode);
        # training-mode dropout would use pltpu.prng_random_bits in the epilogue.
    return h


# ---------------------------------------------------------------------------
# Model wrapper (mirrors GraphSAGE(in_feats, n_hidden, n_classes, n_layers,
#                                  relu, dropout, 'mean'))
# ---------------------------------------------------------------------------
class GraphSAGEPallas:

    def __init__(self, in_feats, n_hidden, n_classes, n_layers, key):
        self.n_layers = n_layers
        self.n_classes = n_classes
        self.params = []       # unpadded f32 (w_self, w_neigh, bias) for reference
        padded = []
        for i in range(n_layers):
            in_h = n_hidden if i > 0 else in_feats
            out_h = n_hidden if i < n_layers - 1 else n_classes
            key, k1, k2, k3 = jax.random.split(key, 4)
            scale = 1.0 / jnp.sqrt(jnp.float32(in_h))
            w_self = jax.random.uniform(k1, (in_h, out_h), jnp.float32, -scale, scale)
            w_neigh = jax.random.uniform(k2, (in_h, out_h), jnp.float32, -scale, scale)
            bias = jax.random.uniform(k3, (1, out_h), jnp.float32, -scale, scale)
            self.params.append((w_self, w_neigh, bias))

            in_p = _round_up(in_h, LANE)
            out_p = _round_up(out_h, LANE)
            ws = jnp.zeros((in_p, out_p), jnp.float32).at[:in_h, :out_h].set(w_self)
            wn = jnp.zeros((in_p, out_p), jnp.float32).at[:in_h, :out_h].set(w_neigh)
            w_stacked = jnp.concatenate([ws, wn], axis=1).astype(jnp.bfloat16)
            bias2 = jnp.zeros((1, 2 * out_p), jnp.float32).at[:, :out_h].set(bias)
            padded.append((w_stacked, bias2))
        self.padded = tuple(padded)

    def __call__(self, adj01, feat, *, force_tiled=False):
        n = adj01.shape[0]
        h = graphsage_forward(adj01, feat, self.padded, force_tiled=force_tiled)
        return h[:n, :self.n_classes]


def reference_forward(adj01, feat, params, n_layers):
    deg = jnp.maximum(adj01.sum(axis=1, keepdims=True), 1.0)
    h = feat
    for l, (w_self, w_neigh, bias) in enumerate(params):
        agg = (adj01 @ h) / deg
        h = h @ w_self + agg @ w_neigh + bias
        if l < n_layers - 1:
            h = jnp.maximum(h, 0.0)
    return h


if __name__ == "__main__":
    key = jax.random.PRNGKey(0)

    N = 128          # nodes
    in_feats = 32
    n_hidden = 64
    n_classes = 16
    n_layers = 3

    key, k_adj, k_feat, k_model = jax.random.split(key, 4)

    # Random directed graph: dense 0/1 adjacency (mean aggregator normalizes by
    # in-degree, clamped >= 1 like DGL).
    adj01 = (jax.random.uniform(k_adj, (N, N)) < 0.05).astype(jnp.float32)
    feat = jax.random.normal(k_feat, (N, in_feats), jnp.float32)

    model = GraphSAGEPallas(in_feats, n_hidden, n_classes, n_layers, k_model)

    out = jax.block_until_ready(model(adj01, feat))
    ref = reference_forward(adj01, feat, model.params, n_layers)
    assert out.shape == (N, n_classes)
    err = float(jnp.max(jnp.abs(out - ref)))
    assert jnp.allclose(out, ref, atol=5e-2, rtol=5e-2), err

    # Also exercise the k-tiled HW_neigh fallback (used when the resident block
    # would not fit the v7x-aware VMEM budget).
    out_tiled = jax.block_until_ready(model(adj01, feat, force_tiled=True))
    err_tiled = float(jnp.max(jnp.abs(out_tiled - ref)))
    assert jnp.allclose(out_tiled, ref, atol=5e-2, rtol=5e-2), err_tiled

    print("KERNEL_OK")
</pallas_src>

<mosaic_0001>
module attributes {stable_mosaic.version = 11 : i64} {
  func.func @sage_main_kernel(%arg0: i32, %arg1: i32, %arg2: memref<256x512xi8, #tpu.memory_space<vmem>>, %arg3: memref<512x128xbf16, #tpu.memory_space<vmem>>, %arg4: memref<256x128xbf16, #tpu.memory_space<vmem>>, %arg5: memref<256x1xf32, #tpu.memory_space<vmem>>, %arg6: memref<256x128xf32, #tpu.memory_space<vmem>>, %arg7: memref<256x128xf32, #tpu.memory_space<vmem>>) attributes {dimension_semantics = [#tpu.dimension_semantics<parallel>, #tpu.dimension_semantics<arbitrary>], iteration_bounds = array<i64: 2, 1>, scalar_prefetch = 0 : i64, scratch_operands = 1 : i64, tpu.core_type = #tpu.core_type<tc>, window_params = [{transform_indices = @transform_0, window_bounds = array<i64: 256, 512>}, {transform_indices = @transform_1, window_bounds = array<i64: 512, 128>}, {transform_indices = @transform_2, window_bounds = array<i64: 256, 128>}, {transform_indices = @transform_3, window_bounds = array<i64: 256, 1>}, {transform_indices = @transform_4, window_bounds = array<i64: 256, 128>}]} {
    %c0_i32 = arith.constant 0 : i32
    %0 = arith.cmpi eq, %arg1, %c0_i32 : i32
    %1 = arith.extui %0 : i1 to i32
    %c0_i32_0 = arith.constant 0 : i32
    %2 = arith.cmpi ne, %1, %c0_i32_0 : i32
    scf.if %2 {
      %cst_9 = arith.constant 0.000000e+00 : f32
      %17 = vector.broadcast %cst_9 : f32 to vector<256x128xf32>
      %c0_10 = arith.constant 0 : index
      %c0_11 = arith.constant 0 : index
      %18 = vector.load %arg7[%c0_10, %c0_11] : memref<256x128xf32, #tpu.memory_space<vmem>>, vector<256x128xf32>
      tpu.vector_store %arg7[%c0_10, %c0_11], %17 {strides = array<i32>} : memref<256x128xf32, #tpu.memory_space<vmem>>, vector<256x128xf32>,
    } else {
    }
    %c0 = arith.constant 0 : index
    %c0_1 = arith.constant 0 : index
    %3 = vector.load %arg2[%c0, %c0_1] : memref<256x512xi8, #tpu.memory_space<vmem>>, vector<256x512xi8>
    %4 = arith.sitofp %3 : vector<256x512xi8> to vector<256x512xf32>
    %5 = arith.truncf %4 : vector<256x512xf32> to vector<256x512xbf16>
    %c512_i32 = arith.constant 512 : i32
    %6 = arith.muli %arg1, %c512_i32 : i32
    %7 = tpu.assume_multiple %6, 256 : i32
    %8 = arith.index_cast %7 : i32 to index
    %c0_2 = arith.constant 0 : index
    %9 = vector.load %arg3[%8, %c0_2] : memref<512x128xbf16, #tpu.memory_space<vmem>>, vector<512x128xbf16>
    %c0_3 = arith.constant 0 : index
    %c0_4 = arith.constant 0 : index
    %10 = vector.load %arg7[%c0_3, %c0_4] : memref<256x128xf32, #tpu.memory_space<vmem>>, vector<256x128xf32>
    %cst = arith.constant dense<0.000000e+00> : vector<256x128xf32>
    %11 = tpu.matmul %5, %9, %cst {dimension_numbers = #tpu.dot_dimension_numbers<[1], [0], [0], [1], [0, 0, 1, 1], [], []>} : vector<256x512xbf16>, vector<512x128xbf16>, vector<256x128xf32> -> vector<256x128xf32>
    %12 = arith.addf %10, %11 : vector<256x128xf32>
    %c0_5 = arith.constant 0 : index
    %c0_6 = arith.constant 0 : index
    %13 = vector.load %arg7[%c0_5, %c0_6] : memref<256x128xf32, #tpu.memory_space<vmem>>, vector<256x128xf32>
    tpu.vector_store %arg7[%c0_5, %c0_6], %12 {strides = array<i32>} : memref<256x128xf32, #tpu.memory_space<vmem>>, vector<256x128xf32>,
    %c0_i32_7 = arith.constant 0 : i32
    %14 = arith.cmpi eq, %arg1, %c0_i32_7 : i32
    %15 = arith.extui %14 : i1 to i32
    %c0_i32_8 = arith.constant 0 : i32
    %16 = arith.cmpi ne, %15, %c0_i32_8 : i32
    scf.if %16 {
      %c0_9 = arith.constant 0 : index
      %c0_10 = arith.constant 0 : index
      %17 = vector.load %arg7[%c0_9, %c0_10] : memref<256x128xf32, #tpu.memory_space<vmem>>, vector<256x128xf32>
      %c0_11 = arith.constant 0 : index
      %c0_12 = arith.constant 0 : index
      %18 = vector.load %arg5[%c0_11, %c0_12] : memref<256x1xf32, #tpu.memory_space<vmem>>, vector<256x1xf32>
      %19 = vector.broadcast %18 : vector<256x1xf32> to vector<256x128xf32>
      %20 = arith.mulf %17, %19 : vector<256x128xf32>
      %c0_13 = arith.constant 0 : index
      %c0_14 = arith.constant 0 : index
      %21 = vector.load %arg4[%c0_13, %c0_14] : memref<256x128xbf16, #tpu.memory_space<vmem>>, vector<256x128xbf16>
      %22 = arith.extf %21 : vector<256x128xbf16> to vector<256x128xf32>
      %23 = arith.addf %20, %22 : vector<256x128xf32>
      %c0_15 = arith.constant 0 : index
      %c0_16 = arith.constant 0 : index
      %24 = vector.load %arg6[%c0_15, %c0_16] : memref<256x128xf32, #tpu.memory_space<vmem>>, vector<256x128xf32>
      tpu.vector_store %arg6[%c0_15, %c0_16], %23 {strides = array<i32>} : memref<256x128xf32, #tpu.memory_space<vmem>>, vector<256x128xf32>,
    } else {
    }
    return
  }
  func.func @transform_0(%arg0: i32, %arg1: i32) -> (i32, i32) {
    %c0_i32 = arith.constant 0 : i32
    return %arg0, %arg1 : i32, i32
  }
  func.func @transform_1(%arg0: i32, %arg1: i32) -> (i32, i32) {
    %c0_i32 = arith.constant 0 : i32
    %c1_i32 = arith.constant 1 : i32
    %c0_i32_0 = arith.constant 0 : i32
    return %c0_i32, %c1_i32 : i32, i32
  }
  func.func @transform_2(%arg0: i32, %arg1: i32) -> (i32, i32) {
    %c0_i32 = arith.constant 0 : i32
    %c0_i32_0 = arith.constant 0 : i32
    return %arg0, %c0_i32 : i32, i32
  }
  func.func @transform_3(%arg0: i32, %arg1: i32) -> (i32, i32) {
    %c0_i32 = arith.constant 0 : i32
    %c0_i32_0 = arith.constant 0 : i32
    return %arg0, %c0_i32 : i32, i32
  }
  func.func @transform_4(%arg0: i32, %arg1: i32) -> (i32, i32) {
    %c0_i32 = arith.constant 0 : i32
    %c0_i32_0 = arith.constant 0 : i32
    return %arg0, %c0_i32 : i32, i32
  }
}

module attributes {stable_mosaic.version = 11 : i64} {
  func.func @sage_main_kernel(%arg0: i32, %arg1: i32, %arg2: memref<256x512xi8, #tpu.memory_space<vmem>>, %arg3: memref<512x128xbf16, #tpu.memory_space<vmem>>, %arg4: memref<256x128xbf16, #tpu.memory_space<vmem>>, %arg5: memref<256x1xf32, #tpu.memory_space<vmem>>, %arg6: memref<256x128xbf16, #tpu.memory_space<vmem>>, %arg7: memref<256x128xf32, #tpu.memory_space<vmem>>) attributes {dimension_semantics = [#tpu.dimension_semantics<parallel>, #tpu.dimension_semantics<arbitrary>], iteration_bounds = array<i64: 2, 1>, scalar_prefetch = 0 : i64, scratch_operands = 1 : i64, tpu.core_type = #tpu.core_type<tc>, window_params = [{transform_indices = @transform_0, window_bounds = array<i64: 256, 512>}, {transform_indices = @transform_1, window_bounds = array<i64: 512, 128>}, {transform_indices = @transform_2, window_bounds = array<i64: 256, 128>}, {transform_indices = @transform_3, window_bounds = array<i64: 256, 1>}, {transform_indices = @transform_4, window_bounds = array<i64: 256, 128>}]} {
    %c0_i32 = arith.constant 0 : i32
    %0 = arith.cmpi eq, %arg1, %c0_i32 : i32
    %1 = arith.extui %0 : i1 to i32
    %c0_i32_0 = arith.constant 0 : i32
    %2 = arith.cmpi ne, %1, %c0_i32_0 : i32
    scf.if %2 {
      %cst_9 = arith.constant 0.000000e+00 : f32
      %17 = vector.broadcast %cst_9 : f32 to vector<256x128xf32>
      %c0_10 = arith.constant 0 : index
      %c0_11 = arith.constant 0 : index
      %18 = vector.load %arg7[%c0_10, %c0_11] : memref<256x128xf32, #tpu.memory_space<vmem>>, vector<256x128xf32>
      tpu.vector_store %arg7[%c0_10, %c0_11], %17 {strides = array<i32>} : memref<256x128xf32, #tpu.memory_space<vmem>>, vector<256x128xf32>,
    } else {
    }
    %c0 = arith.constant 0 : index
    %c0_1 = arith.constant 0 : index
    %3 = vector.load %arg2[%c0, %c0_1] : memref<256x512xi8, #tpu.memory_space<vmem>>, vector<256x512xi8>
    %4 = arith.sitofp %3 : vector<256x512xi8> to vector<256x512xf32>
    %5 = arith.truncf %4 : vector<256x512xf32> to vector<256x512xbf16>
    %c512_i32 = arith.constant 512 : i32
    %6 = arith.muli %arg1, %c512_i32 : i32
    %7 = tpu.assume_multiple %6, 256 : i32
    %8 = arith.index_cast %7 : i32 to index
    %c0_2 = arith.constant 0 : index
    %9 = vector.load %arg3[%8, %c0_2] : memref<512x128xbf16, #tpu.memory_space<vmem>>, vector<512x128xbf16>
    %c0_3 = arith.constant 0 : index
    %c0_4 = arith.constant 0 : index
    %10 = vector.load %arg7[%c0_3, %c0_4] : memref<256x128xf32, #tpu.memory_space<vmem>>, vector<256x128xf32>
    %cst = arith.constant dense<0.000000e+00> : vector<256x128xf32>
    %11 = tpu.matmul %5, %9, %cst {dimension_numbers = #tpu.dot_dimension_numbers<[1], [0], [0], [1], [0, 0, 1, 1], [], []>} : vector<256x512xbf16>, vector<512x128xbf16>, vector<256x128xf32> -> vector<256x128xf32>
    %12 = arith.addf %10, %11 : vector<256x128xf32>
    %c0_5 = arith.constant 0 : index
    %c0_6 = arith.constant 0 : index
    %13 = vector.load %arg7[%c0_5, %c0_6] : memref<256x128xf32, #tpu.memory_space<vmem>>, vector<256x128xf32>
    tpu.vector_store %arg7[%c0_5, %c0_6], %12 {strides = array<i32>} : memref<256x128xf32, #tpu.memory_space<vmem>>, vector<256x128xf32>,
    %c0_i32_7 = arith.constant 0 : i32
    %14 = arith.cmpi eq, %arg1, %c0_i32_7 : i32
    %15 = arith.extui %14 : i1 to i32
    %c0_i32_8 = arith.constant 0 : i32
    %16 = arith.cmpi ne, %15, %c0_i32_8 : i32
    scf.if %16 {
      %c0_9 = arith.constant 0 : index
      %c0_10 = arith.constant 0 : index
      %17 = vector.load %arg7[%c0_9, %c0_10] : memref<256x128xf32, #tpu.memory_space<vmem>>, vector<256x128xf32>
      %c0_11 = arith.constant 0 : index
      %c0_12 = arith.constant 0 : index
      %18 = vector.load %arg5[%c0_11, %c0_12] : memref<256x1xf32, #tpu.memory_space<vmem>>, vector<256x1xf32>
      %19 = vector.broadcast %18 : vector<256x1xf32> to vector<256x128xf32>
      %20 = arith.mulf %17, %19 : vector<256x128xf32>
      %c0_13 = arith.constant 0 : index
      %c0_14 = arith.constant 0 : index
      %21 = vector.load %arg4[%c0_13, %c0_14] : memref<256x128xbf16, #tpu.memory_space<vmem>>, vector<256x128xbf16>
      %22 = arith.extf %21 : vector<256x128xbf16> to vector<256x128xf32>
      %23 = arith.addf %20, %22 : vector<256x128xf32>
      %cst_15 = arith.constant 0.000000e+00 : f32
      %24 = vector.broadcast %cst_15 : f32 to vector<256x128xf32>
      %25 = arith.maximumf %23, %24 : vector<256x128xf32>
      %26 = arith.truncf %25 : vector<256x128xf32> to vector<256x128xbf16>
      %c0_16 = arith.constant 0 : index
      %c0_17 = arith.constant 0 : index
      %27 = vector.load %arg6[%c0_16, %c0_17] : memref<256x128xbf16, #tpu.memory_space<vmem>>, vector<256x128xbf16>
      tpu.vector_store %arg6[%c0_16, %c0_17], %26 {strides = array<i32>} : memref<256x128xbf16, #tpu.memory_space<vmem>>, vector<256x128xbf16>,
    } else {
    }
    return
  }
  func.func @transform_0(%arg0: i32, %arg1: i32) -> (i32, i32) {
    %c0_i32 = arith.constant 0 : i32
    return %arg0, %arg1 : i32, i32
  }
  func.func @transform_1(%arg0: i32, %arg1: i32) -> (i32, i32) {
    %c0_i32 = arith.constant 0 : i32
    %c1_i32 = arith.constant 1 : i32
    %c0_i32_0 = arith.constant 0 : i32
    return %c0_i32, %c1_i32 : i32, i32
  }
  func.func @transform_2(%arg0: i32, %arg1: i32) -> (i32, i32) {
    %c0_i32 = arith.constant 0 : i32
    %c0_i32_0 = arith.constant 0 : i32
    return %arg0, %c0_i32 : i32, i32
  }
  func.func @transform_3(%arg0: i32, %arg1: i32) -> (i32, i32) {
    %c0_i32 = arith.constant 0 : i32
    %c0_i32_0 = arith.constant 0 : i32
    return %arg0, %c0_i32 : i32, i32
  }
  func.func @transform_4(%arg0: i32, %arg1: i32) -> (i32, i32) {
    %c0_i32 = arith.constant 0 : i32
    %c0_i32_0 = arith.constant 0 : i32
    return %arg0, %c0_i32 : i32, i32
  }
}

module attributes {stable_mosaic.version = 11 : i64} {
  func.func @linear_kernel(%arg0: i32, %arg1: memref<256x128xbf16, #tpu.memory_space<vmem>>, %arg2: memref<128x256xbf16, #tpu.memory_space<vmem>>, %arg3: memref<1x256xf32, #tpu.memory_space<vmem>>, %arg4: memref<256x256xbf16, #tpu.memory_space<vmem>>) attributes {dimension_semantics = [#tpu.dimension_semantics<parallel>], iteration_bounds = array<i64: 2>, scalar_prefetch = 0 : i64, scratch_operands = 0 : i64, tpu.core_type = #tpu.core_type<tc>, window_params = [{transform_indices = @transform_0, window_bounds = array<i64: 256, 128>}, {pipeline_mode = #tpu.pipeline_mode<synchronous>, transform_indices = @transform_1, window_bounds = array<i64: 128, 256>}, {pipeline_mode = #tpu.pipeline_mode<synchronous>, transform_indices = @transform_2, window_bounds = array<i64: 1, 256>}, {transform_indices = @transform_3, window_bounds = array<i64: 256, 256>}]} {
    %c0 = arith.constant 0 : index
    %c0_0 = arith.constant 0 : index
    %0 = vector.load %arg1[%c0, %c0_0] : memref<256x128xbf16, #tpu.memory_space<vmem>>, vector<256x128xbf16>
    %c0_1 = arith.constant 0 : index
    %c0_2 = arith.constant 0 : index
    %1 = vector.load %arg2[%c0_1, %c0_2] : memref<128x256xbf16, #tpu.memory_space<vmem>>, vector<128x256xbf16>
    %cst = arith.constant dense<0.000000e+00> : vector<256x256xf32>
    %2 = tpu.matmul %0, %1, %cst {dimension_numbers = #tpu.dot_dimension_numbers<[1], [0], [0], [1], [0, 0, 1, 1], [], []>} : vector<256x128xbf16>, vector<128x256xbf16>, vector<256x256xf32> -> vector<256x256xf32>
    %c0_3 = arith.constant 0 : index
    %c0_4 = arith.constant 0 : index
    %3 = vector.load %arg3[%c0_3, %c0_4] : memref<1x256xf32, #tpu.memory_space<vmem>>, vector<1x256xf32>
    %4 = vector.broadcast %3 : vector<1x256xf32> to vector<256x256xf32>
    %5 = arith.addf %2, %4 : vector<256x256xf32>
    %6 = arith.truncf %5 : vector<256x256xf32> to vector<256x256xbf16>
    %c0_5 = arith.constant 0 : index
    %c0_6 = arith.constant 0 : index
    %7 = vector.load %arg4[%c0_5, %c0_6] : memref<256x256xbf16, #tpu.memory_space<vmem>>, vector<256x256xbf16>
    tpu.vector_store %arg4[%c0_5, %c0_6], %6 {strides = array<i32>} : memref<256x256xbf16, #tpu.memory_space<vmem>>, vector<256x256xbf16>,
    return
  }
  func.func @transform_0(%arg0: i32) -> (i32, i32) {
    %c0_i32 = arith.constant 0 : i32
    %c0_i32_0 = arith.constant 0 : i32
    return %arg0, %c0_i32 : i32, i32
  }
  func.func @transform_1(%arg0: i32) -> (i32, i32) {
    %c0_i32 = arith.constant 0 : i32
    %c0_i32_0 = arith.constant 0 : i32
    %c0_i32_1 = arith.constant 0 : i32
    return %c0_i32, %c0_i32_0 : i32, i32
  }
  func.func @transform_2(%arg0: i32) -> (i32, i32) {
    %c0_i32 = arith.constant 0 : i32
    %c0_i32_0 = arith.constant 0 : i32
    %c0_i32_1 = arith.constant 0 : i32
    return %c0_i32, %c0_i32_0 : i32, i32
  }
  func.func @transform_3(%arg0: i32) -> (i32, i32) {
    %c0_i32 = arith.constant 0 : i32
    %c0_i32_0 = arith.constant 0 : i32
    return %arg0, %c0_i32 : i32, i32
  }
}

</mosaic_0001>

<llo_original>
// kernel: graphsage_forward.6
$region0: #{graphsage_forward.6}
  #allocation0 [shape = 'u32[]', space=smem, size = 0x4, offset = 0x4, fixed_abs, tag = 'smem constant byte address 0x4 - core index']
  #allocation1 [shape = 'u32[144,128]{1,0:T(1,128)}', space=vmem, size = 0x12000, scoped, tag = 'internal scratch']
  %s0 = inlined_call_operand.vmem [shape: bf16[512,128], index: 0, kind: input, shape index: {}]
  %s1 = inlined_call_operand.vmem [shape: bf16[128,256], index: 1, kind: input, shape index: {}]
  %s2 = inlined_call_operand.vmem [shape: f32[1,256], index: 2, kind: input, shape index: {}]
  %s3 = inlined_call_operand.vmem [shape: bf16[512,256], index: 3, kind: output, shape index: {}]
  %s4 = sld [smem:[#allocation0]]
  $region45: #{graphsage_forward.6} parent=0
    _
  %s6 = ssub.s32 1, %s4
  %s7 = scalar_select 0, %s6, %s4
  loop: start=0, step=1, limit=4
  $region2: #{graphsage_forward.6} parent=0 // loop_pre_header
    _
  $region3: #{graphsage_forward.6} parent=0 // loop_header
    %s9 = sphi 0, %s13
    %p10 = scmp.ge.s32.totalorder %s9, 4
    %s19 = sphi 0, %s21
    %s22 = sphi 0, %s19
    %s23 = sphi 0, %s22
    %s39 = sphi 0, %s23
    %s43 = sphi 0, %s43
    %s45 = sphi 0, %s43
    %s46 = sphi 0, %s45
    %s60 = sphi 0, %s46
    %s64 = sphi 0, %s64
    %s66 = sphi 0, %s64
    %s67 = sphi 0, %s66
    %s81 = sphi 0, %s67
    %s87 = sphi 0, %s89
    %s90 = sphi 0, %s87
    %s91 = sphi 0, %s90
    %s107 = sphi 0, %s91
  $region4: #{graphsage_forward.6} parent=0 // loop_header_branch
    %12 = sbr.rel (%p10) target = $region8
  $region5: #{graphsage_forward.6} parent=0 // loop_body
    %s14 = ssub.s32 %s9, 1
    %s15 = ssub.s32 %s9, 2
    %s16 = sadd.s32 %s9, 1
    %s17 = ssub.s32 %s9, %s16
    %p18 = scmp.eq.s32.totalorder %s17, 0
    %s20 = sadd.s32 %s19, 1
    %s21 = scalar_select %p18, %s19, %s20
    %p24 = pneg %p18
    %p25 = scmp.eq.s32.totalorder %s9, 1
    %p26 = por %p24, %p25
    %p27 = scmp.ne.s32.totalorder %s19, %s22
    %p28 = scmp.eq.s32.totalorder %s9, 0
    %p29 = por %p27, %p28
    %p30 = scmp.ne.s32.totalorder %s19, %s22
    %p31 = scmp.eq.s32.totalorder %s14, 1
    %p32 = por %p30, %p31
    %p33 = scmp.ne.s32.totalorder %s22, %s23
    %p34 = scmp.eq.s32.totalorder %s14, 0
    %p35 = por %p33, %p34
    %p36 = scmp.ne.s32.totalorder %s22, %s23
    %p37 = scmp.eq.s32.totalorder %s15, 1
    %p38 = por %p36, %p37
    %p40 = scmp.ne.s32.totalorder %s23, %s39
    %p41 = scmp.eq.s32.totalorder %s15, 0
    %p42 = por %p40, %p41
    %s44 = sadd.s32 %s43, 1
    %p47 = scmp.eq.s32.totalorder %s9, 1
    %p48 = scmp.ne.s32.totalorder %s43, %s45
    %p49 = scmp.eq.s32.totalorder %s9, 0
    %p50 = por %p48, %p49
    %p51 = scmp.ne.s32.totalorder %s43, %s45
    %p52 = scmp.eq.s32.totalorder %s14, 1
    %p53 = por %p51, %p52
    %p54 = scmp.ne.s32.totalorder %s45, %s46
    %p55 = scmp.eq.s32.totalorder %s14, 0
    %p56 = por %p54, %p55
    %p57 = scmp.ne.s32.totalorder %s45, %s46
    %p58 = scmp.eq.s32.totalorder %s15, 1
    %p59 = por %p57, %p58
    %p61 = scmp.ne.s32.totalorder %s46, %s60
    %p62 = scmp.eq.s32.totalorder %s15, 0
    %p63 = por %p61, %p62
    %s65 = sadd.s32 %s64, 1
    %p68 = scmp.eq.s32.totalorder %s9, 1
    %p69 = scmp.ne.s32.totalorder %s64, %s66
    %p70 = scmp.eq.s32.totalorder %s9, 0
    %p71 = por %p69, %p70
    %p72 = scmp.ne.s32.totalorder %s64, %s66
    %p73 = scmp.eq.s32.totalorder %s14, 1
    %p74 = por %p72, %p73
    %p75 = scmp.ne.s32.totalorder %s66, %s67
    %p76 = scmp.eq.s32.totalorder %s14, 0
    %p77 = por %p75, %p76
    %p78 = scmp.ne.s32.totalorder %s66, %s67
    %p79 = scmp.eq.s32.totalorder %s15, 1
    %p80 = por %p78, %p79
    %p82 = scmp.ne.s32.totalorder %s67, %s81
    %p83 = scmp.eq.s32.totalorder %s15, 0
    %p84 = por %p82, %p83
    %s85 = ssub.s32 %s9, %s16
    %p86 = scmp.eq.s32.totalorder %s85, 0
    %s88 = sadd.s32 %s87, 1
    %s89 = scalar_select %p86, %s87, %s88
    %p92 = pneg %p86
    %p93 = scmp.eq.s32.totalorder %s9, 1
    %p94 = por %p92, %p93
    %p95 = scmp.ne.s32.totalorder %s87, %s90
    %p96 = scmp.eq.s32.totalorder %s9, 0
    %p97 = por %p95, %p96
    %p98 = scmp.ne.s32.totalorder %s87, %s90
    %p99 = scmp.eq.s32.totalorder %s14, 1
    %p100 = por %p98, %p99
    %p101 = scmp.ne.s32.totalorder %s90, %s91
    %p102 = scmp.eq.s32.totalorder %s14, 0
    %p103 = por %p101, %p102
    %p104 = scmp.ne.s32.totalorder %s90, %s91
    %p105 = scmp.eq.s32.totalorder %s15, 1
    %p106 = por %p104, %p105
    %p108 = scmp.ne.s32.totalorder %s91, %s107
    %p109 = scmp.eq.s32.totalorder %s15, 0
    %p110 = por %p108, %p109
    %p111 = scmp.le.s32.totalorder 1, %s9
    %p112 = scmp.lt.s32.totalorder %s9, 3
    %p113 = pnand %p111, %p112
    %p114 = pneg %p113
    // Predicated region
    $region9: #{graphsage_forward.6} parent=5 // pred_check
      _
    $region10: #{graphsage_forward.6} parent=5 // pred_check_branch
      %116 = sbr.rel (%p113) target = $region12
    $region11: #{graphsage_forward.6} parent=5 // pred_region
      %s117 = ssub.s32 %s9, 1
      // Predicated region
      $region13: #{graphsage_forward.6} parent=11 // pred_check
        %p118 = pneg %p56
      $region14: #{graphsage_forward.6} parent=11 // pred_check_branch
        %120 = sbr.rel (%p118) target = $region16
      $region15: #{graphsage_forward.6} parent=11 // pred_region
        _
      $region16: #{graphsage_forward.6} parent=11 // pred_fallthru
        _
      // Predicated region
      $region17: #{graphsage_forward.6} parent=11 // pred_check
        %p121 = pneg %p77
      $region18: #{graphsage_forward.6} parent=11 // pred_check_branch
        %123 = sbr.rel (%p121) target = $region20
      $region19: #{graphsage_forward.6} parent=11 // pred_region
        _
      $region20: #{graphsage_forward.6} parent=11 // pred_fallthru
        _
    $region12: #{graphsage_forward.6} parent=5 // pred_fallthru
      _
    %p124 = scmp.lt.s32.totalorder %s9, 2
    // Predicated region
    $region21: #{graphsage_forward.6} parent=5 // pred_check
      %p125 = pneg %p124
    $region22: #{graphsage_forward.6} parent=5 // pred_check_branch
      %127 = sbr.rel (%p125) target = $region24
    $region23: #{graphsage_forward.6} parent=5 // pred_region
      // Predicated region
      $region25: #{graphsage_forward.6} parent=23 // pred_check
        %p128 = pneg %p29
      $region26: #{graphsage_forward.6} parent=23 // pred_check_branch
        %130 = sbr.rel (%p128) target = $region28
      $region27: #{graphsage_forward.6} parent=23 // pred_region
        %s131 = smul.u32 32, %s9
        %p132 = scmp.lt.s32.totalorder %s131, 63
        %s133 = scalar_select %p132, %s131, 63
        %s134 = smul.addr %s133, 4
        %s135 = scalar_lea.vmem %s0, %s134
        %s136 = smul.u32 32, %s9
      $region28: #{graphsage_forward.6} parent=23 // pred_fallthru
        _
    $region24: #{graphsage_forward.6} parent=5 // pred_fallthru
      _
    %p137 = scmp.le.s32.totalorder 1, %s9
    %p138 = scmp.lt.s32.totalorder %s9, 3
    %p139 = pnand %p137, %p138
    %p140 = pneg %p139
    // Predicated region
    $region29: #{graphsage_forward.6} parent=5 // pred_check
      _
    $region30: #{graphsage_forward.6} parent=5 // pred_check_branch
      %142 = sbr.rel (%p139) target = $region32
    $region31: #{graphsage_forward.6} parent=5 // pred_region
      %s143 = ssub.s32 %s9, 1
      %s144 = smul.u32 32, %s14
      %p145 = scmp.lt.s32.totalorder %s144, 63
      %s146 = scalar_select %p145, %s144, 63
      %s147 = smul.addr %s146, 4
      %s148 = scalar_lea.vmem %s0, %s147
      %p149 = pneg %p35
      %p150 = pneg %p32
      %p151 = pneg %p56
      %p152 = pneg %p53
      %p153 = pneg %p77
      %p154 = pneg %p74
      %p155 = pneg %p103
      %p156 = pneg %p100
      %s157 = smul.u32 32, %s14
      %p158 = scmp.lt.s32.totalorder %s157, 63
      %s159 = scalar_select %p158, %s157, 63
      %s160 = smul.addr %s159, 2
      %s161 = smul.addr %s160, 4
      %s162 = scalar_lea.vmem %s3, %s161
      %s163 = smul.u32 32, %s14
      %p164 = scmp.lt.s32.totalorder %s163, 63
      %s165 = scalar_select %p164, %s163, 63
      %s166 = smul.addr %s165, 4
      %s167 = scalar_lea.vmem %s0, %s166
      %s168 = smul.u32 32, %s14
      %s169 = smul.u32 32, %s14
      %p170 = scmp.lt.s32.totalorder %s169, 63
      %s171 = scalar_select %p170, %s169, 63
      %s172 = smul.addr %s171, 2
      %s173 = smul.addr %s172, 4
      %s174 = scalar_lea.vmem %s3, %s173
      %s175 = smul.u32 32, %s14
      %v177 = vld [vmem:[%s167] sm:$0xf]
      %v178 = vld [vmem:[%s167 + $0x4] sm:$0xf]
      %v179 = vld [vmem:[%s167 + $0x8] sm:$0xf]
      %v180 = vld [vmem:[%s167 + $0xc] sm:$0xf]
      %v181 = vld [vmem:[%s167 + $0x10] sm:$0xf]
      %v182 = vld [vmem:[%s167 + $0x14] sm:$0xf]
      %v183 = vld [vmem:[%s167 + $0x18] sm:$0xf]
      %v184 = vld [vmem:[%s167 + $0x1c] sm:$0xf]
      %v185 = vld [vmem:[%s167 + $0x20] sm:$0xf]
      %v186 = vld [vmem:[%s167 + $0x24] sm:$0xf]
      %v187 = vld [vmem:[%s167 + $0x28] sm:$0xf]
      %v188 = vld [vmem:[%s167 + $0x2c] sm:$0xf]
      %v189 = vld [vmem:[%s167 + $0x30] sm:$0xf]
      %v190 = vld [vmem:[%s167 + $0x34] sm:$0xf]
      %v191 = vld [vmem:[%s167 + $0x38] sm:$0xf]
      %v192 = vld [vmem:[%s167 + $0x3c] sm:$0xf]
      %v193 = vld [vmem:[%s167 + $0x40] sm:$0xf]
      %v194 = vld [vmem:[%s167 + $0x44] sm:$0xf]
      %v195 = vld [vmem:[%s167 + $0x48] sm:$0xf]
      %v196 = vld [vmem:[%s167 + $0x4c] sm:$0xf]
      %v197 = vld [vmem:[%s167 + $0x50] sm:$0xf]
      %v198 = vld [vmem:[%s167 + $0x54] sm:$0xf]
      %v199 = vld [vmem:[%s167 + $0x58] sm:$0xf]
      %v200 = vld [vmem:[%s167 + $0x5c] sm:$0xf]
      %v201 = vld [vmem:[%s167 + $0x60] sm:$0xf]
      %v202 = vld [vmem:[%s167 + $0x64] sm:$0xf]
      %v203 = vld [vmem:[%s167 + $0x68] sm:$0xf]
      %v204 = vld [vmem:[%s167 + $0x6c] sm:$0xf]
      %v205 = vld [vmem:[%s167 + $0x70] sm:$0xf]
      %v206 = vld [vmem:[%s167 + $0x74] sm:$0xf]
      %v207 = vld [vmem:[%s167 + $0x78] sm:$0xf]
      %v208 = vld [vmem:[%s167 + $0x7c] sm:$0xf]
      %v209 = vld [vmem:[%s1] sm:$0xff]
      %v210 = vld [vmem:[%s1 + $0x8] sm:$0xff]
      %v211 = vld [vmem:[%s1 + $0x10] sm:$0xff]
      %v212 = vld [vmem:[%s1 + $0x18] sm:$0xff]
      %v213 = vld [vmem:[%s1 + $0x20] sm:$0xff]
      %v214 = vld [vmem:[%s1 + $0x28] sm:$0xff]
      %v215 = vld [vmem:[%s1 + $0x30] sm:$0xff]
      %v216 = vld [vmem:[%s1 + $0x38] sm:$0xff]
      %v217 = vld [vmem:[%s1 + $0x40] sm:$0xff]
      %v218 = vld [vmem:[%s1 + $0x48] sm:$0xff]
      %v219 = vld [vmem:[%s1 + $0x50] sm:$0xff]
      %v220 = vld [vmem:[%s1 + $0x58] sm:$0xff]
      %v221 = vld [vmem:[%s1 + $0x60] sm:$0xff]
      %v222 = vld [vmem:[%s1 + $0x68] sm:$0xff]
      %v223 = vld [vmem:[%s1 + $0x70] sm:$0xff]
      %v224 = vld [vmem:[%s1 + $0x78] sm:$0xff]
      %v225 = vld [vmem:[%s2] sm:$0x3]
      %v227 = vlaneseq
      %v228 = vshrl.u32 %v227, 7
      %v229 = vsub.s32 0, %v228
      %v230 = vrot.slane %v225, %v229
      %v231 = vlaneseq
      %v232 = vshrl.u32 %v231, 7
      %v233 = vsub.s32 1, %v232
      %v234 = vrot.slane %v225, %v233
      %v269 = vunpack.c.l.b16 %v177
      %v270 = vunpack.c.l.b16 %v178
      %v271 = vunpack.c.l.b16 %v179
      %v272 = vunpack.c.l.b16 %v180
      %v273 = vunpack.c.l.b16 %v181
      %v274 = vunpack.c.l.b16 %v182
      %v275 = vunpack.c.l.b16 %v183
      %v276 = vunpack.c.l.b16 %v184
      %v277 = vunpack.c.l.b16 %v185
      %v278 = vunpack.c.l.b16 %v186
      %v279 = vunpack.c.l.b16 %v187
      %v280 = vunpack.c.l.b16 %v188
      %v281 = vunpack.c.l.b16 %v189
      %v282 = vunpack.c.l.b16 %v190
      %v283 = vunpack.c.l.b16 %v191
      %v284 = vunpack.c.l.b16 %v192
      %v285 = vunpack.c.l.b16 %v193
      %v286 = vunpack.c.l.b16 %v194
      %v287 = vunpack.c.l.b16 %v195
      %v288 = vunpack.c.l.b16 %v196
      %v289 = vunpack.c.l.b16 %v197
      %v290 = vunpack.c.l.b16 %v198
      %v291 = vunpack.c.l.b16 %v199
      %v292 = vunpack.c.l.b16 %v200
      %v293 = vunpack.c.l.b16 %v201
      %v294 = vunpack.c.l.b16 %v202
      %v295 = vunpack.c.l.b16 %v203
      %v296 = vunpack.c.l.b16 %v204
      %v297 = vunpack.c.l.b16 %v205
      %v298 = vunpack.c.l.b16 %v206
      %v299 = vunpack.c.l.b16 %v207
      %v300 = vunpack.c.l.b16 %v208
      %v301 = vpack.c.b16 %v270, %v269
      %v302 = vpack.c.b16 %v272, %v271
      %v303 = vpack.c.b16 %v274, %v273
      %v304 = vpack.c.b16 %v276, %v275
      %v305 = vpack.c.b16 %v278, %v277
      %v306 = vpack.c.b16 %v280, %v279
      %v307 = vpack.c.b16 %v282, %v281
      %v308 = vpack.c.b16 %v284, %v283
      %v309 = vpack.c.b16 %v286, %v285
      %v310 = vpack.c.b16 %v288, %v287
      %v311 = vpack.c.b16 %v290, %v289
      %v312 = vpack.c.b16 %v292, %v291
      %v313 = vpack.c.b16 %v294, %v293
      %v314 = vpack.c.b16 %v296, %v295
      %v315 = vpack.c.b16 %v298, %v297
      %v316 = vpack.c.b16 %v300, %v299
      %v349 = vunpack.c.l.b16 %v209
      %v350 = vunpack.c.h.b16 %v209
      %v351 = vunpack.c.l.b16 %v210
      %v352 = vunpack.c.h.b16 %v210
      %v353 = vunpack.c.l.b16 %v211
      %v354 = vunpack.c.h.b16 %v211
      %v355 = vunpack.c.l.b16 %v212
      %v356 = vunpack.c.h.b16 %v212
      %v357 = vunpack.c.l.b16 %v213
      %v358 = vunpack.c.h.b16 %v213
      %v359 = vunpack.c.l.b16 %v214
      %v360 = vunpack.c.h.b16 %v214
      %v361 = vunpack.c.l.b16 %v215
      %v362 = vunpack.c.h.b16 %v215
      %v363 = vunpack.c.l.b16 %v216
      %v364 = vunpack.c.h.b16 %v216
      %v365 = vunpack.c.l.b16 %v217
      %v366 = vunpack.c.h.b16 %v217
      %v367 = vunpack.c.l.b16 %v218
      %v368 = vunpack.c.h.b16 %v218
      %v369 = vunpack.c.l.b16 %v219
      %v370 = vunpack.c.h.b16 %v219
      %v371 = vunpack.c.l.b16 %v220
      %v372 = vunpack.c.h.b16 %v220
      %v373 = vunpack.c.l.b16 %v221
      %v374 = vunpack.c.h.b16 %v221
      %v375 = vunpack.c.l.b16 %v222
      %v376 = vunpack.c.h.b16 %v222
      %v377 = vunpack.c.l.b16 %v223
      %v378 = vunpack.c.h.b16 %v223
      %v379 = vunpack.c.l.b16 %v224
      %v380 = vunpack.c.h.b16 %v224
      %v381 = vpack.c.b16 %v351, %v349
      %v382 = vpack.c.b16 %v352, %v350
      %v383 = vpack.c.b16 %v355, %v353
      %v384 = vpack.c.b16 %v356, %v354
      %v385 = vpack.c.b16 %v359, %v357
      %v386 = vpack.c.b16 %v360, %v358
      %v387 = vpack.c.b16 %v363, %v361
      %v388 = vpack.c.b16 %v364, %v362
      %v389 = vpack.c.b16 %v367, %v365
      %v390 = vpack.c.b16 %v368, %v366
      %v391 = vpack.c.b16 %v371, %v369
      %v392 = vpack.c.b16 %v372, %v370
      %v393 = vpack.c.b16 %v375, %v373
      %v394 = vpack.c.b16 %v376, %v374
      %v395 = vpack.c.b16 %v379, %v377
      %v396 = vpack.c.b16 %v380, %v378
      %413 = vmatprep.subr.bf16.mxu0 %v396
      %414 = vmatpush1.bf16.msra.mxu0 %v395
      %415 = vmatprep.subr.bf16.mxu0 %v394
      %416 = vmatpush1.bf16.msra.mxu0 %v393
      %417 = vmatprep.subr.bf16.mxu0 %v392
      %418 = vmatpush1.bf16.msra.mxu0 %v391
      %419 = vmatprep.subr.bf16.mxu0 %v390
      %420 = vmatpush1.bf16.msra.mxu0 %v389
      %421 = vmatprep.subr.bf16.mxu0 %v388
      %422 = vmatpush1.bf16.msra.mxu0 %v387
      %423 = vmatprep.subr.bf16.mxu0 %v386
      %424 = vmatpush1.bf16.msra.mxu0 %v385
      %425 = vmatprep.subr.bf16.mxu0 %v384
      %426 = vmatpush1.bf16.msra.mxu0 %v383
      %427 = vmatprep.subr.bf16.mxu0 %v382
      %428 = vmatpush1.bf16.msra.mxu0 %v381
      %429 = vmatprep.subr.bf16.mxu0 0
      %430 = vmatpush2.bf16.msra.mxu0 0
      %431 = vmatprep.subr.bf16.mxu0 0
      %432 = vmatpush2.bf16.msra.mxu0 0
      %433 = vmatprep.subr.bf16.mxu0 0
      %434 = vmatpush2.bf16.msra.mxu0 0
      %435 = vmatprep.subr.bf16.mxu0 0
      %436 = vmatpush2.bf16.msra.mxu0 0
      %437 = vmatprep.subr.bf16.mxu0 0
      %438 = vmatpush2.bf16.msra.mxu0 0
      %439 = vmatprep.subr.bf16.mxu0 0
      %440 = vmatpush2.bf16.msra.mxu0 0
      %441 = vmatprep.subr.bf16.mxu0 0
      %442 = vmatpush2.bf16.msra.mxu0 0
      %443 = vmatprep.subr.bf16.mxu0 0
      %444 = vmatpush2.bf16.msra.mxu0 0
      %445 = vmatprep.mubr.bf16.mxu0 0
      %446 = vmatmul.mubr.bf16.gmra.mxu0 %v301
      %v447 = vpop.f32.mrf.mxu0
      %v448 = vadd.f32 %v230, %v447
      %v449 = vpop.f32.mrf.mxu0
      %v450 = vadd.f32 %v234, %v449
      %v451 = vpop.f32.mrf.mxu0
      %v452 = vadd.f32 %v230, %v451
      %v453 = vpop.f32.mrf.mxu0
      %v454 = vadd.f32 %v234, %v453
      %455 = vmatprep.mubr.bf16.mxu0 0
      %456 = vmatmul.mubr.bf16.gmra.mxu0 %v302
      %v457 = vpop.f32.mrf.mxu0
      %v458 = vadd.f32 %v230, %v457
      %v459 = vpop.f32.mrf.mxu0
      %v460 = vadd.f32 %v234, %v459
      %v461 = vpop.f32.mrf.mxu0
      %v462 = vadd.f32 %v230, %v461
      %v463 = vpop.f32.mrf.mxu0
      %v464 = vadd.f32 %v234, %v463
      %465 = vmatprep.mubr.bf16.mxu0 0
      %466 = vmatmul.mubr.bf16.gmra.mxu0 %v303
      %v467 = vpop.f32.mrf.mxu0
      %v468 = vadd.f32 %v230, %v467
      %v469 = vpop.f32.mrf.mxu0
      %v470 = vadd.f32 %v234, %v469
      %v471 = vpop.f32.mrf.mxu0
      %v472 = vadd.f32 %v230, %v471
      %v473 = vpop.f32.mrf.mxu0
      %v474 = vadd.f32 %v234, %v473
      %475 = vmatprep.mubr.bf16.mxu0 0
      %476 = vmatmul.mubr.bf16.gmra.mxu0 %v304
      %v477 = vpop.f32.mrf.mxu0
      %v478 = vadd.f32 %v230, %v477
      %v479 = vpop.f32.mrf.mxu0
      %v480 = vadd.f32 %v234, %v479
      %v481 = vpop.f32.mrf.mxu0
      %v482 = vadd.f32 %v230, %v481
      %v483 = vpop.f32.mrf.mxu0
      %v484 = vadd.f32 %v234, %v483
      %485 = vmatprep.mubr.bf16.mxu0 0
      %486 = vmatmul.mubr.bf16.gmra.mxu0 %v305
      %v487 = vpop.f32.mrf.mxu0
      %v488 = vadd.f32 %v230, %v487
      %v489 = vpop.f32.mrf.mxu0
      %v490 = vadd.f32 %v234, %v489
      %v491 = vpop.f32.mrf.mxu0
      %v492 = vadd.f32 %v230, %v491
      %v493 = vpop.f32.mrf.mxu0
      %v494 = vadd.f32 %v234, %v493
      %495 = vmatprep.mubr.bf16.mxu0 0
      %496 = vmatmul.mubr.bf16.gmra.mxu0 %v306
      %v497 = vpop.f32.mrf.mxu0
      %v498 = vadd.f32 %v230, %v497
      %v499 = vpop.f32.mrf.mxu0
      %v500 = vadd.f32 %v234, %v499
      %v501 = vpop.f32.mrf.mxu0
      %v502 = vadd.f32 %v230, %v501
      %v503 = vpop.f32.mrf.mxu0
      %v504 = vadd.f32 %v234, %v503
      %505 = vmatprep.mubr.bf16.mxu0 0
      %506 = vmatmul.mubr.bf16.gmra.mxu0 %v307
      %v507 = vpop.f32.mrf.mxu0
      %v508 = vadd.f32 %v230, %v507
      %v509 = vpop.f32.mrf.mxu0
      %v510 = vadd.f32 %v234, %v509
      %v511 = vpop.f32.mrf.mxu0
      %v512 = vadd.f32 %v230, %v511
      %v513 = vpop.f32.mrf.mxu0
      %v514 = vadd.f32 %v234, %v513
      %515 = vmatprep.mubr.bf16.mxu0 0
      %516 = vmatmul.mubr.bf16.gmra.mxu0 %v308
      %v517 = vpop.f32.mrf.mxu0
      %v518 = vadd.f32 %v230, %v517
      %v519 = vpop.f32.mrf.mxu0
      %v520 = vadd.f32 %v234, %v519
      %v521 = vpop.f32.mrf.mxu0
      %v522 = vadd.f32 %v230, %v521
      %v523 = vpop.f32.mrf.mxu0
      %v524 = vadd.f32 %v234, %v523
      %525 = vmatprep.mubr.bf16.mxu0 0
      %526 = vmatmul.mubr.bf16.gmra.mxu0 %v309
      %v527 = vpop.f32.mrf.mxu0
      %v528 = vadd.f32 %v230, %v527
      %v529 = vpop.f32.mrf.mxu0
      %v530 = vadd.f32 %v234, %v529
      %v531 = vpop.f32.mrf.mxu0
      %v532 = vadd.f32 %v230, %v531
      %v533 = vpop.f32.mrf.mxu0
      %v534 = vadd.f32 %v234, %v533
      %535 = vmatprep.mubr.bf16.mxu0 0
      %536 = vmatmul.mubr.bf16.gmra.mxu0 %v310
      %v537 = vpop.f32.mrf.mxu0
      %v538 = vadd.f32 %v230, %v537
      %v539 = vpop.f32.mrf.mxu0
      %v540 = vadd.f32 %v234, %v539
      %v541 = vpop.f32.mrf.mxu0
      %v542 = vadd.f32 %v230, %v541
      %v543 = vpop.f32.mrf.mxu0
      %v544 = vadd.f32 %v234, %v543
      %545 = vmatprep.mubr.bf16.mxu0 0
      %546 = vmatmul.mubr.bf16.gmra.mxu0 %v311
      %v547 = vpop.f32.mrf.mxu0
      %v548 = vadd.f32 %v230, %v547
      %v549 = vpop.f32.mrf.mxu0
      %v550 = vadd.f32 %v234, %v549
      %v551 = vpop.f32.mrf.mxu0
      %v552 = vadd.f32 %v230, %v551
      %v553 = vpop.f32.mrf.mxu0
      %v554 = vadd.f32 %v234, %v553
      %555 = vmatprep.mubr.bf16.mxu0 0
      %556 = vmatmul.mubr.bf16.gmra.mxu0 %v312
      %v557 = vpop.f32.mrf.mxu0
      %v558 = vadd.f32 %v230, %v557
      %v559 = vpop.f32.mrf.mxu0
      %v560 = vadd.f32 %v234, %v559
      %v561 = vpop.f32.mrf.mxu0
      %v562 = vadd.f32 %v230, %v561
      %v563 = vpop.f32.mrf.mxu0
      %v564 = vadd.f32 %v234, %v563
      %565 = vmatprep.mubr.bf16.mxu0 0
      %566 = vmatmul.mubr.bf16.gmra.mxu0 %v313
      %v567 = vpop.f32.mrf.mxu0
      %v568 = vadd.f32 %v230, %v567
      %v569 = vpop.f32.mrf.mxu0
      %v570 = vadd.f32 %v234, %v569
      %v571 = vpop.f32.mrf.mxu0
      %v572 = vadd.f32 %v230, %v571
      %v573 = vpop.f32.mrf.mxu0
      %v574 = vadd.f32 %v234, %v573
      %575 = vmatprep.mubr.bf16.mxu0 0
      %576 = vmatmul.mubr.bf16.gmra.mxu0 %v314
      %v577 = vpop.f32.mrf.mxu0
      %v578 = vadd.f32 %v230, %v577
      %v579 = vpop.f32.mrf.mxu0
      %v580 = vadd.f32 %v234, %v579
      %v581 = vpop.f32.mrf.mxu0
      %v582 = vadd.f32 %v230, %v581
      %v583 = vpop.f32.mrf.mxu0
      %v584 = vadd.f32 %v234, %v583
      %585 = vmatprep.mubr.bf16.mxu0 0
      %586 = vmatmul.mubr.bf16.gmra.mxu0 %v315
      %v587 = vpop.f32.mrf.mxu0
      %v588 = vadd.f32 %v230, %v587
      %v589 = vpop.f32.mrf.mxu0
      %v590 = vadd.f32 %v234, %v589
      %v591 = vpop.f32.mrf.mxu0
      %v592 = vadd.f32 %v230, %v591
      %v593 = vpop.f32.mrf.mxu0
      %v594 = vadd.f32 %v234, %v593
      %595 = vmatprep.mubr.bf16.mxu0 0
      %596 = vmatmul.mubr.bf16.gmra.mxu0 %v316
      %v597 = vpop.f32.mrf.mxu0
      %v598 = vadd.f32 %v230, %v597
      %v599 = vpop.f32.mrf.mxu0
      %v600 = vadd.f32 %v234, %v599
      %v601 = vpop.f32.mrf.mxu0
      %v602 = vadd.f32 %v230, %v601
      %v603 = vpop.f32.mrf.mxu0
      %v604 = vadd.f32 %v234, %v603
      %605 = vdwg.mxu0
      %v606 = vpack.c.bf16 %v452, %v448
      %v607 = vpack.c.bf16 %v454, %v450
      %v608 = vpack.c.bf16 %v462, %v458
      %v609 = vpack.c.bf16 %v464, %v460
      %v610 = vpack.c.bf16 %v472, %v468
      %v611 = vpack.c.bf16 %v474, %v470
      %v612 = vpack.c.bf16 %v482, %v478
      %v613 = vpack.c.bf16 %v484, %v480
      %v614 = vpack.c.bf16 %v492, %v488
      %v615 = vpack.c.bf16 %v494, %v490
      %v616 = vpack.c.bf16 %v502, %v498
      %v617 = vpack.c.bf16 %v504, %v500
      %v618 = vpack.c.bf16 %v512, %v508
      %v619 = vpack.c.bf16 %v514, %v510
      %v620 = vpack.c.bf16 %v522, %v518
      %v621 = vpack.c.bf16 %v524, %v520
      %v622 = vpack.c.bf16 %v532, %v528
      %v623 = vpack.c.bf16 %v534, %v530
      %v624 = vpack.c.bf16 %v542, %v538
      %v625 = vpack.c.bf16 %v544, %v540
      %v626 = vpack.c.bf16 %v552, %v548
      %v627 = vpack.c.bf16 %v554, %v550
      %v628 = vpack.c.bf16 %v562, %v558
      %v629 = vpack.c.bf16 %v564, %v560
      %v630 = vpack.c.bf16 %v572, %v568
      %v631 = vpack.c.bf16 %v574, %v570
      %v632 = vpack.c.bf16 %v582, %v578
      %v633 = vpack.c.bf16 %v584, %v580
      %v634 = vpack.c.bf16 %v592, %v588
      %v635 = vpack.c.bf16 %v594, %v590
      %v636 = vpack.c.bf16 %v602, %v598
      %v637 = vpack.c.bf16 %v604, %v600
      %v670 = vunpack.c.l.b16 %v606
      %v671 = vunpack.c.l.b16 %v607
      %v672 = vunpack.c.h.b16 %v606
      %v673 = vunpack.c.h.b16 %v607
      %v674 = vunpack.c.l.b16 %v608
      %v675 = vunpack.c.l.b16 %v609
      %v676 = vunpack.c.h.b16 %v608
      %v677 = vunpack.c.h.b16 %v609
      %v678 = vunpack.c.l.b16 %v610
      %v679 = vunpack.c.l.b16 %v611
      %v680 = vunpack.c.h.b16 %v610
      %v681 = vunpack.c.h.b16 %v611
      %v682 = vunpack.c.l.b16 %v612
      %v683 = vunpack.c.l.b16 %v613
      %v684 = vunpack.c.h.b16 %v612
      %v685 = vunpack.c.h.b16 %v613
      %v686 = vunpack.c.l.b16 %v614
      %v687 = vunpack.c.l.b16 %v615
      %v688 = vunpack.c.h.b16 %v614
      %v689 = vunpack.c.h.b16 %v615
      %v690 = vunpack.c.l.b16 %v616
      %v691 = vunpack.c.l.b16 %v617
      %v692 = vunpack.c.h.b16 %v616
      %v693 = vunpack.c.h.b16 %v617
      %v694 = vunpack.c.l.b16 %v618
      %v695 = vunpack.c.l.b16 %v619
      %v696 = vunpack.c.h.b16 %v618
      %v697 = vunpack.c.h.b16 %v619
      %v698 = vunpack.c.l.b16 %v620
      %v699 = vunpack.c.l.b16 %v621
      %v700 = vunpack.c.h.b16 %v620
      %v701 = vunpack.c.h.b16 %v621
      %v702 = vunpack.c.l.b16 %v622
      %v703 = vunpack.c.l.b16 %v623
      %v704 = vunpack.c.h.b16 %v622
      %v705 = vunpack.c.h.b16 %v623
      %v706 = vunpack.c.l.b16 %v624
      %v707 = vunpack.c.l.b16 %v625
      %v708 = vunpack.c.h.b16 %v624
      %v709 = vunpack.c.h.b16 %v625
      %v710 = vunpack.c.l.b16 %v626
      %v711 = vunpack.c.l.b16 %v627
      %v712 = vunpack.c.h.b16 %v626
      %v713 = vunpack.c.h.b16 %v627
      %v714 = vunpack.c.l.b16 %v628
      %v715 = vunpack.c.l.b16 %v629
      %v716 = vunpack.c.h.b16 %v628
      %v717 = vunpack.c.h.b16 %v629
      %v718 = vunpack.c.l.b16 %v630
      %v719 = vunpack.c.l.b16 %v631
      %v720 = vunpack.c.h.b16 %v630
      %v721 = vunpack.c.h.b16 %v631
      %v722 = vunpack.c.l.b16 %v632
      %v723 = vunpack.c.l.b16 %v633
      %v724 = vunpack.c.h.b16 %v632
      %v725 = vunpack.c.h.b16 %v633
      %v726 = vunpack.c.l.b16 %v634
      %v727 = vunpack.c.l.b16 %v635
      %v728 = vunpack.c.h.b16 %v634
      %v729 = vunpack.c.h.b16 %v635
      %v730 = vunpack.c.l.b16 %v636
      %v731 = vunpack.c.l.b16 %v637
      %v732 = vunpack.c.h.b16 %v636
      %v733 = vunpack.c.h.b16 %v637
      %v734 = vpack.c.b16 %v671, %v670
      %v735 = vpack.c.b16 %v673, %v672
      %v736 = vpack.c.b16 %v675, %v674
      %v737 = vpack.c.b16 %v677, %v676
      %v738 = vpack.c.b16 %v679, %v678
      %v739 = vpack.c.b16 %v681, %v680
      %v740 = vpack.c.b16 %v683, %v682
      %v741 = vpack.c.b16 %v685, %v684
      %v742 = vpack.c.b16 %v687, %v686
      %v743 = vpack.c.b16 %v689, %v688
      %v744 = vpack.c.b16 %v691, %v690
      %v745 = vpack.c.b16 %v693, %v692
      %v746 = vpack.c.b16 %v695, %v694
      %v747 = vpack.c.b16 %v697, %v696
      %v748 = vpack.c.b16 %v699, %v698
      %v749 = vpack.c.b16 %v701, %v700
      %v750 = vpack.c.b16 %v703, %v702
      %v751 = vpack.c.b16 %v705, %v704
      %v752 = vpack.c.b16 %v707, %v706
      %v753 = vpack.c.b16 %v709, %v708
      %v754 = vpack.c.b16 %v711, %v710
      %v755 = vpack.c.b16 %v713, %v712
      %v756 = vpack.c.b16 %v715, %v714
      %v757 = vpack.c.b16 %v717, %v716
      %v758 = vpack.c.b16 %v719, %v718
      %v759 = vpack.c.b16 %v721, %v720
      %v760 = vpack.c.b16 %v723, %v722
      %v761 = vpack.c.b16 %v725, %v724
      %v762 = vpack.c.b16 %v727, %v726
      %v763 = vpack.c.b16 %v729, %v728
      %v764 = vpack.c.b16 %v731, %v730
      %v765 = vpack.c.b16 %v733, %v732
      %798 = vst [vmem:[%s174] sm:$0xff] %v734
      %799 = vst [vmem:[%s174 + $0x8] sm:$0xff] %v735
      %800 = vst [vmem:[%s174 + $0x10] sm:$0xff] %v736
      %801 = vst [vmem:[%s174 + $0x18] sm:$0xff] %v737
      %802 = vst [vmem:[%s174 + $0x20] sm:$0xff] %v738
      %803 = vst [vmem:[%s174 + $0x28] sm:$0xff] %v739
      %804 = vst [vmem:[%s174 + $0x30] sm:$0xff] %v740
      %805 = vst [vmem:[%s174 + $0x38] sm:$0xff] %v741
      %806 = vst [vmem:[%s174 + $0x40] sm:$0xff] %v742
      %807 = vst [vmem:[%s174 + $0x48] sm:$0xff] %v743
      %808 = vst [vmem:[%s174 + $0x50] sm:$0xff] %v744
      %809 = vst [vmem:[%s174 + $0x58] sm:$0xff] %v745
      %810 = vst [vmem:[%s174 + $0x60] sm:$0xff] %v746
      %811 = vst [vmem:[%s174 + $0x68] sm:$0xff] %v747
      %812 = vst [vmem:[%s174 + $0x70] sm:$0xff] %v748
      %813 = vst [vmem:[%s174 + $0x78] sm:$0xff] %v749
      %814 = vst [vmem:[%s174 + $0x80] sm:$0xff] %v750
      %815 = vst [vmem:[%s174 + $0x88] sm:$0xff] %v751
      %816 = vst [vmem:[%s174 + $0x90] sm:$0xff] %v752
      %817 = vst [vmem:[%s174 + $0x98] sm:$0xff] %v753
      %818 = vst [vmem:[%s174 + $0xa0] sm:$0xff] %v754
      %819 = vst [vmem:[%s174 + $0xa8] sm:$0xff] %v755
      %820 = vst [vmem:[%s174 + $0xb0] sm:$0xff] %v756
      %821 = vst [vmem:[%s174 + $0xb8] sm:$0xff] %v757
      %822 = vst [vmem:[%s174 + $0xc0] sm:$0xff] %v758
      %823 = vst [vmem:[%s174 + $0xc8] sm:$0xff] %v759
      %824 = vst [vmem:[%s174 + $0xd0] sm:$0xff] %v760
      %825 = vst [vmem:[%s174 + $0xd8] sm:$0xff] %v761
      %826 = vst [vmem:[%s174 + $0xe0] sm:$0xff] %v762
      %827 = vst [vmem:[%s174 + $0xe8] sm:$0xff] %v763
      %828 = vst [vmem:[%s174 + $0xf0] sm:$0xff] %v764
      %829 = vst [vmem:[%s174 + $0xf8] sm:$0xff] %v765
      %s830 = smul.u32 32, %s14
      %p831 = scmp.lt.s32.totalorder %s830, 63
      %s832 = scalar_select %p831, %s830, 63
      %s833 = smul.addr %s832, 2
      %s834 = smul.addr %s833, 4
      %s835 = scalar_lea.vmem %s3, %s834
      // Predicated region
      $region33: #{graphsage_forward.6} parent=31 // pred_check
        %p836 = pneg %p100
      $region34: #{graphsage_forward.6} parent=31 // pred_check_branch
        %838 = sbr.rel (%p836) target = $region36
      $region35: #{graphsage_forward.6} parent=31 // pred_region
        %s839 = smul.u32 32, %s14
      $region36: #{graphsage_forward.6} parent=31 // pred_fallthru
        _
    $region32: #{graphsage_forward.6} parent=5 // pred_fallthru
      _
    %p840 = scmp.le.s32.totalorder 2, %s9
    // Predicated region
    $region37: #{graphsage_forward.6} parent=5 // pred_check
      %p841 = pneg %p840
    $region38: #{graphsage_forward.6} parent=5 // pred_check_branch
      %843 = sbr.rel (%p841) target = $region40
    $region39: #{graphsage_forward.6} parent=5 // pred_region
      %s844 = ssub.s32 %s9, 2
      // Predicated region
      $region41: #{graphsage_forward.6} parent=39 // pred_check
        %p845 = pneg %p106
      $region42: #{graphsage_forward.6} parent=39 // pred_check_branch
        %847 = sbr.rel (%p845) target = $region44
      $region43: #{graphsage_forward.6} parent=39 // pred_region
        %s848 = smul.u32 32, %s15
        %p849 = scmp.lt.s32.totalorder %s848, 63
        %s850 = scalar_select %p849, %s848, 63
        %s851 = smul.addr %s850, 2
        %s852 = smul.addr %s851, 4
        %s853 = scalar_lea.vmem %s3, %s852
      $region44: #{graphsage_forward.6} parent=39 // pred_fallthru
        _
    $region40: #{graphsage_forward.6} parent=5 // pred_fallthru
      _
  $region6: #{graphsage_forward.6} parent=0 // loop_footer
    %s13 = sadd.s32 1, %s9
  $region7: #{graphsage_forward.6} parent=0 // loop_footer_branch
    %8 = sbr.rel target = $region3
  $region8: #{graphsage_forward.6} parent=0 // loop_exit
    _

// kernel: graphsage_forward.11
$region0: #{graphsage_forward.11}
  #allocation0 [shape = 'u32[]', space=smem, size = 0x4, offset = 0x4, fixed_abs, tag = 'smem constant byte address 0x4 - core index']
  #allocation1 [shape = 'u32[144,128]{1,0:T(1,128)}', space=vmem, size = 0x12000, scoped, tag = 'internal scratch']
  #allocation2 [shape = 'f32[256,128]{1,0:T(8,128)}', space=vmem, size = 0x20000, scoped, tag = 'scratch operand']
  %s0 = inlined_call_operand.vmem [shape: s8[512,512], index: 0, kind: input, shape index: {}]
  %s1 = inlined_call_operand.vmem [shape: bf16[512,256], index: 1, kind: input, shape index: {}, may-alias: {1,2}]
  %s2 = inlined_call_operand.vmem [shape: bf16[512,256], index: 2, kind: input, shape index: {}, may-alias: {1,2}]
  %s3 = inlined_call_operand.vmem [shape: f32[512,1], index: 3, kind: input, shape index: {}]
  %s4 = inlined_call_operand.hbm [shape: f32[512,128], index: 4, kind: output, shape index: {}]
  %s5 = sld [smem:[#allocation0]]
  $region139: #{graphsage_forward.11} parent=0
    _
  %s7 = ssub.s32 1, %s5
  %s8 = scalar_select 0, %s7, %s5
  $region1: #{graphsage_forward.11} parent=0
    #allocation3 [shape = 'u8[131072]{0}', space=vmem, size = 0x20000, scoped, tag = 'input window, operand 1, single buffered']
    #allocation4 [shape = 'u8[131072]{0}', space=vmem, size = 0x20000, scoped, tag = 'input window, operand 2']
    #allocation5 [shape = 'u8[262144]{0}', space=vmem, size = 0x40000, scoped, tag = 'output window, operand 0']
    #allocation6 [shape = 's32[2]{0}', space=sflag, size = 0x8, scoped, tag = 'scoped memory for graphsage_forward.11']
    %9 = vsyncpa [#allocation6], 0
    %s10 = scalar_lea.sflag [#allocation6], 1
    %11 = vsyncpa %s10, 0
    loop: start=0, step=1, limit=4
    $region2: #{graphsage_forward.11} parent=1 // loop_pre_header
      _
    $region3: #{graphsage_forward.11} parent=1 // loop_header
      %s13 = sphi 0, %s17
      %p14 = scmp.ge.s32.totalorder %s13, 4
      %s20 = sphi 0, %s32
      %s21 = sphi 0, %s28
      %s22 = sphi 0, %s20
      %s23 = sphi 0, %s21
      %s24 = sphi 0, %s22
      %s25 = sphi 0, %s23
      %s37 = sphi 0, %s39
      %s40 = sphi 0, %s37
      %s41 = sphi 0, %s40
      %s57 = sphi 0, %s41
      %s61 = sphi 0, %s61
      %s63 = sphi 0, %s61
      %s64 = sphi 0, %s63
      %s78 = sphi 0, %s64
      %s84 = sphi 0, %s86
      %s87 = sphi 0, %s84
      %s88 = sphi 0, %s87
      %s104 = sphi 0, %s88
      %s110 = sphi 0, %s112
      %s113 = sphi 0, %s110
      %s114 = sphi 0, %s113
      %s130 = sphi 0, %s114
      %s136 = sphi 0, %s138
      %s139 = sphi 0, %s136
      %s140 = sphi 0, %s139
      %s156 = sphi 0, %s140
    $region4: #{graphsage_forward.11} parent=1 // loop_header_branch
      %16 = sbr.rel (%p14) target = $region8
    $region5: #{graphsage_forward.11} parent=1 // loop_body
      %s18 = ssub.s32 %s13, 1
      %s19 = ssub.s32 %s13, 2
      %s26 = sadd.s32 1, %s21
      %p27 = scmp.ge.s32.totalorder %s26, 1
      %s28 = scalar_select %p27, 0, %s26
      %s29 = sadd.s32 1, %s20
      %s30 = scalar_select %p27, %s29, %s20
      %p31 = scmp.ge.s32.totalorder %s30, 2
      %s32 = scalar_select %p31, 0, %s30
      %s33 = ssub.s32 %s20, %s32
      %s34 = ssub.s32 %s21, %s28
      %s35 = sor.u32 %s33, %s34
      %p36 = scmp.eq.s32.totalorder %s35, 0
      %s38 = sadd.s32 %s37, 1
      %s39 = scalar_select %p36, %s37, %s38
      %p42 = pneg %p36
      %p43 = scmp.eq.s32.totalorder %s13, 1
      %p44 = por %p42, %p43
      %p45 = scmp.ne.s32.totalorder %s37, %s40
      %p46 = scmp.eq.s32.totalorder %s13, 0
      %p47 = por %p45, %p46
      %p48 = scmp.ne.s32.totalorder %s37, %s40
      %p49 = scmp.eq.s32.totalorder %s18, 1
      %p50 = por %p48, %p49
      %p51 = scmp.ne.s32.totalorder %s40, %s41
      %p52 = scmp.eq.s32.totalorder %s18, 0
      %p53 = por %p51, %p52
      %p54 = scmp.ne.s32.totalorder %s40, %s41
      %p55 = scmp.eq.s32.totalorder %s19, 1
      %p56 = por %p54, %p55
      %p58 = scmp.ne.s32.totalorder %s41, %s57
      %p59 = scmp.eq.s32.totalorder %s19, 0
      %p60 = por %p58, %p59
      %s62 = sadd.s32 %s61, 1
      %p65 = scmp.eq.s32.totalorder %s13, 1
      %p66 = scmp.ne.s32.totalorder %s61, %s63
      %p67 = scmp.eq.s32.totalorder %s13, 0
      %p68 = por %p66, %p67
      %p69 = scmp.ne.s32.totalorder %s61, %s63
      %p70 = scmp.eq.s32.totalorder %s18, 1
      %p71 = por %p69, %p70
      %p72 = scmp.ne.s32.totalorder %s63, %s64
      %p73 = scmp.eq.s32.totalorder %s18, 0
      %p74 = por %p72, %p73
      %p75 = scmp.ne.s32.totalorder %s63, %s64
      %p76 = scmp.eq.s32.totalorder %s19, 1
      %p77 = por %p75, %p76
      %p79 = scmp.ne.s32.totalorder %s64, %s78
      %p80 = scmp.eq.s32.totalorder %s19, 0
      %p81 = por %p79, %p80
      %s82 = ssub.s32 %s20, %s32
      %p83 = scmp.eq.s32.totalorder %s82, 0
      %s85 = sadd.s32 %s84, 1
      %s86 = scalar_select %p83, %s84, %s85
      %p89 = pneg %p83
      %p90 = scmp.eq.s32.totalorder %s13, 1
      %p91 = por %p89, %p90
      %p92 = scmp.ne.s32.totalorder %s84, %s87
      %p93 = scmp.eq.s32.totalorder %s13, 0
      %p94 = por %p92, %p93
      %p95 = scmp.ne.s32.totalorder %s84, %s87
      %p96 = scmp.eq.s32.totalorder %s18, 1
      %p97 = por %p95, %p96
      %p98 = scmp.ne.s32.totalorder %s87, %s88
      %p99 = scmp.eq.s32.totalorder %s18, 0
      %p100 = por %p98, %p99
      %p101 = scmp.ne.s32.totalorder %s87, %s88
      %p102 = scmp.eq.s32.totalorder %s19, 1
      %p103 = por %p101, %p102
      %p105 = scmp.ne.s32.totalorder %s88, %s104
      %p106 = scmp.eq.s32.totalorder %s19, 0
      %p107 = por %p105, %p106
      %s108 = ssub.s32 %s20, %s32
      %p109 = scmp.eq.s32.totalorder %s108, 0
      %s111 = sadd.s32 %s110, 1
      %s112 = scalar_select %p109, %s110, %s111
      %p115 = pneg %p109
      %p116 = scmp.eq.s32.totalorder %s13, 1
      %p117 = por %p115, %p116
      %p118 = scmp.ne.s32.totalorder %s110, %s113
      %p119 = scmp.eq.s32.totalorder %s13, 0
      %p120 = por %p118, %p119
      %p121 = scmp.ne.s32.totalorder %s110, %s113
      %p122 = scmp.eq.s32.totalorder %s18, 1
      %p123 = por %p121, %p122
      %p124 = scmp.ne.s32.totalorder %s113, %s114
      %p125 = scmp.eq.s32.totalorder %s18, 0
      %p126 = por %p124, %p125
      %p127 = scmp.ne.s32.totalorder %s113, %s114
      %p128 = scmp.eq.s32.totalorder %s19, 1
      %p129 = por %p127, %p128
      %p131 = scmp.ne.s32.totalorder %s114, %s130
      %p132 = scmp.eq.s32.totalorder %s19, 0
      %p133 = por %p131, %p132
      %s134 = ssub.s32 %s20, %s32
      %p135 = scmp.eq.s32.totalorder %s134, 0
      %s137 = sadd.s32 %s136, 1
      %s138 = scalar_select %p135, %s136, %s137
      %p141 = pneg %p135
      %p142 = scmp.eq.s32.totalorder %s13, 1
      %p143 = por %p141, %p142
      %p144 = scmp.ne.s32.totalorder %s136, %s139
      %p145 = scmp.eq.s32.totalorder %s13, 0
      %p146 = por %p144, %p145
      %p147 = scmp.ne.s32.totalorder %s136, %s139
      %p148 = scmp.eq.s32.totalorder %s18, 1
      %p149 = por %p147, %p148
      %p150 = scmp.ne.s32.totalorder %s139, %s140
      %p151 = scmp.eq.s32.totalorder %s18, 0
      %p152 = por %p150, %p151
      %p153 = scmp.ne.s32.totalorder %s139, %s140
      %p154 = scmp.eq.s32.totalorder %s19, 1
      %p155 = por %p153, %p154
      %p157 = scmp.ne.s32.totalorder %s140, %s156
      %p158 = scmp.eq.s32.totalorder %s19, 0
      %p159 = por %p157, %p158
      %p160 = scmp.le.s32.totalorder 1, %s13
      %p161 = scmp.lt.s32.totalorder %s13, 3
      %p162 = pnand %p160, %p161
      %p163 = pneg %p162
      // Predicated region
      $region9: #{graphsage_forward.11} parent=5 // pred_check
        _
      $region10: #{graphsage_forward.11} parent=5 // pred_check_branch
        %165 = sbr.rel (%p162) target = $region12
      $region11: #{graphsage_forward.11} parent=5 // pred_region
        %s166 = ssub.s32 %s13, 1
        // Predicated region
        $region13: #{graphsage_forward.11} parent=11 // pred_check
          %p167 = pneg %p74
        $region14: #{graphsage_forward.11} parent=11 // pred_check_branch
          %169 = sbr.rel (%p167) target = $region16
        $region15: #{graphsage_forward.11} parent=11 // pred_region
          %s170 = scalar_lea.vmem %s1, 4
          // Predicated region
          $region17: #{graphsage_forward.11} parent=15 // pred_check
            _
          $region18: #{graphsage_forward.11} parent=15 // pred_check_branch
            %172 = sbr.rel (0) target = $region20
          $region19: #{graphsage_forward.11} parent=15 // pred_region
            // Predicated region
            $region21: #{graphsage_forward.11} parent=19 // pred_check
              _
            $region22: #{graphsage_forward.11} parent=19 // pred_check_branch
              %174 = sbr.rel target = $region24
            $region23: #{graphsage_forward.11} parent=19 // pred_region
              // Predicated region
              $region36: #{graphsage_forward.11} parent=23 // pred_check
                _
              $region37: #{graphsage_forward.11} parent=23 // pred_check_branch
                %316 = sbr.rel (0) target = $region39
              $region38: #{graphsage_forward.11} parent=23 // pred_region
                loop: start=0, step=1, limit=1
                $region40: #{graphsage_forward.11} parent=38 // loop_pre_header
                  _
                $region41: #{graphsage_forward.11} parent=38 // loop_header
                  %s318 = sphi 0, %s322
                  %p319 = scmp.ge.s32.totalorder %s318, 1
                  %s323 = sphi %s170, %s170
                  %s324 = sphi [#allocation3], [#allocation3]
                $region42: #{graphsage_forward.11} parent=38 // loop_header_branch
                  %321 = sbr.rel (%p319) target = $region46
                $region43: #{graphsage_forward.11} parent=38 // loop_body
                  _
                $region44: #{graphsage_forward.11} parent=38 // loop_footer
                  %s322 = sadd.s32 1, %s318
                $region45: #{graphsage_forward.11} parent=38 // loop_footer_branch
                  %317 = sbr.rel target = $region41
                $region46: #{graphsage_forward.11} parent=38 // loop_exit
                  _
                %s326 = ssub.s32 16, 1
                loop: start=0, step=1, limit=1
                $region47: #{graphsage_forward.11} parent=38 // loop_pre_header
                  _
                $region48: #{graphsage_forward.11} parent=38 // loop_header
                  %s328 = sphi 0, %s332
                  %p329 = scmp.ge.s32.totalorder %s328, 1
                  %s333 = sphi %s170, %s170
                  %s334 = sphi [#allocation3], [#allocation3]
                $region49: #{graphsage_forward.11} parent=38 // loop_header_branch
                  %331 = sbr.rel (%p329) target = $region53
                $region50: #{graphsage_forward.11} parent=38 // loop_body
                  %v335 = vld [vmem:[%s333] sm:%s326]
                  %336 = vst [vmem:[%s334] sm:%s326] %v335
                  %v337 = vld [vmem:[%s333 + $0x8] sm:%s326]
                  %338 = vst [vmem:[%s334 + $0x4] sm:%s326] %v337
                  %v339 = vld [vmem:[%s333 + $0x10] sm:%s326]
                  %340 = vst [vmem:[%s334 + $0x8] sm:%s326] %v339
                  %v341 = vld [vmem:[%s333 + $0x18] sm:%s326]
                  %342 = vst [vmem:[%s334 + $0xc] sm:%s326] %v341
                  %v343 = vld [vmem:[%s333 + $0x20] sm:%s326]
                  %344 = vst [vmem:[%s334 + $0x10] sm:%s326] %v343
                  %v345 = vld [vmem:[%s333 + $0x28] sm:%s326]
                  %346 = vst [vmem:[%s334 + $0x14] sm:%s326] %v345
                  %v347 = vld [vmem:[%s333 + $0x30] sm:%s326]
                  %348 = vst [vmem:[%s334 + $0x18] sm:%s326] %v347
                  %v349 = vld [vmem:[%s333 + $0x38] sm:%s326]
                  %350 = vst [vmem:[%s334 + $0x1c] sm:%s326] %v349
                  %v351 = vld [vmem:[%s333 + $0x40] sm:%s326]
                  %352 = vst [vmem:[%s334 + $0x20] sm:%s326] %v351
                  %v353 = vld [vmem:[%s333 + $0x48] sm:%s326]
                  %354 = vst [vmem:[%s334 + $0x24] sm:%s326] %v353
                  %v355 = vld [vmem:[%s333 + $0x50] sm:%s326]
                  %356 = vst [vmem:[%s334 + $0x28] sm:%s326] %v355
                  %v357 = vld [vmem:[%s333 + $0x58] sm:%s326]
                  %358 = vst [vmem:[%s334 + $0x2c] sm:%s326] %v357
                  %v359 = vld [vmem:[%s333 + $0x60] sm:%s326]
                  %360 = vst [vmem:[%s334 + $0x30] sm:%s326] %v359
                  %v361 = vld [vmem:[%s333 + $0x68] sm:%s326]
                  %362 = vst [vmem:[%s334 + $0x34] sm:%s326] %v361
                  %v363 = vld [vmem:[%s333 + $0x70] sm:%s326]
                  %364 = vst [vmem:[%s334 + $0x38] sm:%s326] %v363
                  %v365 = vld [vmem:[%s333 + $0x78] sm:%s326]
                  %366 = vst [vmem:[%s334 + $0x3c] sm:%s326] %v365
                  %v367 = vld [vmem:[%s333 + $0x80] sm:%s326]
                  %368 = vst [vmem:[%s334 + $0x40] sm:%s326] %v367
                  %v369 = vld [vmem:[%s333 + $0x88] sm:%s326]
                  %370 = vst [vmem:[%s334 + $0x44] sm:%s326] %v369
                  %v371 = vld [vmem:[%s333 + $0x90] sm:%s326]
                  %372 = vst [vmem:[%s334 + $0x48] sm:%s326] %v371
                  %v373 = vld [vmem:[%s333 + $0x98] sm:%s326]
                  %374 = vst [vmem:[%s334 + $0x4c] sm:%s326] %v373
                  %v375 = vld [vmem:[%s333 + $0xa0] sm:%s326]
                  %376 = vst [vmem:[%s334 + $0x50] sm:%s326] %v375
                  %v377 = vld [vmem:[%s333 + $0xa8] sm:%s326]
                  %378 = vst [vmem:[%s334 + $0x54] sm:%s326] %v377
                  %v379 = vld [vmem:[%s333 + $0xb0] sm:%s326]
                  %380 = vst [vmem:[%s334 + $0x58] sm:%s326] %v379
                  %v381 = vld [vmem:[%s333 + $0xb8] sm:%s326]
                  %382 = vst [vmem:[%s334 + $0x5c] sm:%s326] %v381
                  %v383 = vld [vmem:[%s333 + $0xc0] sm:%s326]
                  %384 = vst [vmem:[%s334 + $0x60] sm:%s326] %v383
                  %v385 = vld [vmem:[%s333 + $0xc8] sm:%s326]
                  %386 = vst [vmem:[%s334 + $0x64] sm:%s326] %v385
                  %v387 = vld [vmem:[%s333 + $0xd0] sm:%s326]
                  %388 = vst [vmem:[%s334 + $0x68] sm:%s326] %v387
                  %v389 = vld [vmem:[%s333 + $0xd8] sm:%s326]
                  %390 = vst [vmem:[%s334 + $0x6c] sm:%s326] %v389
                  %v391 = vld [vmem:[%s333 + $0xe0] sm:%s326]
                  %392 = vst [vmem:[%s334 + $0x70] sm:%s326] %v391
                  %v393 = vld [vmem:[%s333 + $0xe8] sm:%s326]
                  %394 = vst [vmem:[%s334 + $0x74] sm:%s326] %v393
                  %v395 = vld [vmem:[%s333 + $0xf0] sm:%s326]
                  %396 = vst [vmem:[%s334 + $0x78] sm:%s326] %v395
                  %v397 = vld [vmem:[%s333 + $0xf8] sm:%s326]
                  %398 = vst [vmem:[%s334 + $0x7c] sm:%s326] %v397
                  %v399 = vld [vmem:[%s333 + $0x100] sm:%s326]
                  %400 = vst [vmem:[%s334 + $0x80] sm:%s326] %v399
                  %v401 = vld [vmem:[%s333 + $0x108] sm:%s326]
                  %402 = vst [vmem:[%s334 + $0x84] sm:%s326] %v401
                  %v403 = vld [vmem:[%s333 + $0x110] sm:%s326]
                  %404 = vst [vmem:[%s334 + $0x88] sm:%s326] %v403
                  %v405 = vld [vmem:[%s333 + $0x118] sm:%s326]
                  %406 = vst [vmem:[%s334 + $0x8c] sm:%s326] %v405
                  %v407 = vld [vmem:[%s333 + $0x120] sm:%s326]
                  %408 = vst [vmem:[%s334 + $0x90] sm:%s326] %v407
                  %v409 = vld [vmem:[%s333 + $0x128] sm:%s326]
                  %410 = vst [vmem:[%s334 + $0x94] sm:%s326] %v409
                  %v411 = vld [vmem:[%s333 + $0x130] sm:%s326]
                  %412 = vst [vmem:[%s334 + $0x98] sm:%s326] %v411
                  %v413 = vld [vmem:[%s333 + $0x138] sm:%s326]
                  %414 = vst [vmem:[%s334 + $0x9c] sm:%s326] %v413
                  %v415 = vld [vmem:[%s333 + $0x140] sm:%s326]
                  %416 = vst [vmem:[%s334 + $0xa0] sm:%s326] %v415
                  %v417 = vld [vmem:[%s333 + $0x148] sm:%s326]
                  %418 = vst [vmem:[%s334 + $0xa4] sm:%s326] %v417
                  %v419 = vld [vmem:[%s333 + $0x150] sm:%s326]
                  %420 = vst [vmem:[%s334 + $0xa8] sm:%s326] %v419
                  %v421 = vld [vmem:[%s333 + $0x158] sm:%s326]
                  %422 = vst [vmem:[%s334 + $0xac] sm:%s326] %v421
                  %v423 = vld [vmem:[%s333 + $0x160] sm:%s326]
                  %424 = vst [vmem:[%s334 + $0xb0] sm:%s326] %v423
                  %v425 = vld [vmem:[%s333 + $0x168] sm:%s326]
                  %426 = vst [vmem:[%s334 + $0xb4] sm:%s326] %v425
                  %v427 = vld [vmem:[%s333 + $0x170] sm:%s326]
                  %428 = vst [vmem:[%s334 + $0xb8] sm:%s326] %v427
                  %v429 = vld [vmem:[%s333 + $0x178] sm:%s326]
                  %430 = vst [vmem:[%s334 + $0xbc] sm:%s326] %v429
                  %v431 = vld [vmem:[%s333 + $0x180] sm:%s326]
                  %432 = vst [vmem:[%s334 + $0xc0] sm:%s326] %v431
                  %v433 = vld [vmem:[%s333 + $0x188] sm:%s326]
                  %434 = vst [vmem:[%s334 + $0xc4] sm:%s326] %v433
                  %v435 = vld [vmem:[%s333 + $0x190] sm:%s326]
                  %436 = vst [vmem:[%s334 + $0xc8] sm:%s326] %v435
                  %v437 = vld [vmem:[%s333 + $0x198] sm:%s326]
                  %438 = vst [vmem:[%s334 + $0xcc] sm:%s326] %v437
                  %v439 = vld [vmem:[%s333 + $0x1a0] sm:%s326]
                  %440 = vst [vmem:[%s334 + $0xd0] sm:%s326] %v439
                  %v441 = vld [vmem:[%s333 + $0x1a8] sm:%s326]
                  %442 = vst [vmem:[%s334 + $0xd4] sm:%s326] %v441
                  %v443 = vld [vmem:[%s333 + $0x1b0] sm:%s326]
                  %444 = vst [vmem:[%s334 + $0xd8] sm:%s326] %v443
                  %v445 = vld [vmem:[%s333 + $0x1b8] sm:%s326]
                  %446 = vst [vmem:[%s334 + $0xdc] sm:%s326] %v445
                  %v447 = vld [vmem:[%s333 + $0x1c0] sm:%s326]
                  %448 = vst [vmem:[%s334 + $0xe0] sm:%s326] %v447
                  %v449 = vld [vmem:[%s333 + $0x1c8] sm:%s326]
                  %450 = vst [vmem:[%s334 + $0xe4] sm:%s326] %v449
                  %v451 = vld [vmem:[%s333 + $0x1d0] sm:%s326]
                  %452 = vst [vmem:[%s334 + $0xe8] sm:%s326] %v451
                  %v453 = vld [vmem:[%s333 + $0x1d8] sm:%s326]
                  %454 = vst [vmem:[%s334 + $0xec] sm:%s326] %v453
                  %v455 = vld [vmem:[%s333 + $0x1e0] sm:%s326]
                  %456 = vst [vmem:[%s334 + $0xf0] sm:%s326] %v455
                  %v457 = vld [vmem:[%s333 + $0x1e8] sm:%s326]
                  %458 = vst [vmem:[%s334 + $0xf4] sm:%s326] %v457
                  %v459 = vld [vmem:[%s333 + $0x1f0] sm:%s326]
                  %460 = vst [vmem:[%s334 + $0xf8] sm:%s326] %v459
                  %v461 = vld [vmem:[%s333 + $0x1f8] sm:%s326]
                  %462 = vst [vmem:[%s334 + $0xfc] sm:%s326] %v461
                $region51: #{graphsage_forward.11} parent=38 // loop_footer
                  %s332 = sadd.s32 1, %s328
                $region52: #{graphsage_forward.11} parent=38 // loop_footer_branch
                  %327 = sbr.rel target = $region48
                $region53: #{graphsage_forward.11} parent=38 // loop_exit
                  _
              $region39: #{graphsage_forward.11} parent=23 // pred_fallthru
                _
            $region24: #{graphsage_forward.11} parent=19 // pred_fallthru
              _
            // Predicated region
            $region25: #{graphsage_forward.11} parent=19 // pred_check
              _
            $region26: #{graphsage_forward.11} parent=19 // pred_check_branch
              %176 = sbr.rel (0) target = $region28
            $region27: #{graphsage_forward.11} parent=19 // pred_region
              %s178 = ssub.s32 16, 1
              loop: start=0, step=1, limit=1
              $region29: #{graphsage_forward.11} parent=27 // loop_pre_header
                _
              $region30: #{graphsage_forward.11} parent=27 // loop_header
                %s180 = sphi 0, %s184
                %p181 = scmp.ge.s32.totalorder %s180, 1
                %s185 = sphi %s170, %s170
                %s186 = sphi [#allocation3], [#allocation3]
              $region31: #{graphsage_forward.11} parent=27 // loop_header_branch
                %183 = sbr.rel (%p181) target = $region35
              $region32: #{graphsage_forward.11} parent=27 // loop_body
                %v187 = vld [vmem:[%s185] sm:%s178]
                %188 = vst [vmem:[%s186] sm:%s178] %v187
                %v189 = vld [vmem:[%s185 + $0x8] sm:%s178]
                %190 = vst [vmem:[%s186 + $0x4] sm:%s178] %v189
                %v191 = vld [vmem:[%s185 + $0x10] sm:%s178]
                %192 = vst [vmem:[%s186 + $0x8] sm:%s178] %v191
                %v193 = vld [vmem:[%s185 + $0x18] sm:%s178]
                %194 = vst [vmem:[%s186 + $0xc] sm:%s178] %v193
                %v195 = vld [vmem:[%s185 + $0x20] sm:%s178]
                %196 = vst [vmem:[%s186 + $0x10] sm:%s178] %v195
                %v197 = vld [vmem:[%s185 + $0x28] sm:%s178]
                %198 = vst [vmem:[%s186 + $0x14] sm:%s178] %v197
                %v199 = vld [vmem:[%s185 + $0x30] sm:%s178]
                %200 = vst [vmem:[%s186 + $0x18] sm:%s178] %v199
                %v201 = vld [vmem:[%s185 + $0x38] sm:%s178]
                %202 = vst [vmem:[%s186 + $0x1c] sm:%s178] %v201
                %v203 = vld [vmem:[%s185 + $0x40] sm:%s178]
                %204 = vst [vmem:[%s186 + $0x20] sm:%s178] %v203
                %v205 = vld [vmem:[%s185 + $0x48] sm:%s178]
                %206 = vst [vmem:[%s186 + $0x24] sm:%s178] %v205
                %v207 = vld [vmem:[%s185 + $0x50] sm:%s178]
                %208 = vst [vmem:[%s186 + $0x28] sm:%s178] %v207
                %v209 = vld [vmem:[%s185 + $0x58] sm:%s178]
                %210 = vst [vmem:[%s186 + $0x2c] sm:%s178] %v209
                %v211 = vld [vmem:[%s185 + $0x60] sm:%s178]
                %212 = vst [vmem:[%s186 + $0x30] sm:%s178] %v211
                %v213 = vld [vmem:[%s185 + $0x68] sm:%s178]
                %214 = vst [vmem:[%s186 + $0x34] sm:%s178] %v213
                %v215 = vld [vmem:[%s185 + $0x70] sm:%s178]
                %216 = vst [vmem:[%s186 + $0x38] sm:%s178] %v215
                %v217 = vld [vmem:[%s185 + $0x78] sm:%s178]
                %218 = vst [vmem:[%s186 + $0x3c] sm:%s178] %v217
                %v219 = vld [vmem:[%s185 + $0x80] sm:%s178]
                %220 = vst [vmem:[%s186 + $0x40] sm:%s178] %v219
                %v221 = vld [vmem:[%s185 + $0x88] sm:%s178]
                %222 = vst [vmem:[%s186 + $0x44] sm:%s178] %v221
                %v223 = vld [vmem:[%s185 + $0x90] sm:%s178]
                %224 = vst [vmem:[%s186 + $0x48] sm:%s178] %v223
                %v225 = vld [vmem:[%s185 + $0x98] sm:%s178]
                %226 = vst [vmem:[%s186 + $0x4c] sm:%s178] %v225
                %v227 = vld [vmem:[%s185 + $0xa0] sm:%s178]
                %228 = vst [vmem:[%s186 + $0x50] sm:%s178] %v227
                %v229 = vld [vmem:[%s185 + $0xa8] sm:%s178]
                %230 = vst [vmem:[%s186 + $0x54] sm:%s178] %v229
                %v231 = vld [vmem:[%s185 + $0xb0] sm:%s178]
                %232 = vst [vmem:[%s186 + $0x58] sm:%s178] %v231
                %v233 = vld [vmem:[%s185 + $0xb8] sm:%s178]
                %234 = vst [vmem:[%s186 + $0x5c] sm:%s178] %v233
                %v235 = vld [vmem:[%s185 + $0xc0] sm:%s178]
                %236 = vst [vmem:[%s186 + $0x60] sm:%s178] %v235
                %v237 = vld [vmem:[%s185 + $0xc8] sm:%s178]
                %238 = vst [vmem:[%s186 + $0x64] sm:%s178] %v237
                %v239 = vld [vmem:[%s185 + $0xd0] sm:%s178]
                %240 = vst [vmem:[%s186 + $0x68] sm:%s178] %v239
                %v241 = vld [vmem:[%s185 + $0xd8] sm:%s178]
                %242 = vst [vmem:[%s186 + $0x6c] sm:%s178] %v241
                %v243 = vld [vmem:[%s185 + $0xe0] sm:%s178]
                %244 = vst [vmem:[%s186 + $0x70] sm:%s178] %v243
                %v245 = vld [vmem:[%s185 + $0xe8] sm:%s178]
                %246 = vst [vmem:[%s186 + $0x74] sm:%s178] %v245
                %v247 = vld [vmem:[%s185 + $0xf0] sm:%s178]
                %248 = vst [vmem:[%s186 + $0x78] sm:%s178] %v247
                %v249 = vld [vmem:[%s185 + $0xf8] sm:%s178]
                %250 = vst [vmem:[%s186 + $0x7c] sm:%s178] %v249
                %v251 = vld [vmem:[%s185 + $0x100] sm:%s178]
                %252 = vst [vmem:[%s186 + $0x80] sm:%s178] %v251
                %v253 = vld [vmem:[%s185 + $0x108] sm:%s178]
                %254 = vst [vmem:[%s186 + $0x84] sm:%s178] %v253
                %v255 = vld [vmem:[%s185 + $0x110] sm:%s178]
                %256 = vst [vmem:[%s186 + $0x88] sm:%s178] %v255
                %v257 = vld [vmem:[%s185 + $0x118] sm:%s178]
                %258 = vst [vmem:[%s186 + $0x8c] sm:%s178] %v257
                %v259 = vld [vmem:[%s185 + $0x120] sm:%s178]
                %260 = vst [vmem:[%s186 + $0x90] sm:%s178] %v259
                %v261 = vld [vmem:[%s185 + $0x128] sm:%s178]
                %262 = vst [vmem:[%s186 + $0x94] sm:%s178] %v261
                %v263 = vld [vmem:[%s185 + $0x130] sm:%s178]
                %264 = vst [vmem:[%s186 + $0x98] sm:%s178] %v263
                %v265 = vld [vmem:[%s185 + $0x138] sm:%s178]
                %266 = vst [vmem:[%s186 + $0x9c] sm:%s178] %v265
                %v267 = vld [vmem:[%s185 + $0x140] sm:%s178]
                %268 = vst [vmem:[%s186 + $0xa0] sm:%s178] %v267
                %v269 = vld [vmem:[%s185 + $0x148] sm:%s178]
                %270 = vst [vmem:[%s186 + $0xa4] sm:%s178] %v269
                %v271 = vld [vmem:[%s185 + $0x150] sm:%s178]
                %272 = vst [vmem:[%s186 + $0xa8] sm:%s178] %v271
                %v273 = vld [vmem:[%s185 + $0x158] sm:%s178]
                %274 = vst [vmem:[%s186 + $0xac] sm:%s178] %v273
                %v275 = vld [vmem:[%s185 + $0x160] sm:%s178]
                %276 = vst [vmem:[%s186 + $0xb0] sm:%s178] %v275
                %v277 = vld [vmem:[%s185 + $0x168] sm:%s178]
                %278 = vst [vmem:[%s186 + $0xb4] sm:%s178] %v277
                %v279 = vld [vmem:[%s185 + $0x170] sm:%s178]
                %280 = vst [vmem:[%s186 + $0xb8] sm:%s178] %v279
                %v281 = vld [vmem:[%s185 + $0x178] sm:%s178]
                %282 = vst [vmem:[%s186 + $0xbc] sm:%s178] %v281
                %v283 = vld [vmem:[%s185 + $0x180] sm:%s178]
                %284 = vst [vmem:[%s186 + $0xc0] sm:%s178] %v283
                %v285 = vld [vmem:[%s185 + $0x188] sm:%s178]
                %286 = vst [vmem:[%s186 + $0xc4] sm:%s178] %v285
                %v287 = vld [vmem:[%s185 + $0x190] sm:%s178]
                %288 = vst [vmem:[%s186 + $0xc8] sm:%s178] %v287
                %v289 = vld [vmem:[%s185 + $0x198] sm:%s178]
                %290 = vst [vmem:[%s186 + $0xcc] sm:%s178] %v289
                %v291 = vld [vmem:[%s185 + $0x1a0] sm:%s178]
                %292 = vst [vmem:[%s186 + $0xd0] sm:%s178] %v291
                %v293 = vld [vmem:[%s185 + $0x1a8] sm:%s178]
                %294 = vst [vmem:[%s186 + $0xd4] sm:%s178] %v293
                %v295 = vld [vmem:[%s185 + $0x1b0] sm:%s178]
                %296 = vst [vmem:[%s186 + $0xd8] sm:%s178] %v295
                %v297 = vld [vmem:[%s185 + $0x1b8] sm:%s178]
                %298 = vst [vmem:[%s186 + $0xdc] sm:%s178] %v297
                %v299 = vld [vmem:[%s185 + $0x1c0] sm:%s178]
                %300 = vst [vmem:[%s186 + $0xe0] sm:%s178] %v299
                %v301 = vld [vmem:[%s185 + $0x1c8] sm:%s178]
                %302 = vst [vmem:[%s186 + $0xe4] sm:%s178] %v301
                %v303 = vld [vmem:[%s185 + $0x1d0] sm:%s178]
                %304 = vst [vmem:[%s186 + $0xe8] sm:%s178] %v303
                %v305 = vld [vmem:[%s185 + $0x1d8] sm:%s178]
                %306 = vst [vmem:[%s186 + $0xec] sm:%s178] %v305
                %v307 = vld [vmem:[%s185 + $0x1e0] sm:%s178]
                %308 = vst [vmem:[%s186 + $0xf0] sm:%s178] %v307
                %v309 = vld [vmem:[%s185 + $0x1e8] sm:%s178]
                %310 = vst [vmem:[%s186 + $0xf4] sm:%s178] %v309
                %v311 = vld [vmem:[%s185 + $0x1f0] sm:%s178]
                %312 = vst [vmem:[%s186 + $0xf8] sm:%s178] %v311
                %v313 = vld [vmem:[%s185 + $0x1f8] sm:%s178]
                %314 = vst [vmem:[%s186 + $0xfc] sm:%s178] %v313
              $region33: #{graphsage_forward.11} parent=27 // loop_footer
                %s184 = sadd.s32 1, %s180
              $region34: #{graphsage_forward.11} parent=27 // loop_footer_branch
                %179 = sbr.rel target = $region30
              $region35: #{graphsage_forward.11} parent=27 // loop_exit
                _
            $region28: #{graphsage_forward.11} parent=19 // pred_fallthru
              _
          $region20: #{graphsage_forward.11} parent=15 // pred_fallthru
            _
          %463 = vnop
        $region16: #{graphsage_forward.11} parent=11 // pred_fallthru
          _
      $region12: #{graphsage_forward.11} parent=5 // pred_fallthru
        _
      %p464 = scmp.lt.s32.totalorder %s13, 2
      // Predicated region
      $region54: #{graphsage_forward.11} parent=5 // pred_check
        %p465 = pneg %p464
      $region55: #{graphsage_forward.11} parent=5 // pred_check_branch
        %467 = sbr.rel (%p465) target = $region57
      $region56: #{graphsage_forward.11} parent=5 // pred_region
        // Predicated region
        $region58: #{graphsage_forward.11} parent=56 // pred_check
          %p468 = pneg %p47
        $region59: #{graphsage_forward.11} parent=56 // pred_check_branch
          %470 = sbr.rel (%p468) target = $region61
        $region60: #{graphsage_forward.11} parent=56 // pred_region
          %s471 = smul.u32 8, %s20
          %s472 = smul.u32 4, %s21
          %p473 = scmp.lt.s32.totalorder %s471, 15
          %s474 = scalar_select %p473, %s471, 15
          %p475 = scmp.lt.s32.totalorder %s472, 3
          %s476 = scalar_select %p475, %s472, 3
          %s477 = smul.addr %s474, 4
          %s478 = sadd.s32 %s476, %s477
          %s479 = smul.addr %s478, 8
          %s480 = scalar_lea.vmem %s0, %s479
          %s481 = smul.u32 8, %s20
          %s482 = smul.u32 4, %s21
        $region61: #{graphsage_forward.11} parent=56 // pred_fallthru
          _
        // Predicated region
        $region62: #{graphsage_forward.11} parent=56 // pred_check
          %p483 = pneg %p94
        $region63: #{graphsage_forward.11} parent=56 // pred_check_branch
          %485 = sbr.rel (%p483) target = $region65
        $region64: #{graphsage_forward.11} parent=56 // pred_region
          %s486 = sand.u32 %s84, 1
          %s487 = sand.u32 %s84, 1
          %s488 = smul.addr %s487, 128
          %s489 = scalar_lea.vmem [#allocation4], %s488
          %s490 = smul.u32 32, %s20
          %s491 = smul.addr %s490, 2
          %s492 = smul.addr %s491, 4
          %s493 = scalar_lea.vmem %s2, %s492
          // Predicated region
          $region66: #{graphsage_forward.11} parent=64 // pred_check
            _
          $region67: #{graphsage_forward.11} parent=64 // pred_check_branch
            %495 = sbr.rel (0) target = $region69
          $region68: #{graphsage_forward.11} parent=64 // pred_region
            // Predicated region
            $region70: #{graphsage_forward.11} parent=68 // pred_check
              _
            $region71: #{graphsage_forward.11} parent=68 // pred_check_branch
              %497 = sbr.rel target = $region73
            $region72: #{graphsage_forward.11} parent=68 // pred_region
              // Predicated region
              $region85: #{graphsage_forward.11} parent=72 // pred_check
                _
              $region86: #{graphsage_forward.11} parent=72 // pred_check_branch
                %575 = sbr.rel (0) target = $region88
              $region87: #{graphsage_forward.11} parent=72 // pred_region
                loop: start=0, step=1, limit=1
                $region89: #{graphsage_forward.11} parent=87 // loop_pre_header
                  _
                $region90: #{graphsage_forward.11} parent=87 // loop_header
                  %s577 = sphi 0, %s581
                  %p578 = scmp.ge.s32.totalorder %s577, 1
                  %s582 = sphi %s493, %s493
                  %s583 = sphi %s489, %s489
                $region91: #{graphsage_forward.11} parent=87 // loop_header_branch
                  %580 = sbr.rel (%p578) target = $region95
                $region92: #{graphsage_forward.11} parent=87 // loop_body
                  _
                $region93: #{graphsage_forward.11} parent=87 // loop_footer
                  %s581 = sadd.s32 1, %s577
                $region94: #{graphsage_forward.11} parent=87 // loop_footer_branch
                  %576 = sbr.rel target = $region90
                $region95: #{graphsage_forward.11} parent=87 // loop_exit
                  _
                %s585 = ssub.s32 16, 1
                loop: start=0, step=1, limit=1
                $region96: #{graphsage_forward.11} parent=87 // loop_pre_header
                  _
                $region97: #{graphsage_forward.11} parent=87 // loop_header
                  %s587 = sphi 0, %s591
                  %p588 = scmp.ge.s32.totalorder %s587, 1
                  %s592 = sphi %s493, %s493
                  %s593 = sphi %s489, %s489
                $region98: #{graphsage_forward.11} parent=87 // loop_header_branch
                  %590 = sbr.rel (%p588) target = $region102
                $region99: #{graphsage_forward.11} parent=87 // loop_body
                  %v594 = vld [vmem:[%s592] sm:%s585]
                  %595 = vst [vmem:[%s593] sm:%s585] %v594
                  %v596 = vld [vmem:[%s592 + $0x8] sm:%s585]
                  %597 = vst [vmem:[%s593 + $0x4] sm:%s585] %v596
                  %v598 = vld [vmem:[%s592 + $0x10] sm:%s585]
                  %599 = vst [vmem:[%s593 + $0x8] sm:%s585] %v598
                  %v600 = vld [vmem:[%s592 + $0x18] sm:%s585]
                  %601 = vst [vmem:[%s593 + $0xc] sm:%s585] %v600
                  %v602 = vld [vmem:[%s592 + $0x20] sm:%s585]
                  %603 = vst [vmem:[%s593 + $0x10] sm:%s585] %v602
                  %v604 = vld [vmem:[%s592 + $0x28] sm:%s585]
                  %605 = vst [vmem:[%s593 + $0x14] sm:%s585] %v604
                  %v606 = vld [vmem:[%s592 + $0x30] sm:%s585]
                  %607 = vst [vmem:[%s593 + $0x18] sm:%s585] %v606
                  %v608 = vld [vmem:[%s592 + $0x38] sm:%s585]
                  %609 = vst [vmem:[%s593 + $0x1c] sm:%s585] %v608
                  %v610 = vld [vmem:[%s592 + $0x40] sm:%s585]
                  %611 = vst [vmem:[%s593 + $0x20] sm:%s585] %v610
                  %v612 = vld [vmem:[%s592 + $0x48] sm:%s585]
                  %613 = vst [vmem:[%s593 + $0x24] sm:%s585] %v612
                  %v614 = vld [vmem:[%s592 + $0x50] sm:%s585]
                  %615 = vst [vmem:[%s593 + $0x28] sm:%s585] %v614
                  %v616 = vld [vmem:[%s592 + $0x58] sm:%s585]
                  %617 = vst [vmem:[%s593 + $0x2c] sm:%s585] %v616
                  %v618 = vld [vmem:[%s592 + $0x60] sm:%s585]
                  %619 = vst [vmem:[%s593 + $0x30] sm:%s585] %v618
                  %v620 = vld [vmem:[%s592 + $0x68] sm:%s585]
                  %621 = vst [vmem:[%s593 + $0x34] sm:%s585] %v620
                  %v622 = vld [vmem:[%s592 + $0x70] sm:%s585]
                  %623 = vst [vmem:[%s593 + $0x38] sm:%s585] %v622
                  %v624 = vld [vmem:[%s592 + $0x78] sm:%s585]
                  %625 = vst [vmem:[%s593 + $0x3c] sm:%s585] %v624
                  %v626 = vld [vmem:[%s592 + $0x80] sm:%s585]
                  %627 = vst [vmem:[%s593 + $0x40] sm:%s585] %v626
                  %v628 = vld [vmem:[%s592 + $0x88] sm:%s585]
                  %629 = vst [vmem:[%s593 + $0x44] sm:%s585] %v628
                  %v630 = vld [vmem:[%s592 + $0x90] sm:%s585]
                  %631 = vst [vmem:[%s593 + $0x48] sm:%s585] %v630
                  %v632 = vld [vmem:[%s592 + $0x98] sm:%s585]
                  %633 = vst [vmem:[%s593 + $0x4c] sm:%s585] %v632
                  %v634 = vld [vmem:[%s592 + $0xa0] sm:%s585]
                  %635 = vst [vmem:[%s593 + $0x50] sm:%s585] %v634
                  %v636 = vld [vmem:[%s592 + $0xa8] sm:%s585]
                  %637 = vst [vmem:[%s593 + $0x54] sm:%s585] %v636
                  %v638 = vld [vmem:[%s592 + $0xb0] sm:%s585]
                  %639 = vst [vmem:[%s593 + $0x58] sm:%s585] %v638
                  %v640 = vld [vmem:[%s592 + $0xb8] sm:%s585]
                  %641 = vst [vmem:[%s593 + $0x5c] sm:%s585] %v640
                  %v642 = vld [vmem:[%s592 + $0xc0] sm:%s585]
                  %643 = vst [vmem:[%s593 + $0x60] sm:%s585] %v642
                  %v644 = vld [vmem:[%s592 + $0xc8] sm:%s585]
                  %645 = vst [vmem:[%s593 + $0x64] sm:%s585] %v644
                  %v646 = vld [vmem:[%s592 + $0xd0] sm:%s585]
                  %647 = vst [vmem:[%s593 + $0x68] sm:%s585] %v646
                  %v648 = vld [vmem:[%s592 + $0xd8] sm:%s585]
                  %649 = vst [vmem:[%s593 + $0x6c] sm:%s585] %v648
                  %v650 = vld [vmem:[%s592 + $0xe0] sm:%s585]
                  %651 = vst [vmem:[%s593 + $0x70] sm:%s585] %v650
                  %v652 = vld [vmem:[%s592 + $0xe8] sm:%s585]
                  %653 = vst [vmem:[%s593 + $0x74] sm:%s585] %v652
                  %v654 = vld [vmem:[%s592 + $0xf0] sm:%s585]
                  %655 = vst [vmem:[%s593 + $0x78] sm:%s585] %v654
                  %v656 = vld [vmem:[%s592 + $0xf8] sm:%s585]
                  %657 = vst [vmem:[%s593 + $0x7c] sm:%s585] %v656
                $region100: #{graphsage_forward.11} parent=87 // loop_footer
                  %s591 = sadd.s32 1, %s587
                $region101: #{graphsage_forward.11} parent=87 // loop_footer_branch
                  %586 = sbr.rel target = $region97
                $region102: #{graphsage_forward.11} parent=87 // loop_exit
                  _
              $region88: #{graphsage_forward.11} parent=72 // pred_fallthru
                _
            $region73: #{graphsage_forward.11} parent=68 // pred_fallthru
              _
            // Predicated region
            $region74: #{graphsage_forward.11} parent=68 // pred_check
              _
            $region75: #{graphsage_forward.11} parent=68 // pred_check_branch
              %499 = sbr.rel (0) target = $region77
            $region76: #{graphsage_forward.11} parent=68 // pred_region
              %s501 = ssub.s32 16, 1
              loop: start=0, step=1, limit=1
              $region78: #{graphsage_forward.11} parent=76 // loop_pre_header
                _
              $region79: #{graphsage_forward.11} parent=76 // loop_header
                %s503 = sphi 0, %s507
                %p504 = scmp.ge.s32.totalorder %s503, 1
                %s508 = sphi %s493, %s493
                %s509 = sphi %s489, %s489
              $region80: #{graphsage_forward.11} parent=76 // loop_header_branch
                %506 = sbr.rel (%p504) target = $region84
              $region81: #{graphsage_forward.11} parent=76 // loop_body
                %v510 = vld [vmem:[%s508] sm:%s501]
                %511 = vst [vmem:[%s509] sm:%s501] %v510
                %v512 = vld [vmem:[%s508 + $0x8] sm:%s501]
                %513 = vst [vmem:[%s509 + $0x4] sm:%s501] %v512
                %v514 = vld [vmem:[%s508 + $0x10] sm:%s501]
                %515 = vst [vmem:[%s509 + $0x8] sm:%s501] %v514
                %v516 = vld [vmem:[%s508 + $0x18] sm:%s501]
                %517 = vst [vmem:[%s509 + $0xc] sm:%s501] %v516
                %v518 = vld [vmem:[%s508 + $0x20] sm:%s501]
                %519 = vst [vmem:[%s509 + $0x10] sm:%s501] %v518
                %v520 = vld [vmem:[%s508 + $0x28] sm:%s501]
                %521 = vst [vmem:[%s509 + $0x14] sm:%s501] %v520
                %v522 = vld [vmem:[%s508 + $0x30] sm:%s501]
                %523 = vst [vmem:[%s509 + $0x18] sm:%s501] %v522
                %v524 = vld [vmem:[%s508 + $0x38] sm:%s501]
                %525 = vst [vmem:[%s509 + $0x1c] sm:%s501] %v524
                %v526 = vld [vmem:[%s508 + $0x40] sm:%s501]
                %527 = vst [vmem:[%s509 + $0x20] sm:%s501] %v526
                %v528 = vld [vmem:[%s508 + $0x48] sm:%s501]
                %529 = vst [vmem:[%s509 + $0x24] sm:%s501] %v528
                %v530 = vld [vmem:[%s508 + $0x50] sm:%s501]
                %531 = vst [vmem:[%s509 + $0x28] sm:%s501] %v530
                %v532 = vld [vmem:[%s508 + $0x58] sm:%s501]
                %533 = vst [vmem:[%s509 + $0x2c] sm:%s501] %v532
                %v534 = vld [vmem:[%s508 + $0x60] sm:%s501]
                %535 = vst [vmem:[%s509 + $0x30] sm:%s501] %v534
                %v536 = vld [vmem:[%s508 + $0x68] sm:%s501]
                %537 = vst [vmem:[%s509 + $0x34] sm:%s501] %v536
                %v538 = vld [vmem:[%s508 + $0x70] sm:%s501]
                %539 = vst [vmem:[%s509 + $0x38] sm:%s501] %v538
                %v540 = vld [vmem:[%s508 + $0x78] sm:%s501]
                %541 = vst [vmem:[%s509 + $0x3c] sm:%s501] %v540
                %v542 = vld [vmem:[%s508 + $0x80] sm:%s501]
                %543 = vst [vmem:[%s509 + $0x40] sm:%s501] %v542
                %v544 = vld [vmem:[%s508 + $0x88] sm:%s501]
                %545 = vst [vmem:[%s509 + $0x44] sm:%s501] %v544
                %v546 = vld [vmem:[%s508 + $0x90] sm:%s501]
                %547 = vst [vmem:[%s509 + $0x48] sm:%s501] %v546
                %v548 = vld [vmem:[%s508 + $0x98] sm:%s501]
                %549 = vst [vmem:[%s509 + $0x4c] sm:%s501] %v548
                %v550 = vld [vmem:[%s508 + $0xa0] sm:%s501]
                %551 = vst [vmem:[%s509 + $0x50] sm:%s501] %v550
                %v552 = vld [vmem:[%s508 + $0xa8] sm:%s501]
                %553 = vst [vmem:[%s509 + $0x54] sm:%s501] %v552
                %v554 = vld [vmem:[%s508 + $0xb0] sm:%s501]
                %555 = vst [vmem:[%s509 + $0x58] sm:%s501] %v554
                %v556 = vld [vmem:[%s508 + $0xb8] sm:%s501]
                %557 = vst [vmem:[%s509 + $0x5c] sm:%s501] %v556
                %v558 = vld [vmem:[%s508 + $0xc0] sm:%s501]
                %559 = vst [vmem:[%s509 + $0x60] sm:%s501] %v558
                %v560 = vld [vmem:[%s508 + $0xc8] sm:%s501]
                %561 = vst [vmem:[%s509 + $0x64] sm:%s501] %v560
                %v562 = vld [vmem:[%s508 + $0xd0] sm:%s501]
                %563 = vst [vmem:[%s509 + $0x68] sm:%s501] %v562
                %v564 = vld [vmem:[%s508 + $0xd8] sm:%s501]
                %565 = vst [vmem:[%s509 + $0x6c] sm:%s501] %v564
                %v566 = vld [vmem:[%s508 + $0xe0] sm:%s501]
                %567 = vst [vmem:[%s509 + $0x70] sm:%s501] %v566
                %v568 = vld [vmem:[%s508 + $0xe8] sm:%s501]
                %569 = vst [vmem:[%s509 + $0x74] sm:%s501] %v568
                %v570 = vld [vmem:[%s508 + $0xf0] sm:%s501]
                %571 = vst [vmem:[%s509 + $0x78] sm:%s501] %v570
                %v572 = vld [vmem:[%s508 + $0xf8] sm:%s501]
                %573 = vst [vmem:[%s509 + $0x7c] sm:%s501] %v572
              $region82: #{graphsage_forward.11} parent=76 // loop_footer
                %s507 = sadd.s32 1, %s503
              $region83: #{graphsage_forward.11} parent=76 // loop_footer_branch
                %502 = sbr.rel target = $region79
              $region84: #{graphsage_forward.11} parent=76 // loop_exit
                _
            $region77: #{graphsage_forward.11} parent=68 // pred_fallthru
              _
          $region69: #{graphsage_forward.11} parent=64 // pred_fallthru
            _
          %658 = vnop
        $region65: #{graphsage_forward.11} parent=56 // pred_fallthru
          _
        // Predicated region
        $region103: #{graphsage_forward.11} parent=56 // pred_check
          %p659 = pneg %p120
        $region104: #{graphsage_forward.11} parent=56 // pred_check_branch
          %661 = sbr.rel (%p659) target = $region106
        $region105: #{graphsage_forward.11} parent=56 // pred_region
          %s662 = smul.u32 32, %s20
          %p663 = scmp.lt.s32.totalorder %s662, 63
          %s664 = scalar_select %p663, %s662, 63
          %s665 = smul.addr %s664, 8
          %s666 = scalar_lea.vmem %s3, %s665
          %s667 = smul.u32 32, %s20
        $region106: #{graphsage_forward.11} parent=56 // pred_fallthru
          _
      $region57: #{graphsage_forward.11} parent=5 // pred_fallthru
        _
      %p668 = scmp.le.s32.totalorder 1, %s13
      %p669 = scmp.lt.s32.totalorder %s13, 3
      %p670 = pnand %p668, %p669
      %p671 = pneg %p670
      // Predicated region
      $region107: #{graphsage_forward.11} parent=5 // pred_check
        _
      $region108: #{graphsage_forward.11} parent=5 // pred_check_branch
        %673 = sbr.rel (%p670) target = $region110
      $region109: #{graphsage_forward.11} parent=5 // pred_region
        %s674 = ssub.s32 %s13, 1
        // Predicated region
        $region111: #{graphsage_forward.11} parent=109 // pred_check
          %p675 = pneg %p74
        $region112: #{graphsage_forward.11} parent=109 // pred_check_branch
          %677 = sbr.rel (%p675) target = $region114
        $region113: #{graphsage_forward.11} parent=109 // pred_region
          _
        $region114: #{graphsage_forward.11} parent=109 // pred_fallthru
          _
        %s678 = sand.u32 %s87, 1
        %s679 = sand.u32 %s87, 1
        %s680 = smul.addr %s679, 128
        %s681 = scalar_lea.vmem [#allocation4], %s680
        // Predicated region
        $region115: #{graphsage_forward.11} parent=109 // pred_check
          %p682 = pneg %p100
        $region116: #{graphsage_forward.11} parent=109 // pred_check_branch
          %684 = sbr.rel (%p682) target = $region118
        $region117: #{graphsage_forward.11} parent=109 // pred_region
          _
        $region118: #{graphsage_forward.11} parent=109 // pred_fallthru
          _
        %s685 = smul.u32 8, %s22
        %s686 = smul.u32 4, %s23
        %p687 = scmp.lt.s32.totalorder %s685, 15
        %s688 = scalar_select %p687, %s685, 15
        %p689 = scmp.lt.s32.totalorder %s686, 3
        %s690 = scalar_select %p689, %s686, 3
        %s691 = smul.addr %s688, 4
        %s692 = sadd.s32 %s690, %s691
        %s693 = smul.addr %s692, 8
        %s694 = scalar_lea.vmem %s0, %s693
        %p695 = pneg %p53
        %p696 = pneg %p50
        %p697 = pneg %p74
        %p698 = pneg %p71
        %s699 = sand.u32 %s87, 1
        %s700 = sand.u32 %s87, 1
        %s701 = smul.addr %s700, 128
        %s702 = scalar_lea.vmem [#allocation4], %s701
        %p703 = pneg %p100
        %p704 = pneg %p97
        %s705 = smul.u32 32, %s22
        %p706 = scmp.lt.s32.totalorder %s705, 63
        %s707 = scalar_select %p706, %s705, 63
        %s708 = smul.addr %s707, 8
        %s709 = scalar_lea.vmem %s3, %s708
        %p710 = pneg %p126
        %p711 = pneg %p123
        %p712 = pneg %p152
        %p713 = pneg %p149
        %s714 = sand.u32 %s139, 1
        %s715 = scalar_lea.sflag [#allocation6], %s714
        %s716 = sand.u32 %s139, 1
        %s717 = smul.addr %s716, 256
        %s718 = scalar_lea.vmem [#allocation5], %s717
        %s719 = smul.u32 8, %s22
        %s720 = smul.u32 4, %s23
        %p721 = scmp.lt.s32.totalorder %s719, 15
        %s722 = scalar_select %p721, %s719, 15
        %p723 = scmp.lt.s32.totalorder %s720, 3
        %s724 = scalar_select %p723, %s720, 3
        %s725 = smul.addr %s722, 4
        %s726 = sadd.s32 %s724, %s725
        %s727 = smul.addr %s726, 8
        %s728 = scalar_lea.vmem %s0, %s727
        %s729 = smul.u32 8, %s22
        %s730 = smul.u32 4, %s23
        %s731 = smul.u32 32, %s22
        %s732 = smul.u32 32, %s22
        %p733 = scmp.lt.s32.totalorder %s732, 63
        %s734 = scalar_select %p733, %s732, 63
        %s735 = smul.addr %s734, 8
        %s736 = scalar_lea.vmem %s3, %s735
        %s737 = smul.u32 32, %s22
        %s738 = smul.u32 32, %s22
        %p740 = scmp.eq.s32.totalorder %s23, 0
        // Predicated region
        $region119: #{graphsage_forward.11} parent=109 // pred_check
          %p741 = pneg %p740
        $region120: #{graphsage_forward.11} parent=109 // pred_check_branch
          %743 = sbr.rel (%p741) target = $region122
        $region121: #{graphsage_forward.11} parent=109 // pred_region
          %744 = vst [vmem:[#allocation2] sm:$0xff] 0.0
          %745 = vst [vmem:[#allocation2 + $0x8] sm:$0xff] 0.0
          %746 = vst [vmem:[#allocation2 + $0x10] sm:$0xff] 0.0
          %747 = vst [vmem:[#allocation2 + $0x18] sm:$0xff] 0.0
          %748 = vst [vmem:[#allocation2 + $0x20] sm:$0xff] 0.0
          %749 = vst [vmem:[#allocation2 + $0x28] sm:$0xff] 0.0
          %750 = vst [vmem:[#allocation2 + $0x30] sm:$0xff] 0.0
          %751 = vst [vmem:[#allocation2 + $0x38] sm:$0xff] 0.0
          %752 = vst [vmem:[#allocation2 + $0x40] sm:$0xff] 0.0
          %753 = vst [vmem:[#allocation2 + $0x48] sm:$0xff] 0.0
          %754 = vst [vmem:[#allocation2 + $0x50] sm:$0xff] 0.0
          %755 = vst [vmem:[#allocation2 + $0x58] sm:$0xff] 0.0
          %756 = vst [vmem:[#allocation2 + $0x60] sm:$0xff] 0.0
          %757 = vst [vmem:[#allocation2 + $0x68] sm:$0xff] 0.0
          %758 = vst [vmem:[#allocation2 + $0x70] sm:$0xff] 0.0
          %759 = vst [vmem:[#allocation2 + $0x78] sm:$0xff] 0.0
          %760 = vst [vmem:[#allocation2 + $0x80] sm:$0xff] 0.0
          %761 = vst [vmem:[#allocation2 + $0x88] sm:$0xff] 0.0
          %762 = vst [vmem:[#allocation2 + $0x90] sm:$0xff] 0.0
          %763 = vst [vmem:[#allocation2 + $0x98] sm:$0xff] 0.0
          %764 = vst [vmem:[#allocation2 + $0xa0] sm:$0xff] 0.0
          %765 = vst [vmem:[#allocation2 + $0xa8] sm:$0xff] 0.0
          %766 = vst [vmem:[#allocation2 + $0xb0] sm:$0xff] 0.0
          %767 = vst [vmem:[#allocation2 + $0xb8] sm:$0xff] 0.0
          %768 = vst [vmem:[#allocation2 + $0xc0] sm:$0xff] 0.0
          %769 = vst [vmem:[#allocation2 + $0xc8] sm:$0xff] 0.0
          %770 = vst [vmem:[#allocation2 + $0xd0] sm:$0xff] 0.0
          %771 = vst [vmem:[#allocation2 + $0xd8] sm:$0xff] 0.0
          %772 = vst [vmem:[#allocation2 + $0xe0] sm:$0xff] 0.0
          %773 = vst [vmem:[#allocation2 + $0xe8] sm:$0xff] 0.0
          %774 = vst [vmem:[#allocation2 + $0xf0] sm:$0xff] 0.0
          %775 = vst [vmem:[#allocation2 + $0xf8] sm:$0xff] 0.0
        $region122: #{graphsage_forward.11} parent=109 // pred_fallthru
          _
        %v776 = vld [vmem:[%s728] sm:$0xff]
        %v777 = vld [vmem:[%s728 + $0x8] sm:$0xff]
        %v778 = vld [vmem:[%s728 + $0x10] sm:$0xff]
        %v779 = vld [vmem:[%s728 + $0x18] sm:$0xff]
        %v780 = vld [vmem:[%s728 + $0x20] sm:$0xff]
        %v781 = vld [vmem:[%s728 + $0x28] sm:$0xff]
        %v782 = vld [vmem:[%s728 + $0x30] sm:$0xff]
        %v783 = vld [vmem:[%s728 + $0x38] sm:$0xff]
        %v784 = vld [vmem:[%s728 + $0x40] sm:$0xff]
        %v785 = vld [vmem:[%s728 + $0x48] sm:$0xff]
        %v786 = vld [vmem:[%s728 + $0x50] sm:$0xff]
        %v787 = vld [vmem:[%s728 + $0x58] sm:$0xff]
        %v788 = vld [vmem:[%s728 + $0x60] sm:$0xff]
        %v789 = vld [vmem:[%s728 + $0x68] sm:$0xff]
        %v790 = vld [vmem:[%s728 + $0x70] sm:$0xff]
        %v791 = vld [vmem:[%s728 + $0x78] sm:$0xff]
        %v792 = vld [vmem:[%s728 + $0x80] sm:$0xff]
        %v793 = vld [vmem:[%s728 + $0x88] sm:$0xff]
        %v794 = vld [vmem:[%s728 + $0x90] sm:$0xff]
        %v795 = vld [vmem:[%s728 + $0x98] sm:$0xff]
        %v796 = vld [vmem:[%s728 + $0xa0] sm:$0xff]
        %v797 = vld [vmem:[%s728 + $0xa8] sm:$0xff]
        %v798 = vld [vmem:[%s728 + $0xb0] sm:$0xff]
        %v799 = vld [vmem:[%s728 + $0xb8] sm:$0xff]
        %v800 = vld [vmem:[%s728 + $0xc0] sm:$0xff]
        %v801 = vld [vmem:[%s728 + $0xc8] sm:$0xff]
        %v802 = vld [vmem:[%s728 + $0xd0] sm:$0xff]
        %v803 = vld [vmem:[%s728 + $0xd8] sm:$0xff]
        %v804 = vld [vmem:[%s728 + $0xe0] sm:$0xff]
        %v805 = vld [vmem:[%s728 + $0xe8] sm:$0xff]
        %v806 = vld [vmem:[%s728 + $0xf0] sm:$0xff]
        %v807 = vld [vmem:[%s728 + $0xf8] sm:$0xff]
        %v808 = vunpack.c.l.s8.bf16 %v776
        %v809 = vunpack.c.l.s8.bf16 %v777
        %v810 = vunpack.c.l.s8.bf16 %v778
        %v811 = vunpack.c.l.s8.bf16 %v779
        %v812 = vunpack.c.h.s8.bf16 %v776
        %v813 = vunpack.c.h.s8.bf16 %v777
        %v814 = vunpack.c.h.s8.bf16 %v778
        %v815 = vunpack.c.h.s8.bf16 %v779
        %v816 = vunpack.c.l.s8.bf16 %v780
        %v817 = vunpack.c.l.s8.bf16 %v781
        %v818 = vunpack.c.l.s8.bf16 %v782
        %v819 = vunpack.c.l.s8.bf16 %v783
        %v820 = vunpack.c.h.s8.bf16 %v780
        %v821 = vunpack.c.h.s8.bf16 %v781
        %v822 = vunpack.c.h.s8.bf16 %v782
        %v823 = vunpack.c.h.s8.bf16 %v783
        %v824 = vunpack.c.l.s8.bf16 %v784
        %v825 = vunpack.c.l.s8.bf16 %v785
        %v826 = vunpack.c.l.s8.bf16 %v786
        %v827 = vunpack.c.l.s8.bf16 %v787
        %v828 = vunpack.c.h.s8.bf16 %v784
        %v829 = vunpack.c.h.s8.bf16 %v785
        %v830 = vunpack.c.h.s8.bf16 %v786
        %v831 = vunpack.c.h.s8.bf16 %v787
        %v832 = vunpack.c.l.s8.bf16 %v788
        %v833 = vunpack.c.l.s8.bf16 %v789
        %v834 = vunpack.c.l.s8.bf16 %v790
        %v835 = vunpack.c.l.s8.bf16 %v791
        %v836 = vunpack.c.h.s8.bf16 %v788
        %v837 = vunpack.c.h.s8.bf16 %v789
        %v838 = vunpack.c.h.s8.bf16 %v790
        %v839 = vunpack.c.h.s8.bf16 %v791
        %v840 = vunpack.c.l.s8.bf16 %v792
        %v841 = vunpack.c.l.s8.bf16 %v793
        %v842 = vunpack.c.l.s8.bf16 %v794
        %v843 = vunpack.c.l.s8.bf16 %v795
        %v844 = vunpack.c.h.s8.bf16 %v792
        %v845 = vunpack.c.h.s8.bf16 %v793
        %v846 = vunpack.c.h.s8.bf16 %v794
        %v847 = vunpack.c.h.s8.bf16 %v795
        %v848 = vunpack.c.l.s8.bf16 %v796
        %v849 = vunpack.c.l.s8.bf16 %v797
        %v850 = vunpack.c.l.s8.bf16 %v798
        %v851 = vunpack.c.l.s8.bf16 %v799
        %v852 = vunpack.c.h.s8.bf16 %v796
        %v853 = vunpack.c.h.s8.bf16 %v797
        %v854 = vunpack.c.h.s8.bf16 %v798
        %v855 = vunpack.c.h.s8.bf16 %v799
        %v856 = vunpack.c.l.s8.bf16 %v800
        %v857 = vunpack.c.l.s8.bf16 %v801
        %v858 = vunpack.c.l.s8.bf16 %v802
        %v859 = vunpack.c.l.s8.bf16 %v803
        %v860 = vunpack.c.h.s8.bf16 %v800
        %v861 = vunpack.c.h.s8.bf16 %v801
        %v862 = vunpack.c.h.s8.bf16 %v802
        %v863 = vunpack.c.h.s8.bf16 %v803
        %v864 = vunpack.c.l.s8.bf16 %v804
        %v865 = vunpack.c.l.s8.bf16 %v805
        %v866 = vunpack.c.l.s8.bf16 %v806
        %v867 = vunpack.c.l.s8.bf16 %v807
        %v868 = vunpack.c.h.s8.bf16 %v804
        %v869 = vunpack.c.h.s8.bf16 %v805
        %v870 = vunpack.c.h.s8.bf16 %v806
        %v871 = vunpack.c.h.s8.bf16 %v807
        %s872 = smul.u32 %s23, 512
        %s873 = sshra.s32 %s872, 3
        %s874 = sand.u32 %s872, 7
        %s875 = smul.addr %s873, 4
        %s876 = scalar_lea.vmem [#allocation3], %s875
        %v877 = vld [vmem:[%s876] sm:$0xf]
        %v878 = vld [vmem:[%s876 + $0x4] sm:$0xf]
        %v879 = vld [vmem:[%s876 + $0x8] sm:$0xf]
        %v880 = vld [vmem:[%s876 + $0xc] sm:$0xf]
        %v881 = vld [vmem:[%s876 + $0x10] sm:$0xf]
        %v882 = vld [vmem:[%s876 + $0x14] sm:$0xf]
        %v883 = vld [vmem:[%s876 + $0x18] sm:$0xf]
        %v884 = vld [vmem:[%s876 + $0x1c] sm:$0xf]
        %v885 = vld [vmem:[%s876 + $0x20] sm:$0xf]
        %v886 = vld [vmem:[%s876 + $0x24] sm:$0xf]
        %v887 = vld [vmem:[%s876 + $0x28] sm:$0xf]
        %v888 = vld [vmem:[%s876 + $0x2c] sm:$0xf]
        %v889 = vld [vmem:[%s876 + $0x30] sm:$0xf]
        %v890 = vld [vmem:[%s876 + $0x34] sm:$0xf]
        %v891 = vld [vmem:[%s876 + $0x38] sm:$0xf]
        %v892 = vld [vmem:[%s876 + $0x3c] sm:$0xf]
        %v893 = vld [vmem:[%s876 + $0x40] sm:$0xf]
        %v894 = vld [vmem:[%s876 + $0x44] sm:$0xf]
        %v895 = vld [vmem:[%s876 + $0x48] sm:$0xf]
        %v896 = vld [vmem:[%s876 + $0x4c] sm:$0xf]
        %v897 = vld [vmem:[%s876 + $0x50] sm:$0xf]
        %v898 = vld [vmem:[%s876 + $0x54] sm:$0xf]
        %v899 = vld [vmem:[%s876 + $0x58] sm:$0xf]
        %v900 = vld [vmem:[%s876 + $0x5c] sm:$0xf]
        %v901 = vld [vmem:[%s876 + $0x60] sm:$0xf]
        %v902 = vld [vmem:[%s876 + $0x64] sm:$0xf]
        %v903 = vld [vmem:[%s876 + $0x68] sm:$0xf]
        %v904 = vld [vmem:[%s876 + $0x6c] sm:$0xf]
        %v905 = vld [vmem:[%s876 + $0x70] sm:$0xf]
        %v906 = vld [vmem:[%s876 + $0x74] sm:$0xf]
        %v907 = vld [vmem:[%s876 + $0x78] sm:$0xf]
        %v908 = vld [vmem:[%s876 + $0x7c] sm:$0xf]
        %v909 = vld [vmem:[%s876 + $0x80] sm:$0xf]
        %v910 = vld [vmem:[%s876 + $0x84] sm:$0xf]
        %v911 = vld [vmem:[%s876 + $0x88] sm:$0xf]
        %v912 = vld [vmem:[%s876 + $0x8c] sm:$0xf]
        %v913 = vld [vmem:[%s876 + $0x90] sm:$0xf]
        %v914 = vld [vmem:[%s876 + $0x94] sm:$0xf]
        %v915 = vld [vmem:[%s876 + $0x98] sm:$0xf]
        %v916 = vld [vmem:[%s876 + $0x9c] sm:$0xf]
        %v917 = vld [vmem:[%s876 + $0xa0] sm:$0xf]
        %v918 = vld [vmem:[%s876 + $0xa4] sm:$0xf]
        %v919 = vld [vmem:[%s876 + $0xa8] sm:$0xf]
        %v920 = vld [vmem:[%s876 + $0xac] sm:$0xf]
        %v921 = vld [vmem:[%s876 + $0xb0] sm:$0xf]
        %v922 = vld [vmem:[%s876 + $0xb4] sm:$0xf]
        %v923 = vld [vmem:[%s876 + $0xb8] sm:$0xf]
        %v924 = vld [vmem:[%s876 + $0xbc] sm:$0xf]
        %v925 = vld [vmem:[%s876 + $0xc0] sm:$0xf]
        %v926 = vld [vmem:[%s876 + $0xc4] sm:$0xf]
        %v927 = vld [vmem:[%s876 + $0xc8] sm:$0xf]
        %v928 = vld [vmem:[%s876 + $0xcc] sm:$0xf]
        %v929 = vld [vmem:[%s876 + $0xd0] sm:$0xf]
        %v930 = vld [vmem:[%s876 + $0xd4] sm:$0xf]
        %v931 = vld [vmem:[%s876 + $0xd8] sm:$0xf]
        %v932 = vld [vmem:[%s876 + $0xdc] sm:$0xf]
        %v933 = vld [vmem:[%s876 + $0xe0] sm:$0xf]
        %v934 = vld [vmem:[%s876 + $0xe4] sm:$0xf]
        %v935 = vld [vmem:[%s876 + $0xe8] sm:$0xf]
        %v936 = vld [vmem:[%s876 + $0xec] sm:$0xf]
        %v937 = vld [vmem:[%s876 + $0xf0] sm:$0xf]
        %v938 = vld [vmem:[%s876 + $0xf4] sm:$0xf]
        %v939 = vld [vmem:[%s876 + $0xf8] sm:$0xf]
        %v940 = vld [vmem:[%s876 + $0xfc] sm:$0xf]
        %v941 = vld [vmem:[#allocation2] sm:$0xff]
        %v942 = vld [vmem:[#allocation2 + $0x8] sm:$0xff]
        %v943 = vld [vmem:[#allocation2 + $0x10] sm:$0xff]
        %v944 = vld [vmem:[#allocation2 + $0x18] sm:$0xff]
        %v945 = vld [vmem:[#allocation2 + $0x20] sm:$0xff]
        %v946 = vld [vmem:[#allocation2 + $0x28] sm:$0xff]
        %v947 = vld [vmem:[#allocation2 + $0x30] sm:$0xff]
        %v948 = vld [vmem:[#allocation2 + $0x38] sm:$0xff]
        %v949 = vld [vmem:[#allocation2 + $0x40] sm:$0xff]
        %v950 = vld [vmem:[#allocation2 + $0x48] sm:$0xff]
        %v951 = vld [vmem:[#allocation2 + $0x50] sm:$0xff]
        %v952 = vld [vmem:[#allocation2 + $0x58] sm:$0xff]
        %v953 = vld [vmem:[#allocation2 + $0x60] sm:$0xff]
        %v954 = vld [vmem:[#allocation2 + $0x68] sm:$0xff]
        %v955 = vld [vmem:[#allocation2 + $0x70] sm:$0xff]
        %v956 = vld [vmem:[#allocation2 + $0x78] sm:$0xff]
        %v957 = vld [vmem:[#allocation2 + $0x80] sm:$0xff]
        %v958 = vld [vmem:[#allocation2 + $0x88] sm:$0xff]
        %v959 = vld [vmem:[#allocation2 + $0x90] sm:$0xff]
        %v960 = vld [vmem:[#allocation2 + $0x98] sm:$0xff]
        %v961 = vld [vmem:[#allocation2 + $0xa0] sm:$0xff]
        %v962 = vld [vmem:[#allocation2 + $0xa8] sm:$0xff]
        %v963 = vld [vmem:[#allocation2 + $0xb0] sm:$0xff]
        %v964 = vld [vmem:[#allocation2 + $0xb8] sm:$0xff]
        %v965 = vld [vmem:[#allocation2 + $0xc0] sm:$0xff]
        %v966 = vld [vmem:[#allocation2 + $0xc8] sm:$0xff]
        %v967 = vld [vmem:[#allocation2 + $0xd0] sm:$0xff]
        %v968 = vld [vmem:[#allocation2 + $0xd8] sm:$0xff]
        %v969 = vld [vmem:[#allocation2 + $0xe0] sm:$0xff]
        %v970 = vld [vmem:[#allocation2 + $0xe8] sm:$0xff]
        %v971 = vld [vmem:[#allocation2 + $0xf0] sm:$0xff]
        %v972 = vld [vmem:[#allocation2 + $0xf8] sm:$0xff]
        %v1037 = vunpack.c.l.b16 %v877
        %v1038 = vunpack.c.l.b16 %v878
        %v1039 = vunpack.c.l.b16 %v879
        %v1040 = vunpack.c.l.b16 %v880
        %v1041 = vunpack.c.l.b16 %v881
        %v1042 = vunpack.c.l.b16 %v882
        %v1043 = vunpack.c.l.b16 %v883
        %v1044 = vunpack.c.l.b16 %v884
        %v1045 = vunpack.c.l.b16 %v885
        %v1046 = vunpack.c.l.b16 %v886
        %v1047 = vunpack.c.l.b16 %v887
        %v1048 = vunpack.c.l.b16 %v888
        %v1049 = vunpack.c.l.b16 %v889
        %v1050 = vunpack.c.l.b16 %v890
        %v1051 = vunpack.c.l.b16 %v891
        %v1052 = vunpack.c.l.b16 %v892
        %v1053 = vunpack.c.l.b16 %v893
        %v1054 = vunpack.c.l.b16 %v894
        %v1055 = vunpack.c.l.b16 %v895
        %v1056 = vunpack.c.l.b16 %v896
        %v1057 = vunpack.c.l.b16 %v897
        %v1058 = vunpack.c.l.b16 %v898
        %v1059 = vunpack.c.l.b16 %v899
        %v1060 = vunpack.c.l.b16 %v900
        %v1061 = vunpack.c.l.b16 %v901
        %v1062 = vunpack.c.l.b16 %v902
        %v1063 = vunpack.c.l.b16 %v903
        %v1064 = vunpack.c.l.b16 %v904
        %v1065 = vunpack.c.l.b16 %v905
        %v1066 = vunpack.c.l.b16 %v906
        %v1067 = vunpack.c.l.b16 %v907
        %v1068 = vunpack.c.l.b16 %v908
        %v1069 = vunpack.c.l.b16 %v909
        %v1070 = vunpack.c.l.b16 %v910
        %v1071 = vunpack.c.l.b16 %v911
        %v1072 = vunpack.c.l.b16 %v912
        %v1073 = vunpack.c.l.b16 %v913
        %v1074 = vunpack.c.l.b16 %v914
        %v1075 = vunpack.c.l.b16 %v915
        %v1076 = vunpack.c.l.b16 %v916
        %v1077 = vunpack.c.l.b16 %v917
        %v1078 = vunpack.c.l.b16 %v918
        %v1079 = vunpack.c.l.b16 %v919
        %v1080 = vunpack.c.l.b16 %v920
        %v1081 = vunpack.c.l.b16 %v921
        %v1082 = vunpack.c.l.b16 %v922
        %v1083 = vunpack.c.l.b16 %v923
        %v1084 = vunpack.c.l.b16 %v924
        %v1085 = vunpack.c.l.b16 %v925
        %v1086 = vunpack.c.l.b16 %v926
        %v1087 = vunpack.c.l.b16 %v927
        %v1088 = vunpack.c.l.b16 %v928
        %v1089 = vunpack.c.l.b16 %v929
        %v1090 = vunpack.c.l.b16 %v930
        %v1091 = vunpack.c.l.b16 %v931
        %v1092 = vunpack.c.l.b16 %v932
        %v1093 = vunpack.c.l.b16 %v933
        %v1094 = vunpack.c.l.b16 %v934
        %v1095 = vunpack.c.l.b16 %v935
        %v1096 = vunpack.c.l.b16 %v936
        %v1097 = vunpack.c.l.b16 %v937
        %v1098 = vunpack.c.l.b16 %v938
        %v1099 = vunpack.c.l.b16 %v939
        %v1100 = vunpack.c.l.b16 %v940
        %v1101 = vpack.c.b16 %v1038, %v1037
        %v1102 = vpack.c.b16 %v1040, %v1039
        %v1103 = vpack.c.b16 %v1042, %v1041
        %v1104 = vpack.c.b16 %v1044, %v1043
        %v1105 = vpack.c.b16 %v1046, %v1045
        %v1106 = vpack.c.b16 %v1048, %v1047
        %v1107 = vpack.c.b16 %v1050, %v1049
        %v1108 = vpack.c.b16 %v1052, %v1051
        %v1109 = vpack.c.b16 %v1054, %v1053
        %v1110 = vpack.c.b16 %v1056, %v1055
        %v1111 = vpack.c.b16 %v1058, %v1057
        %v1112 = vpack.c.b16 %v1060, %v1059
        %v1113 = vpack.c.b16 %v1062, %v1061
        %v1114 = vpack.c.b16 %v1064, %v1063
        %v1115 = vpack.c.b16 %v1066, %v1065
        %v1116 = vpack.c.b16 %v1068, %v1067
        %v1117 = vpack.c.b16 %v1070, %v1069
        %v1118 = vpack.c.b16 %v1072, %v1071
        %v1119 = vpack.c.b16 %v1074, %v1073
        %v1120 = vpack.c.b16 %v1076, %v1075
        %v1121 = vpack.c.b16 %v1078, %v1077
        %v1122 = vpack.c.b16 %v1080, %v1079
        %v1123 = vpack.c.b16 %v1082, %v1081
        %v1124 = vpack.c.b16 %v1084, %v1083
        %v1125 = vpack.c.b16 %v1086, %v1085
        %v1126 = vpack.c.b16 %v1088, %v1087
        %v1127 = vpack.c.b16 %v1090, %v1089
        %v1128 = vpack.c.b16 %v1092, %v1091
        %v1129 = vpack.c.b16 %v1094, %v1093
        %v1130 = vpack.c.b16 %v1096, %v1095
        %v1131 = vpack.c.b16 %v1098, %v1097
        %v1132 = vpack.c.b16 %v1100, %v1099
        %1165 = vmatprep.subr.bf16.mxu0 0
        %1166 = vmatpush1.bf16.msra.mxu0 %v1108
        %1167 = vmatprep.subr.bf16.mxu0 0
        %1168 = vmatpush1.bf16.msra.mxu0 %v1107
        %1169 = vmatprep.subr.bf16.mxu0 0
        %1170 = vmatpush1.bf16.msra.mxu0 %v1106
        %1171 = vmatprep.subr.bf16.mxu0 0
        %1172 = vmatpush1.bf16.msra.mxu0 %v1105
        %1173 = vmatprep.subr.bf16.mxu0 0
        %1174 = vmatpush1.bf16.msra.mxu0 %v1104
        %1175 = vmatprep.subr.bf16.mxu0 0
        %1176 = vmatpush1.bf16.msra.mxu0 %v1103
        %1177 = vmatprep.subr.bf16.mxu0 0
        %1178 = vmatpush1.bf16.msra.mxu0 %v1102
        %1179 = vmatprep.subr.bf16.mxu0 0
        %1180 = vmatpush1.bf16.msra.mxu0 %v1101
        %1181 = vmatprep.subr.bf16.mxu0 0
        %1182 = vmatpush2.bf16.msra.mxu0 %v1116
        %1183 = vmatprep.subr.bf16.mxu0 0
        %1184 = vmatpush2.bf16.msra.mxu0 %v1115
        %1185 = vmatprep.subr.bf16.mxu0 0
        %1186 = vmatpush2.bf16.msra.mxu0 %v1114
        %1187 = vmatprep.subr.bf16.mxu0 0
        %1188 = vmatpush2.bf16.msra.mxu0 %v1113
        %1189 = vmatprep.subr.bf16.mxu0 0
        %1190 = vmatpush2.bf16.msra.mxu0 %v1112
        %1191 = vmatprep.subr.bf16.mxu0 0
        %1192 = vmatpush2.bf16.msra.mxu0 %v1111
        %1193 = vmatprep.subr.bf16.mxu0 0
        %1194 = vmatpush2.bf16.msra.mxu0 %v1110
        %1195 = vmatprep.subr.bf16.mxu0 0
        %1196 = vmatpush2.bf16.msra.mxu0 %v1109
        %1197 = vmatprep.mubr.bf16.mxu0 %v809
        %1198 = vmatmul.mubr.bf16.gmra.mxu0 %v808
        %v1199 = vpop.f32.mrf.mxu0
        %v1200 = vadd.f32 0.0, %v1199
        %v1201 = vpop.f32.mrf.mxu0
        %v1202 = vpop.f32.mrf.mxu0
        %v1203 = vadd.f32 0.0, %v1202
        %v1204 = vpop.f32.mrf.mxu0
        %1205 = vmatprep.mubr.bf16.mxu0 %v813
        %1206 = vmatmul.mubr.bf16.gmra.mxu0 %v812
        %v1207 = vpop.f32.mrf.mxu0
        %v1208 = vadd.f32 0.0, %v1207
        %v1209 = vpop.f32.mrf.mxu0
        %v1210 = vpop.f32.mrf.mxu0
        %v1211 = vadd.f32 0.0, %v1210
        %v1212 = vpop.f32.mrf.mxu0
        %1213 = vmatprep.mubr.bf16.mxu0 %v817
        %1214 = vmatmul.mubr.bf16.gmra.mxu0 %v816
        %v1215 = vpop.f32.mrf.mxu0
        %v1216 = vadd.f32 0.0, %v1215
        %v1217 = vpop.f32.mrf.mxu0
        %v1218 = vpop.f32.mrf.mxu0
        %v1219 = vadd.f32 0.0, %v1218
        %v1220 = vpop.f32.mrf.mxu0
        %1221 = vmatprep.mubr.bf16.mxu0 %v821
        %1222 = vmatmul.mubr.bf16.gmra.mxu0 %v820
        %v1223 = vpop.f32.mrf.mxu0
        %v1224 = vadd.f32 0.0, %v1223
        %v1225 = vpop.f32.mrf.mxu0
        %v1226 = vpop.f32.mrf.mxu0
        %v1227 = vadd.f32 0.0, %v1226
        %v1228 = vpop.f32.mrf.mxu0
        %1229 = vmatprep.mubr.bf16.mxu0 %v825
        %1230 = vmatmul.mubr.bf16.gmra.mxu0 %v824
        %v1231 = vpop.f32.mrf.mxu0
        %v1232 = vadd.f32 0.0, %v1231
        %v1233 = vpop.f32.mrf.mxu0
        %v1234 = vpop.f32.mrf.mxu0
        %v1235 = vadd.f32 0.0, %v1234
        %v1236 = vpop.f32.mrf.mxu0
        %1237 = vmatprep.mubr.bf16.mxu0 %v829
        %1238 = vmatmul.mubr.bf16.gmra.mxu0 %v828
        %v1239 = vpop.f32.mrf.mxu0
        %v1240 = vadd.f32 0.0, %v1239
        %v1241 = vpop.f32.mrf.mxu0
        %v1242 = vpop.f32.mrf.mxu0
        %v1243 = vadd.f32 0.0, %v1242
        %v1244 = vpop.f32.mrf.mxu0
        %1245 = vmatprep.mubr.bf16.mxu0 %v833
        %1246 = vmatmul.mubr.bf16.gmra.mxu0 %v832
        %v1247 = vpop.f32.mrf.mxu0
        %v1248 = vadd.f32 0.0, %v1247
        %v1249 = vpop.f32.mrf.mxu0
        %v1250 = vpop.f32.mrf.mxu0
        %v1251 = vadd.f32 0.0, %v1250
        %v1252 = vpop.f32.mrf.mxu0
        %1253 = vmatprep.mubr.bf16.mxu0 %v837
        %1254 = vmatmul.mubr.bf16.gmra.mxu0 %v836
        %v1255 = vpop.f32.mrf.mxu0
        %v1256 = vadd.f32 0.0, %v1255
        %v1257 = vpop.f32.mrf.mxu0
        %v1258 = vpop.f32.mrf.mxu0
        %v1259 = vadd.f32 0.0, %v1258
        %v1260 = vpop.f32.mrf.mxu0
        %1261 = vmatprep.mubr.bf16.mxu0 %v841
        %1262 = vmatmul.mubr.bf16.gmra.mxu0 %v840
        %v1263 = vpop.f32.mrf.mxu0
        %v1264 = vadd.f32 0.0, %v1263
        %v1265 = vpop.f32.mrf.mxu0
        %v1266 = vpop.f32.mrf.mxu0
        %v1267 = vadd.f32 0.0, %v1266
        %v1268 = vpop.f32.mrf.mxu0
        %1269 = vmatprep.mubr.bf16.mxu0 %v845
        %1270 = vmatmul.mubr.bf16.gmra.mxu0 %v844
        %v1271 = vpop.f32.mrf.mxu0
        %v1272 = vadd.f32 0.0, %v1271
        %v1273 = vpop.f32.mrf.mxu0
        %v1274 = vpop.f32.mrf.mxu0
        %v1275 = vadd.f32 0.0, %v1274
        %v1276 = vpop.f32.mrf.mxu0
        %1277 = vmatprep.mubr.bf16.mxu0 %v849
        %1278 = vmatmul.mubr.bf16.gmra.mxu0 %v848
        %v1279 = vpop.f32.mrf.mxu0
        %v1280 = vadd.f32 0.0, %v1279
        %v1281 = vpop.f32.mrf.mxu0
        %v1282 = vpop.f32.mrf.mxu0
        %v1283 = vadd.f32 0.0, %v1282
        %v1284 = vpop.f32.mrf.mxu0
        %1285 = vmatprep.mubr.bf16.mxu0 %v853
        %1286 = vmatmul.mubr.bf16.gmra.mxu0 %v852
        %v1287 = vpop.f32.mrf.mxu0
        %v1288 = vadd.f32 0.0, %v1287
        %v1289 = vpop.f32.mrf.mxu0
        %v1290 = vpop.f32.mrf.mxu0
        %v1291 = vadd.f32 0.0, %v1290
        %v1292 = vpop.f32.mrf.mxu0
        %1293 = vmatprep.mubr.bf16.mxu0 %v857
        %1294 = vmatmul.mubr.bf16.gmra.mxu0 %v856
        %v1295 = vpop.f32.mrf.mxu0
        %v1296 = vadd.f32 0.0, %v1295
        %v1297 = vpop.f32.mrf.mxu0
        %v1298 = vpop.f32.mrf.mxu0
        %v1299 = vadd.f32 0.0, %v1298
        %v1300 = vpop.f32.mrf.mxu0
        %1301 = vmatprep.mubr.bf16.mxu0 %v861
        %1302 = vmatmul.mubr.bf16.gmra.mxu0 %v860
        %v1303 = vpop.f32.mrf.mxu0
        %v1304 = vadd.f32 0.0, %v1303
        %v1305 = vpop.f32.mrf.mxu0
        %v1306 = vpop.f32.mrf.mxu0
        %v1307 = vadd.f32 0.0, %v1306
        %v1308 = vpop.f32.mrf.mxu0
        %1309 = vmatprep.mubr.bf16.mxu0 %v865
        %1310 = vmatmul.mubr.bf16.gmra.mxu0 %v864
        %v1311 = vpop.f32.mrf.mxu0
        %v1312 = vadd.f32 0.0, %v1311
        %v1313 = vpop.f32.mrf.mxu0
        %v1314 = vpop.f32.mrf.mxu0
        %v1315 = vadd.f32 0.0, %v1314
        %v1316 = vpop.f32.mrf.mxu0
        %1317 = vmatprep.mubr.bf16.mxu0 %v869
        %1318 = vmatmul.mubr.bf16.gmra.mxu0 %v868
        %v1319 = vpop.f32.mrf.mxu0
        %v1320 = vadd.f32 0.0, %v1319
        %v1321 = vpop.f32.mrf.mxu0
        %v1322 = vpop.f32.mrf.mxu0
        %v1323 = vadd.f32 0.0, %v1322
        %v1324 = vpop.f32.mrf.mxu0
        %1325 = vdwg.mxu0
        %1326 = vmatprep.subr.bf16.mxu0 0
        %1327 = vmatpush1.bf16.msra.mxu0 %v1124
        %1328 = vmatprep.subr.bf16.mxu0 0
        %1329 = vmatpush1.bf16.msra.mxu0 %v1123
        %1330 = vmatprep.subr.bf16.mxu0 0
        %1331 = vmatpush1.bf16.msra.mxu0 %v1122
        %1332 = vmatprep.subr.bf16.mxu0 0
        %1333 = vmatpush1.bf16.msra.mxu0 %v1121
        %1334 = vmatprep.subr.bf16.mxu0 0
        %1335 = vmatpush1.bf16.msra.mxu0 %v1120
        %1336 = vmatprep.subr.bf16.mxu0 0
        %1337 = vmatpush1.bf16.msra.mxu0 %v1119
        %1338 = vmatprep.subr.bf16.mxu0 0
        %1339 = vmatpush1.bf16.msra.mxu0 %v1118
        %1340 = vmatprep.subr.bf16.mxu0 0
        %1341 = vmatpush1.bf16.msra.mxu0 %v1117
        %1342 = vmatprep.subr.bf16.mxu0 0
        %1343 = vmatpush2.bf16.msra.mxu0 %v1132
        %1344 = vmatprep.subr.bf16.mxu0 0
        %1345 = vmatpush2.bf16.msra.mxu0 %v1131
        %1346 = vmatprep.subr.bf16.mxu0 0
        %1347 = vmatpush2.bf16.msra.mxu0 %v1130
        %1348 = vmatprep.subr.bf16.mxu0 0
        %1349 = vmatpush2.bf16.msra.mxu0 %v1129
        %1350 = vmatprep.subr.bf16.mxu0 0
        %1351 = vmatpush2.bf16.msra.mxu0 %v1128
        %1352 = vmatprep.subr.bf16.mxu0 0
        %1353 = vmatpush2.bf16.msra.mxu0 %v1127
        %1354 = vmatprep.subr.bf16.mxu0 0
        %1355 = vmatpush2.bf16.msra.mxu0 %v1126
        %1356 = vmatprep.subr.bf16.mxu0 0
        %1357 = vmatpush2.bf16.msra.mxu0 %v1125
        %1358 = vmatprep.mubr.bf16.mxu0 %v811
        %1359 = vmatmul.mubr.bf16.gmra.mxu0 %v810
        %v1360 = vpop.f32.mrf.mxu0
        %v1361 = vadd.f32 %v1200, %v1360
        %v1362 = vpop.f32.mrf.mxu0
        %v1363 = vpop.f32.mrf.mxu0
        %v1364 = vadd.f32 %v1203, %v1363
        %v1365 = vpop.f32.mrf.mxu0
        %1366 = vmatprep.mubr.bf16.mxu0 %v815
        %1367 = vmatmul.mubr.bf16.gmra.mxu0 %v814
        %v1368 = vpop.f32.mrf.mxu0
        %v1369 = vadd.f32 %v1208, %v1368
        %v1370 = vpop.f32.mrf.mxu0
        %v1371 = vpop.f32.mrf.mxu0
        %v1372 = vadd.f32 %v1211, %v1371
        %v1373 = vpop.f32.mrf.mxu0
        %1374 = vmatprep.mubr.bf16.mxu0 %v819
        %1375 = vmatmul.mubr.bf16.gmra.mxu0 %v818
        %v1376 = vpop.f32.mrf.mxu0
        %v1377 = vadd.f32 %v1216, %v1376
        %v1378 = vpop.f32.mrf.mxu0
        %v1379 = vpop.f32.mrf.mxu0
        %v1380 = vadd.f32 %v1219, %v1379
        %v1381 = vpop.f32.mrf.mxu0
        %1382 = vmatprep.mubr.bf16.mxu0 %v823
        %1383 = vmatmul.mubr.bf16.gmra.mxu0 %v822
        %v1384 = vpop.f32.mrf.mxu0
        %v1385 = vadd.f32 %v1224, %v1384
        %v1386 = vpop.f32.mrf.mxu0
        %v1387 = vpop.f32.mrf.mxu0
        %v1388 = vadd.f32 %v1227, %v1387
        %v1389 = vpop.f32.mrf.mxu0
        %1390 = vmatprep.mubr.bf16.mxu0 %v827
        %1391 = vmatmul.mubr.bf16.gmra.mxu0 %v826
        %v1392 = vpop.f32.mrf.mxu0
        %v1393 = vadd.f32 %v1232, %v1392
        %v1394 = vpop.f32.mrf.mxu0
        %v1395 = vpop.f32.mrf.mxu0
        %v1396 = vadd.f32 %v1235, %v1395
        %v1397 = vpop.f32.mrf.mxu0
        %1398 = vmatprep.mubr.bf16.mxu0 %v831
        %1399 = vmatmul.mubr.bf16.gmra.mxu0 %v830
        %v1400 = vpop.f32.mrf.mxu0
        %v1401 = vadd.f32 %v1240, %v1400
        %v1402 = vpop.f32.mrf.mxu0
        %v1403 = vpop.f32.mrf.mxu0
        %v1404 = vadd.f32 %v1243, %v1403
        %v1405 = vpop.f32.mrf.mxu0
        %1406 = vmatprep.mubr.bf16.mxu0 %v835
        %1407 = vmatmul.mubr.bf16.gmra.mxu0 %v834
        %v1408 = vpop.f32.mrf.mxu0
        %v1409 = vadd.f32 %v1248, %v1408
        %v1410 = vpop.f32.mrf.mxu0
        %v1411 = vpop.f32.mrf.mxu0
        %v1412 = vadd.f32 %v1251, %v1411
        %v1413 = vpop.f32.mrf.mxu0
        %1414 = vmatprep.mubr.bf16.mxu0 %v839
        %1415 = vmatmul.mubr.bf16.gmra.mxu0 %v838
        %v1416 = vpop.f32.mrf.mxu0
        %v1417 = vadd.f32 %v1256, %v1416
        %v1418 = vpop.f32.mrf.mxu0
        %v1419 = vpop.f32.mrf.mxu0
        %v1420 = vadd.f32 %v1259, %v1419
        %v1421 = vpop.f32.mrf.mxu0
        %1422 = vmatprep.mubr.bf16.mxu0 %v843
        %1423 = vmatmul.mubr.bf16.gmra.mxu0 %v842
        %v1424 = vpop.f32.mrf.mxu0
        %v1425 = vadd.f32 %v1264, %v1424
        %v1426 = vpop.f32.mrf.mxu0
        %v1427 = vpop.f32.mrf.mxu0
        %v1428 = vadd.f32 %v1267, %v1427
        %v1429 = vpop.f32.mrf.mxu0
        %1430 = vmatprep.mubr.bf16.mxu0 %v847
        %1431 = vmatmul.mubr.bf16.gmra.mxu0 %v846
        %v1432 = vpop.f32.mrf.mxu0
        %v1433 = vadd.f32 %v1272, %v1432
        %v1434 = vpop.f32.mrf.mxu0
        %v1435 = vpop.f32.mrf.mxu0
        %v1436 = vadd.f32 %v1275, %v1435
        %v1437 = vpop.f32.mrf.mxu0
        %1438 = vmatprep.mubr.bf16.mxu0 %v851
        %1439 = vmatmul.mubr.bf16.gmra.mxu0 %v850
        %v1440 = vpop.f32.mrf.mxu0
        %v1441 = vadd.f32 %v1280, %v1440
        %v1442 = vpop.f32.mrf.mxu0
        %v1443 = vpop.f32.mrf.mxu0
        %v1444 = vadd.f32 %v1283, %v1443
        %v1445 = vpop.f32.mrf.mxu0
        %1446 = vmatprep.mubr.bf16.mxu0 %v855
        %1447 = vmatmul.mubr.bf16.gmra.mxu0 %v854
        %v1448 = vpop.f32.mrf.mxu0
        %v1449 = vadd.f32 %v1288, %v1448
        %v1450 = vpop.f32.mrf.mxu0
        %v1451 = vpop.f32.mrf.mxu0
        %v1452 = vadd.f32 %v1291, %v1451
        %v1453 = vpop.f32.mrf.mxu0
        %1454 = vmatprep.mubr.bf16.mxu0 %v859
        %1455 = vmatmul.mubr.bf16.gmra.mxu0 %v858
        %v1456 = vpop.f32.mrf.mxu0
        %v1457 = vadd.f32 %v1296, %v1456
        %v1458 = vpop.f32.mrf.mxu0
        %v1459 = vpop.f32.mrf.mxu0
        %v1460 = vadd.f32 %v1299, %v1459
        %v1461 = vpop.f32.mrf.mxu0
        %1462 = vmatprep.mubr.bf16.mxu0 %v863
        %1463 = vmatmul.mubr.bf16.gmra.mxu0 %v862
        %v1464 = vpop.f32.mrf.mxu0
        %v1465 = vadd.f32 %v1304, %v1464
        %v1466 = vpop.f32.mrf.mxu0
        %v1467 = vpop.f32.mrf.mxu0
        %v1468 = vadd.f32 %v1307, %v1467
        %v1469 = vpop.f32.mrf.mxu0
        %1470 = vmatprep.mubr.bf16.mxu0 %v867
        %1471 = vmatmul.mubr.bf16.gmra.mxu0 %v866
        %v1472 = vpop.f32.mrf.mxu0
        %v1473 = vadd.f32 %v1312, %v1472
        %v1474 = vpop.f32.mrf.mxu0
        %v1475 = vpop.f32.mrf.mxu0
        %v1476 = vadd.f32 %v1315, %v1475
        %v1477 = vpop.f32.mrf.mxu0
        %1478 = vmatprep.mubr.bf16.mxu0 %v871
        %1479 = vmatmul.mubr.bf16.gmra.mxu0 %v870
        %v1480 = vpop.f32.mrf.mxu0
        %v1481 = vadd.f32 %v1320, %v1480
        %v1482 = vpop.f32.mrf.mxu0
        %v1483 = vpop.f32.mrf.mxu0
        %v1484 = vadd.f32 %v1323, %v1483
        %v1485 = vpop.f32.mrf.mxu0
        %1486 = vdwg.mxu0
        %v1487 = vadd.f32 %v941, %v1361
        %v1488 = vadd.f32 %v942, %v1364
        %v1489 = vadd.f32 %v943, %v1369
        %v1490 = vadd.f32 %v944, %v1372
        %v1491 = vadd.f32 %v945, %v1377
        %v1492 = vadd.f32 %v946, %v1380
        %v1493 = vadd.f32 %v947, %v1385
        %v1494 = vadd.f32 %v948, %v1388
        %v1495 = vadd.f32 %v949, %v1393
        %v1496 = vadd.f32 %v950, %v1396
        %v1497 = vadd.f32 %v951, %v1401
        %v1498 = vadd.f32 %v952, %v1404
        %v1499 = vadd.f32 %v953, %v1409
        %v1500 = vadd.f32 %v954, %v1412
        %v1501 = vadd.f32 %v955, %v1417
        %v1502 = vadd.f32 %v956, %v1420
        %v1503 = vadd.f32 %v957, %v1425
        %v1504 = vadd.f32 %v958, %v1428
        %v1505 = vadd.f32 %v959, %v1433
        %v1506 = vadd.f32 %v960, %v1436
        %v1507 = vadd.f32 %v961, %v1441
        %v1508 = vadd.f32 %v962, %v1444
        %v1509 = vadd.f32 %v963, %v1449
        %v1510 = vadd.f32 %v964, %v1452
        %v1511 = vadd.f32 %v965, %v1457
        %v1512 = vadd.f32 %v966, %v1460
        %v1513 = vadd.f32 %v967, %v1465
        %v1514 = vadd.f32 %v968, %v1468
        %v1515 = vadd.f32 %v969, %v1473
        %v1516 = vadd.f32 %v970, %v1476
        %v1517 = vadd.f32 %v971, %v1481
        %v1518 = vadd.f32 %v972, %v1484
        %1519 = vst [vmem:[#allocation2] sm:$0xff] %v1487
        %1520 = vst [vmem:[#allocation2 + $0x8] sm:$0xff] %v1488
        %1521 = vst [vmem:[#allocation2 + $0x10] sm:$0xff] %v1489
        %1522 = vst [vmem:[#allocation2 + $0x18] sm:$0xff] %v1490
        %1523 = vst [vmem:[#allocation2 + $0x20] sm:$0xff] %v1491
        %1524 = vst [vmem:[#allocation2 + $0x28] sm:$0xff] %v1492
        %1525 = vst [vmem:[#allocation2 + $0x30] sm:$0xff] %v1493
        %1526 = vst [vmem:[#allocation2 + $0x38] sm:$0xff] %v1494
        %1527 = vst [vmem:[#allocation2 + $0x40] sm:$0xff] %v1495
        %1528 = vst [vmem:[#allocation2 + $0x48] sm:$0xff] %v1496
        %1529 = vst [vmem:[#allocation2 + $0x50] sm:$0xff] %v1497
        %1530 = vst [vmem:[#allocation2 + $0x58] sm:$0xff] %v1498
        %1531 = vst [vmem:[#allocation2 + $0x60] sm:$0xff] %v1499
        %1532 = vst [vmem:[#allocation2 + $0x68] sm:$0xff] %v1500
        %1533 = vst [vmem:[#allocation2 + $0x70] sm:$0xff] %v1501
        %1534 = vst [vmem:[#allocation2 + $0x78] sm:$0xff] %v1502
        %1535 = vst [vmem:[#allocation2 + $0x80] sm:$0xff] %v1503
        %1536 = vst [vmem:[#allocation2 + $0x88] sm:$0xff] %v1504
        %1537 = vst [vmem:[#allocation2 + $0x90] sm:$0xff] %v1505
        %1538 = vst [vmem:[#allocation2 + $0x98] sm:$0xff] %v1506
        %1539 = vst [vmem:[#allocation2 + $0xa0] sm:$0xff] %v1507
        %1540 = vst [vmem:[#allocation2 + $0xa8] sm:$0xff] %v1508
        %1541 = vst [vmem:[#allocation2 + $0xb0] sm:$0xff] %v1509
        %1542 = vst [vmem:[#allocation2 + $0xb8] sm:$0xff] %v1510
        %1543 = vst [vmem:[#allocation2 + $0xc0] sm:$0xff] %v1511
        %1544 = vst [vmem:[#allocation2 + $0xc8] sm:$0xff] %v1512
        %1545 = vst [vmem:[#allocation2 + $0xd0] sm:$0xff] %v1513
        %1546 = vst [vmem:[#allocation2 + $0xd8] sm:$0xff] %v1514
        %1547 = vst [vmem:[#allocation2 + $0xe0] sm:$0xff] %v1515
        %1548 = vst [vmem:[#allocation2 + $0xe8] sm:$0xff] %v1516
        %1549 = vst [vmem:[#allocation2 + $0xf0] sm:$0xff] %v1517
        %1550 = vst [vmem:[#allocation2 + $0xf8] sm:$0xff] %v1518
        // Predicated region
        $region123: #{graphsage_forward.11} parent=109 // pred_check
          %p1551 = pneg %p740
        $region124: #{graphsage_forward.11} parent=109 // pred_check_branch
          %1553 = sbr.rel (%p1551) target = $region126
        $region125: #{graphsage_forward.11} parent=109 // pred_region
          %v1554 = vld [vmem:[#allocation2] sm:$0xff]
          %v1555 = vld [vmem:[#allocation2 + $0x8] sm:$0xff]
          %v1556 = vld [vmem:[#allocation2 + $0x10] sm:$0xff]
          %v1557 = vld [vmem:[#allocation2 + $0x18] sm:$0xff]
          %v1558 = vld [vmem:[#allocation2 + $0x20] sm:$0xff]
          %v1559 = vld [vmem:[#allocation2 + $0x28] sm:$0xff]
          %v1560 = vld [vmem:[#allocation2 + $0x30] sm:$0xff]
          %v1561 = vld [vmem:[#allocation2 + $0x38] sm:$0xff]
          %v1562 = vld [vmem:[#allocation2 + $0x40] sm:$0xff]
          %v1563 = vld [vmem:[#allocation2 + $0x48] sm:$0xff]
          %v1564 = vld [vmem:[#allocation2 + $0x50] sm:$0xff]
          %v1565 = vld [vmem:[#allocation2 + $0x58] sm:$0xff]
          %v1566 = vld [vmem:[#allocation2 + $0x60] sm:$0xff]
          %v1567 = vld [vmem:[#allocation2 + $0x68] sm:$0xff]
          %v1568 = vld [vmem:[#allocation2 + $0x70] sm:$0xff]
          %v1569 = vld [vmem:[#allocation2 + $0x78] sm:$0xff]
          %v1570 = vld [vmem:[#allocation2 + $0x80] sm:$0xff]
          %v1571 = vld [vmem:[#allocation2 + $0x88] sm:$0xff]
          %v1572 = vld [vmem:[#allocation2 + $0x90] sm:$0xff]
          %v1573 = vld [vmem:[#allocation2 + $0x98] sm:$0xff]
          %v1574 = vld [vmem:[#allocation2 + $0xa0] sm:$0xff]
          %v1575 = vld [vmem:[#allocation2 + $0xa8] sm:$0xff]
          %v1576 = vld [vmem:[#allocation2 + $0xb0] sm:$0xff]
          %v1577 = vld [vmem:[#allocation2 + $0xb8] sm:$0xff]
          %v1578 = vld [vmem:[#allocation2 + $0xc0] sm:$0xff]
          %v1579 = vld [vmem:[#allocation2 + $0xc8] sm:$0xff]
          %v1580 = vld [vmem:[#allocation2 + $0xd0] sm:$0xff]
          %v1581 = vld [vmem:[#allocation2 + $0xd8] sm:$0xff]
          %v1582 = vld [vmem:[#allocation2 + $0xe0] sm:$0xff]
          %v1583 = vld [vmem:[#allocation2 + $0xe8] sm:$0xff]
          %v1584 = vld [vmem:[#allocation2 + $0xf0] sm:$0xff]
          %v1585 = vld [vmem:[#allocation2 + $0xf8] sm:$0xff]
          %v1586 = vld [vmem:[%s736] sm:$0xff]
          %v1587 = vld [vmem:[%s736 + $0x8] sm:$0xff]
          %v1588 = vld [vmem:[%s736 + $0x10] sm:$0xff]
          %v1589 = vld [vmem:[%s736 + $0x18] sm:$0xff]
          %v1590 = vld [vmem:[%s736 + $0x20] sm:$0xff]
          %v1591 = vld [vmem:[%s736 + $0x28] sm:$0xff]
          %v1592 = vld [vmem:[%s736 + $0x30] sm:$0xff]
          %v1593 = vld [vmem:[%s736 + $0x38] sm:$0xff]
          %v1594 = vld [vmem:[%s736 + $0x40] sm:$0xff]
          %v1595 = vld [vmem:[%s736 + $0x48] sm:$0xff]
          %v1596 = vld [vmem:[%s736 + $0x50] sm:$0xff]
          %v1597 = vld [vmem:[%s736 + $0x58] sm:$0xff]
          %v1598 = vld [vmem:[%s736 + $0x60] sm:$0xff]
          %v1599 = vld [vmem:[%s736 + $0x68] sm:$0xff]
          %v1600 = vld [vmem:[%s736 + $0x70] sm:$0xff]
          %v1601 = vld [vmem:[%s736 + $0x78] sm:$0xff]
          %v1602 = vld [vmem:[%s736 + $0x80] sm:$0xff]
          %v1603 = vld [vmem:[%s736 + $0x88] sm:$0xff]
          %v1604 = vld [vmem:[%s736 + $0x90] sm:$0xff]
          %v1605 = vld [vmem:[%s736 + $0x98] sm:$0xff]
          %v1606 = vld [vmem:[%s736 + $0xa0] sm:$0xff]
          %v1607 = vld [vmem:[%s736 + $0xa8] sm:$0xff]
          %v1608 = vld [vmem:[%s736 + $0xb0] sm:$0xff]
          %v1609 = vld [vmem:[%s736 + $0xb8] sm:$0xff]
          %v1610 = vld [vmem:[%s736 + $0xc0] sm:$0xff]
          %v1611 = vld [vmem:[%s736 + $0xc8] sm:$0xff]
          %v1612 = vld [vmem:[%s736 + $0xd0] sm:$0xff]
          %v1613 = vld [vmem:[%s736 + $0xd8] sm:$0xff]
          %v1614 = vld [vmem:[%s736 + $0xe0] sm:$0xff]
          %v1615 = vld [vmem:[%s736 + $0xe8] sm:$0xff]
          %v1616 = vld [vmem:[%s736 + $0xf0] sm:$0xff]
          %v1617 = vld [vmem:[%s736 + $0xf8] sm:$0xff]
          %1619 = vset.pattern.permute.xlu0 0
          %1620 = vperm.xlu0 %1619, %v1586
          %v1621 = vpop.permute.xlu0 %1620
          %1624 = vset.pattern.permute.xlu0 0
          %1625 = vperm.xlu0 %1624, %v1587
          %v1626 = vpop.permute.xlu0 %1625
          %1629 = vset.pattern.permute.xlu0 0
          %1630 = vperm.xlu0 %1629, %v1588
          %v1631 = vpop.permute.xlu0 %1630
          %1634 = vset.pattern.permute.xlu0 0
          %1635 = vperm.xlu0 %1634, %v1589
          %v1636 = vpop.permute.xlu0 %1635
          %1639 = vset.pattern.permute.xlu0 0
          %1640 = vperm.xlu0 %1639, %v1590
          %v1641 = vpop.permute.xlu0 %1640
          %1644 = vset.pattern.permute.xlu0 0
          %1645 = vperm.xlu0 %1644, %v1591
          %v1646 = vpop.permute.xlu0 %1645
          %1649 = vset.pattern.permute.xlu0 0
          %1650 = vperm.xlu0 %1649, %v1592
          %v1651 = vpop.permute.xlu0 %1650
          %1654 = vset.pattern.permute.xlu0 0
          %1655 = vperm.xlu0 %1654, %v1593
          %v1656 = vpop.permute.xlu0 %1655
          %1659 = vset.pattern.permute.xlu0 0
          %1660 = vperm.xlu0 %1659, %v1594
          %v1661 = vpop.permute.xlu0 %1660
          %1664 = vset.pattern.permute.xlu0 0
          %1665 = vperm.xlu0 %1664, %v1595
          %v1666 = vpop.permute.xlu0 %1665
          %1669 = vset.pattern.permute.xlu0 0
          %1670 = vperm.xlu0 %1669, %v1596
          %v1671 = vpop.permute.xlu0 %1670
          %1674 = vset.pattern.permute.xlu0 0
          %1675 = vperm.xlu0 %1674, %v1597
          %v1676 = vpop.permute.xlu0 %1675
          %1679 = vset.pattern.permute.xlu0 0
          %1680 = vperm.xlu0 %1679, %v1598
          %v1681 = vpop.permute.xlu0 %1680
          %1684 = vset.pattern.permute.xlu0 0
          %1685 = vperm.xlu0 %1684, %v1599
          %v1686 = vpop.permute.xlu0 %1685
          %1689 = vset.pattern.permute.xlu0 0
          %1690 = vperm.xlu0 %1689, %v1600
          %v1691 = vpop.permute.xlu0 %1690
          %1694 = vset.pattern.permute.xlu0 0
          %1695 = vperm.xlu0 %1694, %v1601
          %v1696 = vpop.permute.xlu0 %1695
          %1699 = vset.pattern.permute.xlu0 0
          %1700 = vperm.xlu0 %1699, %v1602
          %v1701 = vpop.permute.xlu0 %1700
          %1704 = vset.pattern.permute.xlu0 0
          %1705 = vperm.xlu0 %1704, %v1603
          %v1706 = vpop.permute.xlu0 %1705
          %1709 = vset.pattern.permute.xlu0 0
          %1710 = vperm.xlu0 %1709, %v1604
          %v1711 = vpop.permute.xlu0 %1710
          %1714 = vset.pattern.permute.xlu0 0
          %1715 = vperm.xlu0 %1714, %v1605
          %v1716 = vpop.permute.xlu0 %1715
          %1719 = vset.pattern.permute.xlu0 0
          %1720 = vperm.xlu0 %1719, %v1606
          %v1721 = vpop.permute.xlu0 %1720
          %1724 = vset.pattern.permute.xlu0 0
          %1725 = vperm.xlu0 %1724, %v1607
          %v1726 = vpop.permute.xlu0 %1725
          %1729 = vset.pattern.permute.xlu0 0
          %1730 = vperm.xlu0 %1729, %v1608
          %v1731 = vpop.permute.xlu0 %1730
          %1734 = vset.pattern.permute.xlu0 0
          %1735 = vperm.xlu0 %1734, %v1609
          %v1736 = vpop.permute.xlu0 %1735
          %1739 = vset.pattern.permute.xlu0 0
          %1740 = vperm.xlu0 %1739, %v1610
          %v1741 = vpop.permute.xlu0 %1740
          %1744 = vset.pattern.permute.xlu0 0
          %1745 = vperm.xlu0 %1744, %v1611
          %v1746 = vpop.permute.xlu0 %1745
          %1749 = vset.pattern.permute.xlu0 0
          %1750 = vperm.xlu0 %1749, %v1612
          %v1751 = vpop.permute.xlu0 %1750
          %1754 = vset.pattern.permute.xlu0 0
          %1755 = vperm.xlu0 %1754, %v1613
          %v1756 = vpop.permute.xlu0 %1755
          %1759 = vset.pattern.permute.xlu0 0
          %1760 = vperm.xlu0 %1759, %v1614
          %v1761 = vpop.permute.xlu0 %1760
          %1764 = vset.pattern.permute.xlu0 0
          %1765 = vperm.xlu0 %1764, %v1615
          %v1766 = vpop.permute.xlu0 %1765
          %1769 = vset.pattern.permute.xlu0 0
          %1770 = vperm.xlu0 %1769, %v1616
          %v1771 = vpop.permute.xlu0 %1770
          %1774 = vset.pattern.permute.xlu0 0
          %1775 = vperm.xlu0 %1774, %v1617
          %v1776 = vpop.permute.xlu0 %1775
          %v1778 = vmul.f32 %v1554, %v1621
          %v1779 = vmul.f32 %v1555, %v1626
          %v1780 = vmul.f32 %v1556, %v1631
          %v1781 = vmul.f32 %v1557, %v1636
          %v1782 = vmul.f32 %v1558, %v1641
          %v1783 = vmul.f32 %v1559, %v1646
          %v1784 = vmul.f32 %v1560, %v1651
          %v1785 = vmul.f32 %v1561, %v1656
          %v1786 = vmul.f32 %v1562, %v1661
          %v1787 = vmul.f32 %v1563, %v1666
          %v1788 = vmul.f32 %v1564, %v1671
          %v1789 = vmul.f32 %v1565, %v1676
          %v1790 = vmul.f32 %v1566, %v1681
          %v1791 = vmul.f32 %v1567, %v1686
          %v1792 = vmul.f32 %v1568, %v1691
          %v1793 = vmul.f32 %v1569, %v1696
          %v1794 = vmul.f32 %v1570, %v1701
          %v1795 = vmul.f32 %v1571, %v1706
          %v1796 = vmul.f32 %v1572, %v1711
          %v1797 = vmul.f32 %v1573, %v1716
          %v1798 = vmul.f32 %v1574, %v1721
          %v1799 = vmul.f32 %v1575, %v1726
          %v1800 = vmul.f32 %v1576, %v1731
          %v1801 = vmul.f32 %v1577, %v1736
          %v1802 = vmul.f32 %v1578, %v1741
          %v1803 = vmul.f32 %v1579, %v1746
          %v1804 = vmul.f32 %v1580, %v1751
          %v1805 = vmul.f32 %v1581, %v1756
          %v1806 = vmul.f32 %v1582, %v1761
          %v1807 = vmul.f32 %v1583, %v1766
          %v1808 = vmul.f32 %v1584, %v1771
          %v1809 = vmul.f32 %v1585, %v1776
          %v1810 = vld [vmem:[%s681] sm:$0xf]
          %v1811 = vld [vmem:[%s681 + $0x4] sm:$0xf]
          %v1812 = vld [vmem:[%s681 + $0x8] sm:$0xf]
          %v1813 = vld [vmem:[%s681 + $0xc] sm:$0xf]
          %v1814 = vld [vmem:[%s681 + $0x10] sm:$0xf]
          %v1815 = vld [vmem:[%s681 + $0x14] sm:$0xf]
          %v1816 = vld [vmem:[%s681 + $0x18] sm:$0xf]
          %v1817 = vld [vmem:[%s681 + $0x1c] sm:$0xf]
          %v1818 = vld [vmem:[%s681 + $0x20] sm:$0xf]
          %v1819 = vld [vmem:[%s681 + $0x24] sm:$0xf]
          %v1820 = vld [vmem:[%s681 + $0x28] sm:$0xf]
          %v1821 = vld [vmem:[%s681 + $0x2c] sm:$0xf]
          %v1822 = vld [vmem:[%s681 + $0x30] sm:$0xf]
          %v1823 = vld [vmem:[%s681 + $0x34] sm:$0xf]
          %v1824 = vld [vmem:[%s681 + $0x38] sm:$0xf]
          %v1825 = vld [vmem:[%s681 + $0x3c] sm:$0xf]
          %v1826 = vld [vmem:[%s681 + $0x40] sm:$0xf]
          %v1827 = vld [vmem:[%s681 + $0x44] sm:$0xf]
          %v1828 = vld [vmem:[%s681 + $0x48] sm:$0xf]
          %v1829 = vld [vmem:[%s681 + $0x4c] sm:$0xf]
          %v1830 = vld [vmem:[%s681 + $0x50] sm:$0xf]
          %v1831 = vld [vmem:[%s681 + $0x54] sm:$0xf]
          %v1832 = vld [vmem:[%s681 + $0x58] sm:$0xf]
          %v1833 = vld [vmem:[%s681 + $0x5c] sm:$0xf]
          %v1834 = vld [vmem:[%s681 + $0x60] sm:$0xf]
          %v1835 = vld [vmem:[%s681 + $0x64] sm:$0xf]
          %v1836 = vld [vmem:[%s681 + $0x68] sm:$0xf]
          %v1837 = vld [vmem:[%s681 + $0x6c] sm:$0xf]
          %v1838 = vld [vmem:[%s681 + $0x70] sm:$0xf]
          %v1839 = vld [vmem:[%s681 + $0x74] sm:$0xf]
          %v1840 = vld [vmem:[%s681 + $0x78] sm:$0xf]
          %v1841 = vld [vmem:[%s681 + $0x7c] sm:$0xf]
          %v1842 = vunpack.c.l.bf16 %v1810
          %v1843 = vunpack.c.l.bf16 %v1811
          %v1844 = vunpack.c.l.bf16 %v1812
          %v1845 = vunpack.c.l.bf16 %v1813
          %v1846 = vunpack.c.l.bf16 %v1814
          %v1847 = vunpack.c.l.bf16 %v1815
          %v1848 = vunpack.c.l.bf16 %v1816
          %v1849 = vunpack.c.l.bf16 %v1817
          %v1850 = vunpack.c.l.bf16 %v1818
          %v1851 = vunpack.c.l.bf16 %v1819
          %v1852 = vunpack.c.l.bf16 %v1820
          %v1853 = vunpack.c.l.bf16 %v1821
          %v1854 = vunpack.c.l.bf16 %v1822
          %v1855 = vunpack.c.l.bf16 %v1823
          %v1856 = vunpack.c.l.bf16 %v1824
          %v1857 = vunpack.c.l.bf16 %v1825
          %v1858 = vunpack.c.l.bf16 %v1826
          %v1859 = vunpack.c.l.bf16 %v1827
          %v1860 = vunpack.c.l.bf16 %v1828
          %v1861 = vunpack.c.l.bf16 %v1829
          %v1862 = vunpack.c.l.bf16 %v1830
          %v1863 = vunpack.c.l.bf16 %v1831
          %v1864 = vunpack.c.l.bf16 %v1832
          %v1865 = vunpack.c.l.bf16 %v1833
          %v1866 = vunpack.c.l.bf16 %v1834
          %v1867 = vunpack.c.l.bf16 %v1835
          %v1868 = vunpack.c.l.bf16 %v1836
          %v1869 = vunpack.c.l.bf16 %v1837
          %v1870 = vunpack.c.l.bf16 %v1838
          %v1871 = vunpack.c.l.bf16 %v1839
          %v1872 = vunpack.c.l.bf16 %v1840
          %v1873 = vunpack.c.l.bf16 %v1841
          %v1874 = vadd.f32 %v1778, %v1842
          %v1875 = vadd.f32 %v1779, %v1843
          %v1876 = vadd.f32 %v1780, %v1844
          %v1877 = vadd.f32 %v1781, %v1845
          %v1878 = vadd.f32 %v1782, %v1846
          %v1879 = vadd.f32 %v1783, %v1847
          %v1880 = vadd.f32 %v1784, %v1848
          %v1881 = vadd.f32 %v1785, %v1849
          %v1882 = vadd.f32 %v1786, %v1850
          %v1883 = vadd.f32 %v1787, %v1851
          %v1884 = vadd.f32 %v1788, %v1852
          %v1885 = vadd.f32 %v1789, %v1853
          %v1886 = vadd.f32 %v1790, %v1854
          %v1887 = vadd.f32 %v1791, %v1855
          %v1888 = vadd.f32 %v1792, %v1856
          %v1889 = vadd.f32 %v1793, %v1857
          %v1890 = vadd.f32 %v1794, %v1858
          %v1891 = vadd.f32 %v1795, %v1859
          %v1892 = vadd.f32 %v1796, %v1860
          %v1893 = vadd.f32 %v1797, %v1861
          %v1894 = vadd.f32 %v1798, %v1862
          %v1895 = vadd.f32 %v1799, %v1863
          %v1896 = vadd.f32 %v1800, %v1864
          %v1897 = vadd.f32 %v1801, %v1865
          %v1898 = vadd.f32 %v1802, %v1866
          %v1899 = vadd.f32 %v1803, %v1867
          %v1900 = vadd.f32 %v1804, %v1868
          %v1901 = vadd.f32 %v1805, %v1869
          %v1902 = vadd.f32 %v1806, %v1870
          %v1903 = vadd.f32 %v1807, %v1871
          %v1904 = vadd.f32 %v1808, %v1872
          %v1905 = vadd.f32 %v1809, %v1873
          %1906 = vst [vmem:[%s718] sm:$0xff] %v1874
          %1907 = vst [vmem:[%s718 + $0x8] sm:$0xff] %v1875
          %1908 = vst [vmem:[%s718 + $0x10] sm:$0xff] %v1876
          %1909 = vst [vmem:[%s718 + $0x18] sm:$0xff] %v1877
          %1910 = vst [vmem:[%s718 + $0x20] sm:$0xff] %v1878
          %1911 = vst [vmem:[%s718 + $0x28] sm:$0xff] %v1879
          %1912 = vst [vmem:[%s718 + $0x30] sm:$0xff] %v1880
          %1913 = vst [vmem:[%s718 + $0x38] sm:$0xff] %v1881
          %1914 = vst [vmem:[%s718 + $0x40] sm:$0xff] %v1882
          %1915 = vst [vmem:[%s718 + $0x48] sm:$0xff] %v1883
          %1916 = vst [vmem:[%s718 + $0x50] sm:$0xff] %v1884
          %1917 = vst [vmem:[%s718 + $0x58] sm:$0xff] %v1885
          %1918 = vst [vmem:[%s718 + $0x60] sm:$0xff] %v1886
          %1919 = vst [vmem:[%s718 + $0x68] sm:$0xff] %v1887
          %1920 = vst [vmem:[%s718 + $0x70] sm:$0xff] %v1888
          %1921 = vst [vmem:[%s718 + $0x78] sm:$0xff] %v1889
          %1922 = vst [vmem:[%s718 + $0x80] sm:$0xff] %v1890
          %1923 = vst [vmem:[%s718 + $0x88] sm:$0xff] %v1891
          %1924 = vst [vmem:[%s718 + $0x90] sm:$0xff] %v1892
          %1925 = vst [vmem:[%s718 + $0x98] sm:$0xff] %v1893
          %1926 = vst [vmem:[%s718 + $0xa0] sm:$0xff] %v1894
          %1927 = vst [vmem:[%s718 + $0xa8] sm:$0xff] %v1895
          %1928 = vst [vmem:[%s718 + $0xb0] sm:$0xff] %v1896
          %1929 = vst [vmem:[%s718 + $0xb8] sm:$0xff] %v1897
          %1930 = vst [vmem:[%s718 + $0xc0] sm:$0xff] %v1898
          %1931 = vst [vmem:[%s718 + $0xc8] sm:$0xff] %v1899
          %1932 = vst [vmem:[%s718 + $0xd0] sm:$0xff] %v1900
          %1933 = vst [vmem:[%s718 + $0xd8] sm:$0xff] %v1901
          %1934 = vst [vmem:[%s718 + $0xe0] sm:$0xff] %v1902
          %1935 = vst [vmem:[%s718 + $0xe8] sm:$0xff] %v1903
          %1936 = vst [vmem:[%s718 + $0xf0] sm:$0xff] %v1904
          %1937 = vst [vmem:[%s718 + $0xf8] sm:$0xff] %v1905
        $region126: #{graphsage_forward.11} parent=109 // pred_fallthru
          _
        %s1938 = sand.u32 %s139, 1
        %s1939 = scalar_lea.sflag [#allocation6], %s1938
        %s1940 = sand.u32 %s139, 1
        %s1941 = smul.addr %s1940, 256
        %s1942 = scalar_lea.vmem [#allocation5], %s1941
        // Predicated region
        $region127: #{graphsage_forward.11} parent=109 // pred_check
          %p1943 = pneg %p149
        $region128: #{graphsage_forward.11} parent=109 // pred_check_branch
          %1945 = sbr.rel (%p1943) target = $region130
        $region129: #{graphsage_forward.11} parent=109 // pred_region
          %s1946 = smul.u32 32, %s22
          %s1948 = ssub.s32 4096, 4096
          %1949 = vsyncadd %s1939, %s1948
          %s1950 = smul.addr %s1946, 128
          %s1951 = scalar_lea.hbm %s4, %s1950
          %s1952 = sshll.u32 %s1942, 4
          %s1953 = int_to_ptr.vmem [resolvable:$true] %s1952
          %1958 = dma.vmem_to_hbm [thread:$0]  %s1953, 4096, %s1951, %s1939, 128, 128, 8
        $region130: #{graphsage_forward.11} parent=109 // pred_fallthru
          _
      $region110: #{graphsage_forward.11} parent=5 // pred_fallthru
        _
      %p1959 = scmp.le.s32.totalorder 2, %s13
      // Predicated region
      $region131: #{graphsage_forward.11} parent=5 // pred_check
        %p1960 = pneg %p1959
      $region132: #{graphsage_forward.11} parent=5 // pred_check_branch
        %1962 = sbr.rel (%p1960) target = $region134
      $region133: #{graphsage_forward.11} parent=5 // pred_region
        %s1963 = ssub.s32 %s13, 2
        // Predicated region
        $region135: #{graphsage_forward.11} parent=133 // pred_check
          %p1964 = pneg %p155
        $region136: #{graphsage_forward.11} parent=133 // pred_check_branch
          %1966 = sbr.rel (%p1964) target = $region138
        $region137: #{graphsage_forward.11} parent=133 // pred_region
          %s1967 = sand.u32 %s140, 1
          %s1968 = scalar_lea.sflag [#allocation6], %s1967
          %s1969 = sand.u32 %s140, 1
          %s1970 = smul.addr %s1969, 256
          %s1971 = scalar_lea.vmem [#allocation5], %s1970
          %1972 = dma.done %s1968, 4096
        $region138: #{graphsage_forward.11} parent=133 // pred_fallthru
          _
      $region134: #{graphsage_forward.11} parent=5 // pred_fallthru
        _
    $region6: #{graphsage_forward.11} parent=1 // loop_footer
      %s17 = sadd.s32 1, %s13
    $region7: #{graphsage_forward.11} parent=1 // loop_footer_branch
      %12 = sbr.rel target = $region3
    $region8: #{graphsage_forward.11} parent=1 // loop_exit
      _
    %1973 = vsyncpa [#allocation6], 1
    %s1974 = scalar_lea.sflag [#allocation6], 1
    %1975 = vsyncpa %s1974, 1

// kernel: graphsage_forward.7
$region0: #{graphsage_forward.7}
  #allocation0 [shape = 'u32[]', space=smem, size = 0x4, offset = 0x4, fixed_abs, tag = 'smem constant byte address 0x4 - core index']
  #allocation1 [shape = 'u32[144,128]{1,0:T(1,128)}', space=vmem, size = 0x12000, scoped, tag = 'internal scratch']
  #allocation2 [shape = 'f32[256,128]{1,0:T(8,128)}', space=vmem, size = 0x20000, scoped, tag = 'scratch operand']
  %s0 = inlined_call_operand.vmem [shape: s8[512,512], index: 0, kind: input, shape index: {}]
  %s1 = inlined_call_operand.vmem [shape: bf16[512,256], index: 1, kind: input, shape index: {}, may-alias: {1,2}]
  %s2 = inlined_call_operand.vmem [shape: bf16[512,256], index: 2, kind: input, shape index: {}, may-alias: {1,2}]
  %s3 = inlined_call_operand.vmem [shape: f32[512,1], index: 3, kind: input, shape index: {}]
  %s4 = inlined_call_operand.vmem [shape: bf16[512,128], index: 4, kind: output, shape index: {}]
  %s5 = sld [smem:[#allocation0]]
  $region139: #{graphsage_forward.7} parent=0
    _
  %s7 = ssub.s32 1, %s5
  %s8 = scalar_select 0, %s7, %s5
  $region1: #{graphsage_forward.7} parent=0
    #allocation3 [shape = 'u8[131072]{0}', space=vmem, size = 0x20000, scoped, tag = 'input window, operand 1, single buffered']
    #allocation4 [shape = 'u8[131072]{0}', space=vmem, size = 0x20000, scoped, tag = 'input window, operand 2']
    loop: start=0, step=1, limit=4
    $region2: #{graphsage_forward.7} parent=1 // loop_pre_header
      _
    $region3: #{graphsage_forward.7} parent=1 // loop_header
      %s10 = sphi 0, %s14
      %p11 = scmp.ge.s32.totalorder %s10, 4
      %s17 = sphi 0, %s29
      %s18 = sphi 0, %s25
      %s19 = sphi 0, %s17
      %s20 = sphi 0, %s18
      %s21 = sphi 0, %s19
      %s22 = sphi 0, %s20
      %s34 = sphi 0, %s36
      %s37 = sphi 0, %s34
      %s38 = sphi 0, %s37
      %s54 = sphi 0, %s38
      %s58 = sphi 0, %s58
      %s60 = sphi 0, %s58
      %s61 = sphi 0, %s60
      %s75 = sphi 0, %s61
      %s81 = sphi 0, %s83
      %s84 = sphi 0, %s81
      %s85 = sphi 0, %s84
      %s101 = sphi 0, %s85
      %s107 = sphi 0, %s109
      %s110 = sphi 0, %s107
      %s111 = sphi 0, %s110
      %s127 = sphi 0, %s111
      %s133 = sphi 0, %s135
      %s136 = sphi 0, %s133
      %s137 = sphi 0, %s136
      %s153 = sphi 0, %s137
    $region4: #{graphsage_forward.7} parent=1 // loop_header_branch
      %13 = sbr.rel (%p11) target = $region8
    $region5: #{graphsage_forward.7} parent=1 // loop_body
      %s15 = ssub.s32 %s10, 1
      %s16 = ssub.s32 %s10, 2
      %s23 = sadd.s32 1, %s18
      %p24 = scmp.ge.s32.totalorder %s23, 1
      %s25 = scalar_select %p24, 0, %s23
      %s26 = sadd.s32 1, %s17
      %s27 = scalar_select %p24, %s26, %s17
      %p28 = scmp.ge.s32.totalorder %s27, 2
      %s29 = scalar_select %p28, 0, %s27
      %s30 = ssub.s32 %s17, %s29
      %s31 = ssub.s32 %s18, %s25
      %s32 = sor.u32 %s30, %s31
      %p33 = scmp.eq.s32.totalorder %s32, 0
      %s35 = sadd.s32 %s34, 1
      %s36 = scalar_select %p33, %s34, %s35
      %p39 = pneg %p33
      %p40 = scmp.eq.s32.totalorder %s10, 1
      %p41 = por %p39, %p40
      %p42 = scmp.ne.s32.totalorder %s34, %s37
      %p43 = scmp.eq.s32.totalorder %s10, 0
      %p44 = por %p42, %p43
      %p45 = scmp.ne.s32.totalorder %s34, %s37
      %p46 = scmp.eq.s32.totalorder %s15, 1
      %p47 = por %p45, %p46
      %p48 = scmp.ne.s32.totalorder %s37, %s38
      %p49 = scmp.eq.s32.totalorder %s15, 0
      %p50 = por %p48, %p49
      %p51 = scmp.ne.s32.totalorder %s37, %s38
      %p52 = scmp.eq.s32.totalorder %s16, 1
      %p53 = por %p51, %p52
      %p55 = scmp.ne.s32.totalorder %s38, %s54
      %p56 = scmp.eq.s32.totalorder %s16, 0
      %p57 = por %p55, %p56
      %s59 = sadd.s32 %s58, 1
      %p62 = scmp.eq.s32.totalorder %s10, 1
      %p63 = scmp.ne.s32.totalorder %s58, %s60
      %p64 = scmp.eq.s32.totalorder %s10, 0
      %p65 = por %p63, %p64
      %p66 = scmp.ne.s32.totalorder %s58, %s60
      %p67 = scmp.eq.s32.totalorder %s15, 1
      %p68 = por %p66, %p67
      %p69 = scmp.ne.s32.totalorder %s60, %s61
      %p70 = scmp.eq.s32.totalorder %s15, 0
      %p71 = por %p69, %p70
      %p72 = scmp.ne.s32.totalorder %s60, %s61
      %p73 = scmp.eq.s32.totalorder %s16, 1
      %p74 = por %p72, %p73
      %p76 = scmp.ne.s32.totalorder %s61, %s75
      %p77 = scmp.eq.s32.totalorder %s16, 0
      %p78 = por %p76, %p77
      %s79 = ssub.s32 %s17, %s29
      %p80 = scmp.eq.s32.totalorder %s79, 0
      %s82 = sadd.s32 %s81, 1
      %s83 = scalar_select %p80, %s81, %s82
      %p86 = pneg %p80
      %p87 = scmp.eq.s32.totalorder %s10, 1
      %p88 = por %p86, %p87
      %p89 = scmp.ne.s32.totalorder %s81, %s84
      %p90 = scmp.eq.s32.totalorder %s10, 0
      %p91 = por %p89, %p90
      %p92 = scmp.ne.s32.totalorder %s81, %s84
      %p93 = scmp.eq.s32.totalorder %s15, 1
      %p94 = por %p92, %p93
      %p95 = scmp.ne.s32.totalorder %s84, %s85
      %p96 = scmp.eq.s32.totalorder %s15, 0
      %p97 = por %p95, %p96
      %p98 = scmp.ne.s32.totalorder %s84, %s85
      %p99 = scmp.eq.s32.totalorder %s16, 1
      %p100 = por %p98, %p99
      %p102 = scmp.ne.s32.totalorder %s85, %s101
      %p103 = scmp.eq.s32.totalorder %s16, 0
      %p104 = por %p102, %p103
      %s105 = ssub.s32 %s17, %s29
      %p106 = scmp.eq.s32.totalorder %s105, 0
      %s108 = sadd.s32 %s107, 1
      %s109 = scalar_select %p106, %s107, %s108
      %p112 = pneg %p106
      %p113 = scmp.eq.s32.totalorder %s10, 1
      %p114 = por %p112, %p113
      %p115 = scmp.ne.s32.totalorder %s107, %s110
      %p116 = scmp.eq.s32.totalorder %s10, 0
      %p117 = por %p115, %p116
      %p118 = scmp.ne.s32.totalorder %s107, %s110
      %p119 = scmp.eq.s32.totalorder %s15, 1
      %p120 = por %p118, %p119
      %p121 = scmp.ne.s32.totalorder %s110, %s111
      %p122 = scmp.eq.s32.totalorder %s15, 0
      %p123 = por %p121, %p122
      %p124 = scmp.ne.s32.totalorder %s110, %s111
      %p125 = scmp.eq.s32.totalorder %s16, 1
      %p126 = por %p124, %p125
      %p128 = scmp.ne.s32.totalorder %s111, %s127
      %p129 = scmp.eq.s32.totalorder %s16, 0
      %p130 = por %p128, %p129
      %s131 = ssub.s32 %s17, %s29
      %p132 = scmp.eq.s32.totalorder %s131, 0
      %s134 = sadd.s32 %s133, 1
      %s135 = scalar_select %p132, %s133, %s134
      %p138 = pneg %p132
      %p139 = scmp.eq.s32.totalorder %s10, 1
      %p140 = por %p138, %p139
      %p141 = scmp.ne.s32.totalorder %s133, %s136
      %p142 = scmp.eq.s32.totalorder %s10, 0
      %p143 = por %p141, %p142
      %p144 = scmp.ne.s32.totalorder %s133, %s136
      %p145 = scmp.eq.s32.totalorder %s15, 1
      %p146 = por %p144, %p145
      %p147 = scmp.ne.s32.totalorder %s136, %s137
      %p148 = scmp.eq.s32.totalorder %s15, 0
      %p149 = por %p147, %p148
      %p150 = scmp.ne.s32.totalorder %s136, %s137
      %p151 = scmp.eq.s32.totalorder %s16, 1
      %p152 = por %p150, %p151
      %p154 = scmp.ne.s32.totalorder %s137, %s153
      %p155 = scmp.eq.s32.totalorder %s16, 0
      %p156 = por %p154, %p155
      %p157 = scmp.le.s32.totalorder 1, %s10
      %p158 = scmp.lt.s32.totalorder %s10, 3
      %p159 = pnand %p157, %p158
      %p160 = pneg %p159
      // Predicated region
      $region9: #{graphsage_forward.7} parent=5 // pred_check
        _
      $region10: #{graphsage_forward.7} parent=5 // pred_check_branch
        %162 = sbr.rel (%p159) target = $region12
      $region11: #{graphsage_forward.7} parent=5 // pred_region
        %s163 = ssub.s32 %s10, 1
        // Predicated region
        $region13: #{graphsage_forward.7} parent=11 // pred_check
          %p164 = pneg %p71
        $region14: #{graphsage_forward.7} parent=11 // pred_check_branch
          %166 = sbr.rel (%p164) target = $region16
        $region15: #{graphsage_forward.7} parent=11 // pred_region
          %s167 = scalar_lea.vmem %s1, 4
          // Predicated region
          $region17: #{graphsage_forward.7} parent=15 // pred_check
            _
          $region18: #{graphsage_forward.7} parent=15 // pred_check_branch
            %169 = sbr.rel (0) target = $region20
          $region19: #{graphsage_forward.7} parent=15 // pred_region
            // Predicated region
            $region21: #{graphsage_forward.7} parent=19 // pred_check
              _
            $region22: #{graphsage_forward.7} parent=19 // pred_check_branch
              %171 = sbr.rel target = $region24
            $region23: #{graphsage_forward.7} parent=19 // pred_region
              // Predicated region
              $region36: #{graphsage_forward.7} parent=23 // pred_check
                _
              $region37: #{graphsage_forward.7} parent=23 // pred_check_branch
                %313 = sbr.rel (0) target = $region39
              $region38: #{graphsage_forward.7} parent=23 // pred_region
                loop: start=0, step=1, limit=1
                $region40: #{graphsage_forward.7} parent=38 // loop_pre_header
                  _
                $region41: #{graphsage_forward.7} parent=38 // loop_header
                  %s315 = sphi 0, %s319
                  %p316 = scmp.ge.s32.totalorder %s315, 1
                  %s320 = sphi %s167, %s167
                  %s321 = sphi [#allocation3], [#allocation3]
                $region42: #{graphsage_forward.7} parent=38 // loop_header_branch
                  %318 = sbr.rel (%p316) target = $region46
                $region43: #{graphsage_forward.7} parent=38 // loop_body
                  _
                $region44: #{graphsage_forward.7} parent=38 // loop_footer
                  %s319 = sadd.s32 1, %s315
                $region45: #{graphsage_forward.7} parent=38 // loop_footer_branch
                  %314 = sbr.rel target = $region41
                $region46: #{graphsage_forward.7} parent=38 // loop_exit
                  _
                %s323 = ssub.s32 16, 1
                loop: start=0, step=1, limit=1
                $region47: #{graphsage_forward.7} parent=38 // loop_pre_header
                  _
                $region48: #{graphsage_forward.7} parent=38 // loop_header
                  %s325 = sphi 0, %s329
                  %p326 = scmp.ge.s32.totalorder %s325, 1
                  %s330 = sphi %s167, %s167
                  %s331 = sphi [#allocation3], [#allocation3]
                $region49: #{graphsage_forward.7} parent=38 // loop_header_branch
                  %328 = sbr.rel (%p326) target = $region53
                $region50: #{graphsage_forward.7} parent=38 // loop_body
                  %v332 = vld [vmem:[%s330] sm:%s323]
                  %333 = vst [vmem:[%s331] sm:%s323] %v332
                  %v334 = vld [vmem:[%s330 + $0x8] sm:%s323]
                  %335 = vst [vmem:[%s331 + $0x4] sm:%s323] %v334
                  %v336 = vld [vmem:[%s330 + $0x10] sm:%s323]
                  %337 = vst [vmem:[%s331 + $0x8] sm:%s323] %v336
                  %v338 = vld [vmem:[%s330 + $0x18] sm:%s323]
                  %339 = vst [vmem:[%s331 + $0xc] sm:%s323] %v338
                  %v340 = vld [vmem:[%s330 + $0x20] sm:%s323]
                  %341 = vst [vmem:[%s331 + $0x10] sm:%s323] %v340
                  %v342 = vld [vmem:[%s330 + $0x28] sm:%s323]
                  %343 = vst [vmem:[%s331 + $0x14] sm:%s323] %v342
                  %v344 = vld [vmem:[%s330 + $0x30] sm:%s323]
                  %345 = vst [vmem:[%s331 + $0x18] sm:%s323] %v344
                  %v346 = vld [vmem:[%s330 + $0x38] sm:%s323]
                  %347 = vst [vmem:[%s331 + $0x1c] sm:%s323] %v346
                  %v348 = vld [vmem:[%s330 + $0x40] sm:%s323]
                  %349 = vst [vmem:[%s331 + $0x20] sm:%s323] %v348
                  %v350 = vld [vmem:[%s330 + $0x48] sm:%s323]
                  %351 = vst [vmem:[%s331 + $0x24] sm:%s323] %v350
                  %v352 = vld [vmem:[%s330 + $0x50] sm:%s323]
                  %353 = vst [vmem:[%s331 + $0x28] sm:%s323] %v352
                  %v354 = vld [vmem:[%s330 + $0x58] sm:%s323]
                  %355 = vst [vmem:[%s331 + $0x2c] sm:%s323] %v354
                  %v356 = vld [vmem:[%s330 + $0x60] sm:%s323]
                  %357 = vst [vmem:[%s331 + $0x30] sm:%s323] %v356
                  %v358 = vld [vmem:[%s330 + $0x68] sm:%s323]
                  %359 = vst [vmem:[%s331 + $0x34] sm:%s323] %v358
                  %v360 = vld [vmem:[%s330 + $0x70] sm:%s323]
                  %361 = vst [vmem:[%s331 + $0x38] sm:%s323] %v360
                  %v362 = vld [vmem:[%s330 + $0x78] sm:%s323]
                  %363 = vst [vmem:[%s331 + $0x3c] sm:%s323] %v362
                  %v364 = vld [vmem:[%s330 + $0x80] sm:%s323]
                  %365 = vst [vmem:[%s331 + $0x40] sm:%s323] %v364
                  %v366 = vld [vmem:[%s330 + $0x88] sm:%s323]
                  %367 = vst [vmem:[%s331 + $0x44] sm:%s323] %v366
                  %v368 = vld [vmem:[%s330 + $0x90] sm:%s323]
                  %369 = vst [vmem:[%s331 + $0x48] sm:%s323] %v368
                  %v370 = vld [vmem:[%s330 + $0x98] sm:%s323]
                  %371 = vst [vmem:[%s331 + $0x4c] sm:%s323] %v370
                  %v372 = vld [vmem:[%s330 + $0xa0] sm:%s323]
                  %373 = vst [vmem:[%s331 + $0x50] sm:%s323] %v372
                  %v374 = vld [vmem:[%s330 + $0xa8] sm:%s323]
                  %375 = vst [vmem:[%s331 + $0x54] sm:%s323] %v374
                  %v376 = vld [vmem:[%s330 + $0xb0] sm:%s323]
                  %377 = vst [vmem:[%s331 + $0x58] sm:%s323] %v376
                  %v378 = vld [vmem:[%s330 + $0xb8] sm:%s323]
                  %379 = vst [vmem:[%s331 + $0x5c] sm:%s323] %v378
                  %v380 = vld [vmem:[%s330 + $0xc0] sm:%s323]
                  %381 = vst [vmem:[%s331 + $0x60] sm:%s323] %v380
                  %v382 = vld [vmem:[%s330 + $0xc8] sm:%s323]
                  %383 = vst [vmem:[%s331 + $0x64] sm:%s323] %v382
                  %v384 = vld [vmem:[%s330 + $0xd0] sm:%s323]
                  %385 = vst [vmem:[%s331 + $0x68] sm:%s323] %v384
                  %v386 = vld [vmem:[%s330 + $0xd8] sm:%s323]
                  %387 = vst [vmem:[%s331 + $0x6c] sm:%s323] %v386
                  %v388 = vld [vmem:[%s330 + $0xe0] sm:%s323]
                  %389 = vst [vmem:[%s331 + $0x70] sm:%s323] %v388
                  %v390 = vld [vmem:[%s330 + $0xe8] sm:%s323]
                  %391 = vst [vmem:[%s331 + $0x74] sm:%s323] %v390
                  %v392 = vld [vmem:[%s330 + $0xf0] sm:%s323]
                  %393 = vst [vmem:[%s331 + $0x78] sm:%s323] %v392
                  %v394 = vld [vmem:[%s330 + $0xf8] sm:%s323]
                  %395 = vst [vmem:[%s331 + $0x7c] sm:%s323] %v394
                  %v396 = vld [vmem:[%s330 + $0x100] sm:%s323]
                  %397 = vst [vmem:[%s331 + $0x80] sm:%s323] %v396
                  %v398 = vld [vmem:[%s330 + $0x108] sm:%s323]
                  %399 = vst [vmem:[%s331 + $0x84] sm:%s323] %v398
                  %v400 = vld [vmem:[%s330 + $0x110] sm:%s323]
                  %401 = vst [vmem:[%s331 + $0x88] sm:%s323] %v400
                  %v402 = vld [vmem:[%s330 + $0x118] sm:%s323]
                  %403 = vst [vmem:[%s331 + $0x8c] sm:%s323] %v402
                  %v404 = vld [vmem:[%s330 + $0x120] sm:%s323]
                  %405 = vst [vmem:[%s331 + $0x90] sm:%s323] %v404
                  %v406 = vld [vmem:[%s330 + $0x128] sm:%s323]
                  %407 = vst [vmem:[%s331 + $0x94] sm:%s323] %v406
                  %v408 = vld [vmem:[%s330 + $0x130] sm:%s323]
                  %409 = vst [vmem:[%s331 + $0x98] sm:%s323] %v408
                  %v410 = vld [vmem:[%s330 + $0x138] sm:%s323]
                  %411 = vst [vmem:[%s331 + $0x9c] sm:%s323] %v410
                  %v412 = vld [vmem:[%s330 + $0x140] sm:%s323]
                  %413 = vst [vmem:[%s331 + $0xa0] sm:%s323] %v412
                  %v414 = vld [vmem:[%s330 + $0x148] sm:%s323]
                  %415 = vst [vmem:[%s331 + $0xa4] sm:%s323] %v414
                  %v416 = vld [vmem:[%s330 + $0x150] sm:%s323]
                  %417 = vst [vmem:[%s331 + $0xa8] sm:%s323] %v416
                  %v418 = vld [vmem:[%s330 + $0x158] sm:%s323]
                  %419 = vst [vmem:[%s331 + $0xac] sm:%s323] %v418
                  %v420 = vld [vmem:[%s330 + $0x160] sm:%s323]
                  %421 = vst [vmem:[%s331 + $0xb0] sm:%s323] %v420
                  %v422 = vld [vmem:[%s330 + $0x168] sm:%s323]
                  %423 = vst [vmem:[%s331 + $0xb4] sm:%s323] %v422
                  %v424 = vld [vmem:[%s330 + $0x170] sm:%s323]
                  %425 = vst [vmem:[%s331 + $0xb8] sm:%s323] %v424
                  %v426 = vld [vmem:[%s330 + $0x178] sm:%s323]
                  %427 = vst [vmem:[%s331 + $0xbc] sm:%s323] %v426
                  %v428 = vld [vmem:[%s330 + $0x180] sm:%s323]
                  %429 = vst [vmem:[%s331 + $0xc0] sm:%s323] %v428
                  %v430 = vld [vmem:[%s330 + $0x188] sm:%s323]
                  %431 = vst [vmem:[%s331 + $0xc4] sm:%s323] %v430
                  %v432 = vld [vmem:[%s330 + $0x190] sm:%s323]
                  %433 = vst [vmem:[%s331 + $0xc8] sm:%s323] %v432
                  %v434 = vld [vmem:[%s330 + $0x198] sm:%s323]
                  %435 = vst [vmem:[%s331 + $0xcc] sm:%s323] %v434
                  %v436 = vld [vmem:[%s330 + $0x1a0] sm:%s323]
                  %437 = vst [vmem:[%s331 + $0xd0] sm:%s323] %v436
                  %v438 = vld [vmem:[%s330 + $0x1a8] sm:%s323]
                  %439 = vst [vmem:[%s331 + $0xd4] sm:%s323] %v438
                  %v440 = vld [vmem:[%s330 + $0x1b0] sm:%s323]
                  %441 = vst [vmem:[%s331 + $0xd8] sm:%s323] %v440
                  %v442 = vld [vmem:[%s330 + $0x1b8] sm:%s323]
                  %443 = vst [vmem:[%s331 + $0xdc] sm:%s323] %v442
                  %v444 = vld [vmem:[%s330 + $0x1c0] sm:%s323]
                  %445 = vst [vmem:[%s331 + $0xe0] sm:%s323] %v444
                  %v446 = vld [vmem:[%s330 + $0x1c8] sm:%s323]
                  %447 = vst [vmem:[%s331 + $0xe4] sm:%s323] %v446
                  %v448 = vld [vmem:[%s330 + $0x1d0] sm:%s323]
                  %449 = vst [vmem:[%s331 + $0xe8] sm:%s323] %v448
                  %v450 = vld [vmem:[%s330 + $0x1d8] sm:%s323]
                  %451 = vst [vmem:[%s331 + $0xec] sm:%s323] %v450
                  %v452 = vld [vmem:[%s330 + $0x1e0] sm:%s323]
                  %453 = vst [vmem:[%s331 + $0xf0] sm:%s323] %v452
                  %v454 = vld [vmem:[%s330 + $0x1e8] sm:%s323]
                  %455 = vst [vmem:[%s331 + $0xf4] sm:%s323] %v454
                  %v456 = vld [vmem:[%s330 + $0x1f0] sm:%s323]
                  %457 = vst [vmem:[%s331 + $0xf8] sm:%s323] %v456
                  %v458 = vld [vmem:[%s330 + $0x1f8] sm:%s323]
                  %459 = vst [vmem:[%s331 + $0xfc] sm:%s323] %v458
                $region51: #{graphsage_forward.7} parent=38 // loop_footer
                  %s329 = sadd.s32 1, %s325
                $region52: #{graphsage_forward.7} parent=38 // loop_footer_branch
                  %324 = sbr.rel target = $region48
                $region53: #{graphsage_forward.7} parent=38 // loop_exit
                  _
              $region39: #{graphsage_forward.7} parent=23 // pred_fallthru
                _
            $region24: #{graphsage_forward.7} parent=19 // pred_fallthru
              _
            // Predicated region
            $region25: #{graphsage_forward.7} parent=19 // pred_check
              _
            $region26: #{graphsage_forward.7} parent=19 // pred_check_branch
              %173 = sbr.rel (0) target = $region28
            $region27: #{graphsage_forward.7} parent=19 // pred_region
              %s175 = ssub.s32 16, 1
              loop: start=0, step=1, limit=1
              $region29: #{graphsage_forward.7} parent=27 // loop_pre_header
                _
              $region30: #{graphsage_forward.7} parent=27 // loop_header
                %s177 = sphi 0, %s181
                %p178 = scmp.ge.s32.totalorder %s177, 1
                %s182 = sphi %s167, %s167
                %s183 = sphi [#allocation3], [#allocation3]
              $region31: #{graphsage_forward.7} parent=27 // loop_header_branch
                %180 = sbr.rel (%p178) target = $region35
              $region32: #{graphsage_forward.7} parent=27 // loop_body
                %v184 = vld [vmem:[%s182] sm:%s175]
                %185 = vst [vmem:[%s183] sm:%s175] %v184
                %v186 = vld [vmem:[%s182 + $0x8] sm:%s175]
                %187 = vst [vmem:[%s183 + $0x4] sm:%s175] %v186
                %v188 = vld [vmem:[%s182 + $0x10] sm:%s175]
                %189 = vst [vmem:[%s183 + $0x8] sm:%s175] %v188
                %v190 = vld [vmem:[%s182 + $0x18] sm:%s175]
                %191 = vst [vmem:[%s183 + $0xc] sm:%s175] %v190
                %v192 = vld [vmem:[%s182 + $0x20] sm:%s175]
                %193 = vst [vmem:[%s183 + $0x10] sm:%s175] %v192
                %v194 = vld [vmem:[%s182 + $0x28] sm:%s175]
                %195 = vst [vmem:[%s183 + $0x14] sm:%s175] %v194
                %v196 = vld [vmem:[%s182 + $0x30] sm:%s175]
                %197 = vst [vmem:[%s183 + $0x18] sm:%s175] %v196
                %v198 = vld [vmem:[%s182 + $0x38] sm:%s175]
                %199 = vst [vmem:[%s183 + $0x1c] sm:%s175] %v198
                %v200 = vld [vmem:[%s182 + $0x40] sm:%s175]
                %201 = vst [vmem:[%s183 + $0x20] sm:%s175] %v200
                %v202 = vld [vmem:[%s182 + $0x48] sm:%s175]
                %203 = vst [vmem:[%s183 + $0x24] sm:%s175] %v202
                %v204 = vld [vmem:[%s182 + $0x50] sm:%s175]
                %205 = vst [vmem:[%s183 + $0x28] sm:%s175] %v204
                %v206 = vld [vmem:[%s182 + $0x58] sm:%s175]
                %207 = vst [vmem:[%s183 + $0x2c] sm:%s175] %v206
                %v208 = vld [vmem:[%s182 + $0x60] sm:%s175]
                %209 = vst [vmem:[%s183 + $0x30] sm:%s175] %v208
                %v210 = vld [vmem:[%s182 + $0x68] sm:%s175]
                %211 = vst [vmem:[%s183 + $0x34] sm:%s175] %v210
                %v212 = vld [vmem:[%s182 + $0x70] sm:%s175]
                %213 = vst [vmem:[%s183 + $0x38] sm:%s175] %v212
                %v214 = vld [vmem:[%s182 + $0x78] sm:%s175]
                %215 = vst [vmem:[%s183 + $0x3c] sm:%s175] %v214
                %v216 = vld [vmem:[%s182 + $0x80] sm:%s175]
                %217 = vst [vmem:[%s183 + $0x40] sm:%s175] %v216
                %v218 = vld [vmem:[%s182 + $0x88] sm:%s175]
                %219 = vst [vmem:[%s183 + $0x44] sm:%s175] %v218
                %v220 = vld [vmem:[%s182 + $0x90] sm:%s175]
                %221 = vst [vmem:[%s183 + $0x48] sm:%s175] %v220
                %v222 = vld [vmem:[%s182 + $0x98] sm:%s175]
                %223 = vst [vmem:[%s183 + $0x4c] sm:%s175] %v222
                %v224 = vld [vmem:[%s182 + $0xa0] sm:%s175]
                %225 = vst [vmem:[%s183 + $0x50] sm:%s175] %v224
                %v226 = vld [vmem:[%s182 + $0xa8] sm:%s175]
                %227 = vst [vmem:[%s183 + $0x54] sm:%s175] %v226
                %v228 = vld [vmem:[%s182 + $0xb0] sm:%s175]
                %229 = vst [vmem:[%s183 + $0x58] sm:%s175] %v228
                %v230 = vld [vmem:[%s182 + $0xb8] sm:%s175]
                %231 = vst [vmem:[%s183 + $0x5c] sm:%s175] %v230
                %v232 = vld [vmem:[%s182 + $0xc0] sm:%s175]
                %233 = vst [vmem:[%s183 + $0x60] sm:%s175] %v232
                %v234 = vld [vmem:[%s182 + $0xc8] sm:%s175]
                %235 = vst [vmem:[%s183 + $0x64] sm:%s175] %v234
                %v236 = vld [vmem:[%s182 + $0xd0] sm:%s175]
                %237 = vst [vmem:[%s183 + $0x68] sm:%s175] %v236
                %v238 = vld [vmem:[%s182 + $0xd8] sm:%s175]
                %239 = vst [vmem:[%s183 + $0x6c] sm:%s175] %v238
                %v240 = vld [vmem:[%s182 + $0xe0] sm:%s175]
                %241 = vst [vmem:[%s183 + $0x70] sm:%s175] %v240
                %v242 = vld [vmem:[%s182 + $0xe8] sm:%s175]
                %243 = vst [vmem:[%s183 + $0x74] sm:%s175] %v242
                %v244 = vld [vmem:[%s182 + $0xf0] sm:%s175]
                %245 = vst [vmem:[%s183 + $0x78] sm:%s175] %v244
                %v246 = vld [vmem:[%s182 + $0xf8] sm:%s175]
                %247 = vst [vmem:[%s183 + $0x7c] sm:%s175] %v246
                %v248 = vld [vmem:[%s182 + $0x100] sm:%s175]
                %249 = vst [vmem:[%s183 + $0x80] sm:%s175] %v248
                %v250 = vld [vmem:[%s182 + $0x108] sm:%s175]
                %251 = vst [vmem:[%s183 + $0x84] sm:%s175] %v250
                %v252 = vld [vmem:[%s182 + $0x110] sm:%s175]
                %253 = vst [vmem:[%s183 + $0x88] sm:%s175] %v252
                %v254 = vld [vmem:[%s182 + $0x118] sm:%s175]
                %255 = vst [vmem:[%s183 + $0x8c] sm:%s175] %v254
                %v256 = vld [vmem:[%s182 + $0x120] sm:%s175]
                %257 = vst [vmem:[%s183 + $0x90] sm:%s175] %v256
                %v258 = vld [vmem:[%s182 + $0x128] sm:%s175]
                %259 = vst [vmem:[%s183 + $0x94] sm:%s175] %v258
                %v260 = vld [vmem:[%s182 + $0x130] sm:%s175]
                %261 = vst [vmem:[%s183 + $0x98] sm:%s175] %v260
                %v262 = vld [vmem:[%s182 + $0x138] sm:%s175]
                %263 = vst [vmem:[%s183 + $0x9c] sm:%s175] %v262
                %v264 = vld [vmem:[%s182 + $0x140] sm:%s175]
                %265 = vst [vmem:[%s183 + $0xa0] sm:%s175] %v264
                %v266 = vld [vmem:[%s182 + $0x148] sm:%s175]
                %267 = vst [vmem:[%s183 + $0xa4] sm:%s175] %v266
                %v268 = vld [vmem:[%s182 + $0x150] sm:%s175]
                %269 = vst [vmem:[%s183 + $0xa8] sm:%s175] %v268
                %v270 = vld [vmem:[%s182 + $0x158] sm:%s175]
                %271 = vst [vmem:[%s183 + $0xac] sm:%s175] %v270
                %v272 = vld [vmem:[%s182 + $0x160] sm:%s175]
                %273 = vst [vmem:[%s183 + $0xb0] sm:%s175] %v272
                %v274 = vld [vmem:[%s182 + $0x168] sm:%s175]
                %275 = vst [vmem:[%s183 + $0xb4] sm:%s175] %v274
                %v276 = vld [vmem:[%s182 + $0x170] sm:%s175]
                %277 = vst [vmem:[%s183 + $0xb8] sm:%s175] %v276
                %v278 = vld [vmem:[%s182 + $0x178] sm:%s175]
                %279 = vst [vmem:[%s183 + $0xbc] sm:%s175] %v278
                %v280 = vld [vmem:[%s182 + $0x180] sm:%s175]
                %281 = vst [vmem:[%s183 + $0xc0] sm:%s175] %v280
                %v282 = vld [vmem:[%s182 + $0x188] sm:%s175]
                %283 = vst [vmem:[%s183 + $0xc4] sm:%s175] %v282
                %v284 = vld [vmem:[%s182 + $0x190] sm:%s175]
                %285 = vst [vmem:[%s183 + $0xc8] sm:%s175] %v284
                %v286 = vld [vmem:[%s182 + $0x198] sm:%s175]
                %287 = vst [vmem:[%s183 + $0xcc] sm:%s175] %v286
                %v288 = vld [vmem:[%s182 + $0x1a0] sm:%s175]
                %289 = vst [vmem:[%s183 + $0xd0] sm:%s175] %v288
                %v290 = vld [vmem:[%s182 + $0x1a8] sm:%s175]
                %291 = vst [vmem:[%s183 + $0xd4] sm:%s175] %v290
                %v292 = vld [vmem:[%s182 + $0x1b0] sm:%s175]
                %293 = vst [vmem:[%s183 + $0xd8] sm:%s175] %v292
                %v294 = vld [vmem:[%s182 + $0x1b8] sm:%s175]
                %295 = vst [vmem:[%s183 + $0xdc] sm:%s175] %v294
                %v296 = vld [vmem:[%s182 + $0x1c0] sm:%s175]
                %297 = vst [vmem:[%s183 + $0xe0] sm:%s175] %v296
                %v298 = vld [vmem:[%s182 + $0x1c8] sm:%s175]
                %299 = vst [vmem:[%s183 + $0xe4] sm:%s175] %v298
                %v300 = vld [vmem:[%s182 + $0x1d0] sm:%s175]
                %301 = vst [vmem:[%s183 + $0xe8] sm:%s175] %v300
                %v302 = vld [vmem:[%s182 + $0x1d8] sm:%s175]
                %303 = vst [vmem:[%s183 + $0xec] sm:%s175] %v302
                %v304 = vld [vmem:[%s182 + $0x1e0] sm:%s175]
                %305 = vst [vmem:[%s183 + $0xf0] sm:%s175] %v304
                %v306 = vld [vmem:[%s182 + $0x1e8] sm:%s175]
                %307 = vst [vmem:[%s183 + $0xf4] sm:%s175] %v306
                %v308 = vld [vmem:[%s182 + $0x1f0] sm:%s175]
                %309 = vst [vmem:[%s183 + $0xf8] sm:%s175] %v308
                %v310 = vld [vmem:[%s182 + $0x1f8] sm:%s175]
                %311 = vst [vmem:[%s183 + $0xfc] sm:%s175] %v310
              $region33: #{graphsage_forward.7} parent=27 // loop_footer
                %s181 = sadd.s32 1, %s177
              $region34: #{graphsage_forward.7} parent=27 // loop_footer_branch
                %176 = sbr.rel target = $region30
              $region35: #{graphsage_forward.7} parent=27 // loop_exit
                _
            $region28: #{graphsage_forward.7} parent=19 // pred_fallthru
              _
          $region20: #{graphsage_forward.7} parent=15 // pred_fallthru
            _
          %460 = vnop
        $region16: #{graphsage_forward.7} parent=11 // pred_fallthru
          _
      $region12: #{graphsage_forward.7} parent=5 // pred_fallthru
        _
      %p461 = scmp.lt.s32.totalorder %s10, 2
      // Predicated region
      $region54: #{graphsage_forward.7} parent=5 // pred_check
        %p462 = pneg %p461
      $region55: #{graphsage_forward.7} parent=5 // pred_check_branch
        %464 = sbr.rel (%p462) target = $region57
      $region56: #{graphsage_forward.7} parent=5 // pred_region
        // Predicated region
        $region58: #{graphsage_forward.7} parent=56 // pred_check
          %p465 = pneg %p44
        $region59: #{graphsage_forward.7} parent=56 // pred_check_branch
          %467 = sbr.rel (%p465) target = $region61
        $region60: #{graphsage_forward.7} parent=56 // pred_region
          %s468 = smul.u32 8, %s17
          %s469 = smul.u32 4, %s18
          %p470 = scmp.lt.s32.totalorder %s468, 15
          %s471 = scalar_select %p470, %s468, 15
          %p472 = scmp.lt.s32.totalorder %s469, 3
          %s473 = scalar_select %p472, %s469, 3
          %s474 = smul.addr %s471, 4
          %s475 = sadd.s32 %s473, %s474
          %s476 = smul.addr %s475, 8
          %s477 = scalar_lea.vmem %s0, %s476
          %s478 = smul.u32 8, %s17
          %s479 = smul.u32 4, %s18
        $region61: #{graphsage_forward.7} parent=56 // pred_fallthru
          _
        // Predicated region
        $region62: #{graphsage_forward.7} parent=56 // pred_check
          %p480 = pneg %p91
        $region63: #{graphsage_forward.7} parent=56 // pred_check_branch
          %482 = sbr.rel (%p480) target = $region65
        $region64: #{graphsage_forward.7} parent=56 // pred_region
          %s483 = sand.u32 %s81, 1
          %s484 = sand.u32 %s81, 1
          %s485 = smul.addr %s484, 128
          %s486 = scalar_lea.vmem [#allocation4], %s485
          %s487 = smul.u32 32, %s17
          %s488 = smul.addr %s487, 2
          %s489 = smul.addr %s488, 4
          %s490 = scalar_lea.vmem %s2, %s489
          // Predicated region
          $region66: #{graphsage_forward.7} parent=64 // pred_check
            _
          $region67: #{graphsage_forward.7} parent=64 // pred_check_branch
            %492 = sbr.rel (0) target = $region69
          $region68: #{graphsage_forward.7} parent=64 // pred_region
            // Predicated region
            $region70: #{graphsage_forward.7} parent=68 // pred_check
              _
            $region71: #{graphsage_forward.7} parent=68 // pred_check_branch
              %494 = sbr.rel target = $region73
            $region72: #{graphsage_forward.7} parent=68 // pred_region
              // Predicated region
              $region85: #{graphsage_forward.7} parent=72 // pred_check
                _
              $region86: #{graphsage_forward.7} parent=72 // pred_check_branch
                %572 = sbr.rel (0) target = $region88
              $region87: #{graphsage_forward.7} parent=72 // pred_region
                loop: start=0, step=1, limit=1
                $region89: #{graphsage_forward.7} parent=87 // loop_pre_header
                  _
                $region90: #{graphsage_forward.7} parent=87 // loop_header
                  %s574 = sphi 0, %s578
                  %p575 = scmp.ge.s32.totalorder %s574, 1
                  %s579 = sphi %s490, %s490
                  %s580 = sphi %s486, %s486
                $region91: #{graphsage_forward.7} parent=87 // loop_header_branch
                  %577 = sbr.rel (%p575) target = $region95
                $region92: #{graphsage_forward.7} parent=87 // loop_body
                  _
                $region93: #{graphsage_forward.7} parent=87 // loop_footer
                  %s578 = sadd.s32 1, %s574
                $region94: #{graphsage_forward.7} parent=87 // loop_footer_branch
                  %573 = sbr.rel target = $region90
                $region95: #{graphsage_forward.7} parent=87 // loop_exit
                  _
                %s582 = ssub.s32 16, 1
                loop: start=0, step=1, limit=1
                $region96: #{graphsage_forward.7} parent=87 // loop_pre_header
                  _
                $region97: #{graphsage_forward.7} parent=87 // loop_header
                  %s584 = sphi 0, %s588
                  %p585 = scmp.ge.s32.totalorder %s584, 1
                  %s589 = sphi %s490, %s490
                  %s590 = sphi %s486, %s486
                $region98: #{graphsage_forward.7} parent=87 // loop_header_branch
                  %587 = sbr.rel (%p585) target = $region102
                $region99: #{graphsage_forward.7} parent=87 // loop_body
                  %v591 = vld [vmem:[%s589] sm:%s582]
                  %592 = vst [vmem:[%s590] sm:%s582] %v591
                  %v593 = vld [vmem:[%s589 + $0x8] sm:%s582]
                  %594 = vst [vmem:[%s590 + $0x4] sm:%s582] %v593
                  %v595 = vld [vmem:[%s589 + $0x10] sm:%s582]
                  %596 = vst [vmem:[%s590 + $0x8] sm:%s582] %v595
                  %v597 = vld [vmem:[%s589 + $0x18] sm:%s582]
                  %598 = vst [vmem:[%s590 + $0xc] sm:%s582] %v597
                  %v599 = vld [vmem:[%s589 + $0x20] sm:%s582]
                  %600 = vst [vmem:[%s590 + $0x10] sm:%s582] %v599
                  %v601 = vld [vmem:[%s589 + $0x28] sm:%s582]
                  %602 = vst [vmem:[%s590 + $0x14] sm:%s582] %v601
                  %v603 = vld [vmem:[%s589 + $0x30] sm:%s582]
                  %604 = vst [vmem:[%s590 + $0x18] sm:%s582] %v603
                  %v605 = vld [vmem:[%s589 + $0x38] sm:%s582]
                  %606 = vst [vmem:[%s590 + $0x1c] sm:%s582] %v605
                  %v607 = vld [vmem:[%s589 + $0x40] sm:%s582]
                  %608 = vst [vmem:[%s590 + $0x20] sm:%s582] %v607
                  %v609 = vld [vmem:[%s589 + $0x48] sm:%s582]
                  %610 = vst [vmem:[%s590 + $0x24] sm:%s582] %v609
                  %v611 = vld [vmem:[%s589 + $0x50] sm:%s582]
                  %612 = vst [vmem:[%s590 + $0x28] sm:%s582] %v611
                  %v613 = vld [vmem:[%s589 + $0x58] sm:%s582]
                  %614 = vst [vmem:[%s590 + $0x2c] sm:%s582] %v613
                  %v615 = vld [vmem:[%s589 + $0x60] sm:%s582]
                  %616 = vst [vmem:[%s590 + $0x30] sm:%s582] %v615
                  %v617 = vld [vmem:[%s589 + $0x68] sm:%s582]
                  %618 = vst [vmem:[%s590 + $0x34] sm:%s582] %v617
                  %v619 = vld [vmem:[%s589 + $0x70] sm:%s582]
                  %620 = vst [vmem:[%s590 + $0x38] sm:%s582] %v619
                  %v621 = vld [vmem:[%s589 + $0x78] sm:%s582]
                  %622 = vst [vmem:[%s590 + $0x3c] sm:%s582] %v621
                  %v623 = vld [vmem:[%s589 + $0x80] sm:%s582]
                  %624 = vst [vmem:[%s590 + $0x40] sm:%s582] %v623
                  %v625 = vld [vmem:[%s589 + $0x88] sm:%s582]
                  %626 = vst [vmem:[%s590 + $0x44] sm:%s582] %v625
                  %v627 = vld [vmem:[%s589 + $0x90] sm:%s582]
                  %628 = vst [vmem:[%s590 + $0x48] sm:%s582] %v627
                  %v629 = vld [vmem:[%s589 + $0x98] sm:%s582]
                  %630 = vst [vmem:[%s590 + $0x4c] sm:%s582] %v629
                  %v631 = vld [vmem:[%s589 + $0xa0] sm:%s582]
                  %632 = vst [vmem:[%s590 + $0x50] sm:%s582] %v631
                  %v633 = vld [vmem:[%s589 + $0xa8] sm:%s582]
                  %634 = vst [vmem:[%s590 + $0x54] sm:%s582] %v633
                  %v635 = vld [vmem:[%s589 + $0xb0] sm:%s582]
                  %636 = vst [vmem:[%s590 + $0x58] sm:%s582] %v635
                  %v637 = vld [vmem:[%s589 + $0xb8] sm:%s582]
                  %638 = vst [vmem:[%s590 + $0x5c] sm:%s582] %v637
                  %v639 = vld [vmem:[%s589 + $0xc0] sm:%s582]
                  %640 = vst [vmem:[%s590 + $0x60] sm:%s582] %v639
                  %v641 = vld [vmem:[%s589 + $0xc8] sm:%s582]
                  %642 = vst [vmem:[%s590 + $0x64] sm:%s582] %v641
                  %v643 = vld [vmem:[%s589 + $0xd0] sm:%s582]
                  %644 = vst [vmem:[%s590 + $0x68] sm:%s582] %v643
                  %v645 = vld [vmem:[%s589 + $0xd8] sm:%s582]
                  %646 = vst [vmem:[%s590 + $0x6c] sm:%s582] %v645
                  %v647 = vld [vmem:[%s589 + $0xe0] sm:%s582]
                  %648 = vst [vmem:[%s590 + $0x70] sm:%s582] %v647
                  %v649 = vld [vmem:[%s589 + $0xe8] sm:%s582]
                  %650 = vst [vmem:[%s590 + $0x74] sm:%s582] %v649
                  %v651 = vld [vmem:[%s589 + $0xf0] sm:%s582]
                  %652 = vst [vmem:[%s590 + $0x78] sm:%s582] %v651
                  %v653 = vld [vmem:[%s589 + $0xf8] sm:%s582]
                  %654 = vst [vmem:[%s590 + $0x7c] sm:%s582] %v653
                $region100: #{graphsage_forward.7} parent=87 // loop_footer
                  %s588 = sadd.s32 1, %s584
                $region101: #{graphsage_forward.7} parent=87 // loop_footer_branch
                  %583 = sbr.rel target = $region97
                $region102: #{graphsage_forward.7} parent=87 // loop_exit
                  _
              $region88: #{graphsage_forward.7} parent=72 // pred_fallthru
                _
            $region73: #{graphsage_forward.7} parent=68 // pred_fallthru
              _
            // Predicated region
            $region74: #{graphsage_forward.7} parent=68 // pred_check
              _
            $region75: #{graphsage_forward.7} parent=68 // pred_check_branch
              %496 = sbr.rel (0) target = $region77
            $region76: #{graphsage_forward.7} parent=68 // pred_region
              %s498 = ssub.s32 16, 1
              loop: start=0, step=1, limit=1
              $region78: #{graphsage_forward.7} parent=76 // loop_pre_header
                _
              $region79: #{graphsage_forward.7} parent=76 // loop_header
                %s500 = sphi 0, %s504
                %p501 = scmp.ge.s32.totalorder %s500, 1
                %s505 = sphi %s490, %s490
                %s506 = sphi %s486, %s486
              $region80: #{graphsage_forward.7} parent=76 // loop_header_branch
                %503 = sbr.rel (%p501) target = $region84
              $region81: #{graphsage_forward.7} parent=76 // loop_body
                %v507 = vld [vmem:[%s505] sm:%s498]
                %508 = vst [vmem:[%s506] sm:%s498] %v507
                %v509 = vld [vmem:[%s505 + $0x8] sm:%s498]
                %510 = vst [vmem:[%s506 + $0x4] sm:%s498] %v509
                %v511 = vld [vmem:[%s505 + $0x10] sm:%s498]
                %512 = vst [vmem:[%s506 + $0x8] sm:%s498] %v511
                %v513 = vld [vmem:[%s505 + $0x18] sm:%s498]
                %514 = vst [vmem:[%s506 + $0xc] sm:%s498] %v513
                %v515 = vld [vmem:[%s505 + $0x20] sm:%s498]
                %516 = vst [vmem:[%s506 + $0x10] sm:%s498] %v515
                %v517 = vld [vmem:[%s505 + $0x28] sm:%s498]
                %518 = vst [vmem:[%s506 + $0x14] sm:%s498] %v517
                %v519 = vld [vmem:[%s505 + $0x30] sm:%s498]
                %520 = vst [vmem:[%s506 + $0x18] sm:%s498] %v519
                %v521 = vld [vmem:[%s505 + $0x38] sm:%s498]
                %522 = vst [vmem:[%s506 + $0x1c] sm:%s498] %v521
                %v523 = vld [vmem:[%s505 + $0x40] sm:%s498]
                %524 = vst [vmem:[%s506 + $0x20] sm:%s498] %v523
                %v525 = vld [vmem:[%s505 + $0x48] sm:%s498]
                %526 = vst [vmem:[%s506 + $0x24] sm:%s498] %v525
                %v527 = vld [vmem:[%s505 + $0x50] sm:%s498]
                %528 = vst [vmem:[%s506 + $0x28] sm:%s498] %v527
                %v529 = vld [vmem:[%s505 + $0x58] sm:%s498]
                %530 = vst [vmem:[%s506 + $0x2c] sm:%s498] %v529
                %v531 = vld [vmem:[%s505 + $0x60] sm:%s498]
                %532 = vst [vmem:[%s506 + $0x30] sm:%s498] %v531
                %v533 = vld [vmem:[%s505 + $0x68] sm:%s498]
                %534 = vst [vmem:[%s506 + $0x34] sm:%s498] %v533
                %v535 = vld [vmem:[%s505 + $0x70] sm:%s498]
                %536 = vst [vmem:[%s506 + $0x38] sm:%s498] %v535
                %v537 = vld [vmem:[%s505 + $0x78] sm:%s498]
                %538 = vst [vmem:[%s506 + $0x3c] sm:%s498] %v537
                %v539 = vld [vmem:[%s505 + $0x80] sm:%s498]
                %540 = vst [vmem:[%s506 + $0x40] sm:%s498] %v539
                %v541 = vld [vmem:[%s505 + $0x88] sm:%s498]
                %542 = vst [vmem:[%s506 + $0x44] sm:%s498] %v541
                %v543 = vld [vmem:[%s505 + $0x90] sm:%s498]
                %544 = vst [vmem:[%s506 + $0x48] sm:%s498] %v543
                %v545 = vld [vmem:[%s505 + $0x98] sm:%s498]
                %546 = vst [vmem:[%s506 + $0x4c] sm:%s498] %v545
                %v547 = vld [vmem:[%s505 + $0xa0] sm:%s498]
                %548 = vst [vmem:[%s506 + $0x50] sm:%s498] %v547
                %v549 = vld [vmem:[%s505 + $0xa8] sm:%s498]
                %550 = vst [vmem:[%s506 + $0x54] sm:%s498] %v549
                %v551 = vld [vmem:[%s505 + $0xb0] sm:%s498]
                %552 = vst [vmem:[%s506 + $0x58] sm:%s498] %v551
                %v553 = vld [vmem:[%s505 + $0xb8] sm:%s498]
                %554 = vst [vmem:[%s506 + $0x5c] sm:%s498] %v553
                %v555 = vld [vmem:[%s505 + $0xc0] sm:%s498]
                %556 = vst [vmem:[%s506 + $0x60] sm:%s498] %v555
                %v557 = vld [vmem:[%s505 + $0xc8] sm:%s498]
                %558 = vst [vmem:[%s506 + $0x64] sm:%s498] %v557
                %v559 = vld [vmem:[%s505 + $0xd0] sm:%s498]
                %560 = vst [vmem:[%s506 + $0x68] sm:%s498] %v559
                %v561 = vld [vmem:[%s505 + $0xd8] sm:%s498]
                %562 = vst [vmem:[%s506 + $0x6c] sm:%s498] %v561
                %v563 = vld [vmem:[%s505 + $0xe0] sm:%s498]
                %564 = vst [vmem:[%s506 + $0x70] sm:%s498] %v563
                %v565 = vld [vmem:[%s505 + $0xe8] sm:%s498]
                %566 = vst [vmem:[%s506 + $0x74] sm:%s498] %v565
                %v567 = vld [vmem:[%s505 + $0xf0] sm:%s498]
                %568 = vst [vmem:[%s506 + $0x78] sm:%s498] %v567
                %v569 = vld [vmem:[%s505 + $0xf8] sm:%s498]
                %570 = vst [vmem:[%s506 + $0x7c] sm:%s498] %v569
              $region82: #{graphsage_forward.7} parent=76 // loop_footer
                %s504 = sadd.s32 1, %s500
              $region83: #{graphsage_forward.7} parent=76 // loop_footer_branch
                %499 = sbr.rel target = $region79
              $region84: #{graphsage_forward.7} parent=76 // loop_exit
                _
            $region77: #{graphsage_forward.7} parent=68 // pred_fallthru
              _
          $region69: #{graphsage_forward.7} parent=64 // pred_fallthru
            _
          %655 = vnop
        $region65: #{graphsage_forward.7} parent=56 // pred_fallthru
          _
        // Predicated region
        $region103: #{graphsage_forward.7} parent=56 // pred_check
          %p656 = pneg %p117
        $region104: #{graphsage_forward.7} parent=56 // pred_check_branch
          %658 = sbr.rel (%p656) target = $region106
        $region105: #{graphsage_forward.7} parent=56 // pred_region
          %s659 = smul.u32 32, %s17
          %p660 = scmp.lt.s32.totalorder %s659, 63
          %s661 = scalar_select %p660, %s659, 63
          %s662 = smul.addr %s661, 8
          %s663 = scalar_lea.vmem %s3, %s662
          %s664 = smul.u32 32, %s17
        $region106: #{graphsage_forward.7} parent=56 // pred_fallthru
          _
      $region57: #{graphsage_forward.7} parent=5 // pred_fallthru
        _
      %p665 = scmp.le.s32.totalorder 1, %s10
      %p666 = scmp.lt.s32.totalorder %s10, 3
      %p667 = pnand %p665, %p666
      %p668 = pneg %p667
      // Predicated region
      $region107: #{graphsage_forward.7} parent=5 // pred_check
        _
      $region108: #{graphsage_forward.7} parent=5 // pred_check_branch
        %670 = sbr.rel (%p667) target = $region110
      $region109: #{graphsage_forward.7} parent=5 // pred_region
        %s671 = ssub.s32 %s10, 1
        // Predicated region
        $region111: #{graphsage_forward.7} parent=109 // pred_check
          %p672 = pneg %p71
        $region112: #{graphsage_forward.7} parent=109 // pred_check_branch
          %674 = sbr.rel (%p672) target = $region114
        $region113: #{graphsage_forward.7} parent=109 // pred_region
          _
        $region114: #{graphsage_forward.7} parent=109 // pred_fallthru
          _
        %s675 = sand.u32 %s84, 1
        %s676 = sand.u32 %s84, 1
        %s677 = smul.addr %s676, 128
        %s678 = scalar_lea.vmem [#allocation4], %s677
        // Predicated region
        $region115: #{graphsage_forward.7} parent=109 // pred_check
          %p679 = pneg %p97
        $region116: #{graphsage_forward.7} parent=109 // pred_check_branch
          %681 = sbr.rel (%p679) target = $region118
        $region117: #{graphsage_forward.7} parent=109 // pred_region
          _
        $region118: #{graphsage_forward.7} parent=109 // pred_fallthru
          _
        %s682 = smul.u32 8, %s19
        %s683 = smul.u32 4, %s20
        %p684 = scmp.lt.s32.totalorder %s682, 15
        %s685 = scalar_select %p684, %s682, 15
        %p686 = scmp.lt.s32.totalorder %s683, 3
        %s687 = scalar_select %p686, %s683, 3
        %s688 = smul.addr %s685, 4
        %s689 = sadd.s32 %s687, %s688
        %s690 = smul.addr %s689, 8
        %s691 = scalar_lea.vmem %s0, %s690
        %p692 = pneg %p50
        %p693 = pneg %p47
        %p694 = pneg %p71
        %p695 = pneg %p68
        %s696 = sand.u32 %s84, 1
        %s697 = sand.u32 %s84, 1
        %s698 = smul.addr %s697, 128
        %s699 = scalar_lea.vmem [#allocation4], %s698
        %p700 = pneg %p97
        %p701 = pneg %p94
        %s702 = smul.u32 32, %s19
        %p703 = scmp.lt.s32.totalorder %s702, 63
        %s704 = scalar_select %p703, %s702, 63
        %s705 = smul.addr %s704, 8
        %s706 = scalar_lea.vmem %s3, %s705
        %p707 = pneg %p123
        %p708 = pneg %p120
        %p709 = pneg %p149
        %p710 = pneg %p146
        %s711 = smul.u32 32, %s19
        %p712 = scmp.lt.s32.totalorder %s711, 63
        %s713 = scalar_select %p712, %s711, 63
        %s714 = smul.addr %s713, 4
        %s715 = scalar_lea.vmem %s4, %s714
        %s716 = smul.u32 8, %s19
        %s717 = smul.u32 4, %s20
        %p718 = scmp.lt.s32.totalorder %s716, 15
        %s719 = scalar_select %p718, %s716, 15
        %p720 = scmp.lt.s32.totalorder %s717, 3
        %s721 = scalar_select %p720, %s717, 3
        %s722 = smul.addr %s719, 4
        %s723 = sadd.s32 %s721, %s722
        %s724 = smul.addr %s723, 8
        %s725 = scalar_lea.vmem %s0, %s724
        %s726 = smul.u32 8, %s19
        %s727 = smul.u32 4, %s20
        %s728 = smul.u32 32, %s19
        %s729 = smul.u32 32, %s19
        %p730 = scmp.lt.s32.totalorder %s729, 63
        %s731 = scalar_select %p730, %s729, 63
        %s732 = smul.addr %s731, 8
        %s733 = scalar_lea.vmem %s3, %s732
        %s734 = smul.u32 32, %s19
        %s735 = smul.u32 32, %s19
        %p736 = scmp.lt.s32.totalorder %s735, 63
        %s737 = scalar_select %p736, %s735, 63
        %s738 = smul.addr %s737, 4
        %s739 = scalar_lea.vmem %s4, %s738
        %s740 = smul.u32 32, %s19
        %p742 = scmp.eq.s32.totalorder %s20, 0
        // Predicated region
        $region119: #{graphsage_forward.7} parent=109 // pred_check
          %p743 = pneg %p742
        $region120: #{graphsage_forward.7} parent=109 // pred_check_branch
          %745 = sbr.rel (%p743) target = $region122
        $region121: #{graphsage_forward.7} parent=109 // pred_region
          %746 = vst [vmem:[#allocation2] sm:$0xff] 0.0
          %747 = vst [vmem:[#allocation2 + $0x8] sm:$0xff] 0.0
          %748 = vst [vmem:[#allocation2 + $0x10] sm:$0xff] 0.0
          %749 = vst [vmem:[#allocation2 + $0x18] sm:$0xff] 0.0
          %750 = vst [vmem:[#allocation2 + $0x20] sm:$0xff] 0.0
          %751 = vst [vmem:[#allocation2 + $0x28] sm:$0xff] 0.0
          %752 = vst [vmem:[#allocation2 + $0x30] sm:$0xff] 0.0
          %753 = vst [vmem:[#allocation2 + $0x38] sm:$0xff] 0.0
          %754 = vst [vmem:[#allocation2 + $0x40] sm:$0xff] 0.0
          %755 = vst [vmem:[#allocation2 + $0x48] sm:$0xff] 0.0
          %756 = vst [vmem:[#allocation2 + $0x50] sm:$0xff] 0.0
          %757 = vst [vmem:[#allocation2 + $0x58] sm:$0xff] 0.0
          %758 = vst [vmem:[#allocation2 + $0x60] sm:$0xff] 0.0
          %759 = vst [vmem:[#allocation2 + $0x68] sm:$0xff] 0.0
          %760 = vst [vmem:[#allocation2 + $0x70] sm:$0xff] 0.0
          %761 = vst [vmem:[#allocation2 + $0x78] sm:$0xff] 0.0
          %762 = vst [vmem:[#allocation2 + $0x80] sm:$0xff] 0.0
          %763 = vst [vmem:[#allocation2 + $0x88] sm:$0xff] 0.0
          %764 = vst [vmem:[#allocation2 + $0x90] sm:$0xff] 0.0
          %765 = vst [vmem:[#allocation2 + $0x98] sm:$0xff] 0.0
          %766 = vst [vmem:[#allocation2 + $0xa0] sm:$0xff] 0.0
          %767 = vst [vmem:[#allocation2 + $0xa8] sm:$0xff] 0.0
          %768 = vst [vmem:[#allocation2 + $0xb0] sm:$0xff] 0.0
          %769 = vst [vmem:[#allocation2 + $0xb8] sm:$0xff] 0.0
          %770 = vst [vmem:[#allocation2 + $0xc0] sm:$0xff] 0.0
          %771 = vst [vmem:[#allocation2 + $0xc8] sm:$0xff] 0.0
          %772 = vst [vmem:[#allocation2 + $0xd0] sm:$0xff] 0.0
          %773 = vst [vmem:[#allocation2 + $0xd8] sm:$0xff] 0.0
          %774 = vst [vmem:[#allocation2 + $0xe0] sm:$0xff] 0.0
          %775 = vst [vmem:[#allocation2 + $0xe8] sm:$0xff] 0.0
          %776 = vst [vmem:[#allocation2 + $0xf0] sm:$0xff] 0.0
          %777 = vst [vmem:[#allocation2 + $0xf8] sm:$0xff] 0.0
        $region122: #{graphsage_forward.7} parent=109 // pred_fallthru
          _
        %v778 = vld [vmem:[%s725] sm:$0xff]
        %v779 = vld [vmem:[%s725 + $0x8] sm:$0xff]
        %v780 = vld [vmem:[%s725 + $0x10] sm:$0xff]
        %v781 = vld [vmem:[%s725 + $0x18] sm:$0xff]
        %v782 = vld [vmem:[%s725 + $0x20] sm:$0xff]
        %v783 = vld [vmem:[%s725 + $0x28] sm:$0xff]
        %v784 = vld [vmem:[%s725 + $0x30] sm:$0xff]
        %v785 = vld [vmem:[%s725 + $0x38] sm:$0xff]
        %v786 = vld [vmem:[%s725 + $0x40] sm:$0xff]
        %v787 = vld [vmem:[%s725 + $0x48] sm:$0xff]
        %v788 = vld [vmem:[%s725 + $0x50] sm:$0xff]
        %v789 = vld [vmem:[%s725 + $0x58] sm:$0xff]
        %v790 = vld [vmem:[%s725 + $0x60] sm:$0xff]
        %v791 = vld [vmem:[%s725 + $0x68] sm:$0xff]
        %v792 = vld [vmem:[%s725 + $0x70] sm:$0xff]
        %v793 = vld [vmem:[%s725 + $0x78] sm:$0xff]
        %v794 = vld [vmem:[%s725 + $0x80] sm:$0xff]
        %v795 = vld [vmem:[%s725 + $0x88] sm:$0xff]
        %v796 = vld [vmem:[%s725 + $0x90] sm:$0xff]
        %v797 = vld [vmem:[%s725 + $0x98] sm:$0xff]
        %v798 = vld [vmem:[%s725 + $0xa0] sm:$0xff]
        %v799 = vld [vmem:[%s725 + $0xa8] sm:$0xff]
        %v800 = vld [vmem:[%s725 + $0xb0] sm:$0xff]
        %v801 = vld [vmem:[%s725 + $0xb8] sm:$0xff]
        %v802 = vld [vmem:[%s725 + $0xc0] sm:$0xff]
        %v803 = vld [vmem:[%s725 + $0xc8] sm:$0xff]
        %v804 = vld [vmem:[%s725 + $0xd0] sm:$0xff]
        %v805 = vld [vmem:[%s725 + $0xd8] sm:$0xff]
        %v806 = vld [vmem:[%s725 + $0xe0] sm:$0xff]
        %v807 = vld [vmem:[%s725 + $0xe8] sm:$0xff]
        %v808 = vld [vmem:[%s725 + $0xf0] sm:$0xff]
        %v809 = vld [vmem:[%s725 + $0xf8] sm:$0xff]
        %v810 = vunpack.c.l.s8.bf16 %v778
        %v811 = vunpack.c.l.s8.bf16 %v779
        %v812 = vunpack.c.l.s8.bf16 %v780
        %v813 = vunpack.c.l.s8.bf16 %v781
        %v814 = vunpack.c.h.s8.bf16 %v778
        %v815 = vunpack.c.h.s8.bf16 %v779
        %v816 = vunpack.c.h.s8.bf16 %v780
        %v817 = vunpack.c.h.s8.bf16 %v781
        %v818 = vunpack.c.l.s8.bf16 %v782
        %v819 = vunpack.c.l.s8.bf16 %v783
        %v820 = vunpack.c.l.s8.bf16 %v784
        %v821 = vunpack.c.l.s8.bf16 %v785
        %v822 = vunpack.c.h.s8.bf16 %v782
        %v823 = vunpack.c.h.s8.bf16 %v783
        %v824 = vunpack.c.h.s8.bf16 %v784
        %v825 = vunpack.c.h.s8.bf16 %v785
        %v826 = vunpack.c.l.s8.bf16 %v786
        %v827 = vunpack.c.l.s8.bf16 %v787
        %v828 = vunpack.c.l.s8.bf16 %v788
        %v829 = vunpack.c.l.s8.bf16 %v789
        %v830 = vunpack.c.h.s8.bf16 %v786
        %v831 = vunpack.c.h.s8.bf16 %v787
        %v832 = vunpack.c.h.s8.bf16 %v788
        %v833 = vunpack.c.h.s8.bf16 %v789
        %v834 = vunpack.c.l.s8.bf16 %v790
        %v835 = vunpack.c.l.s8.bf16 %v791
        %v836 = vunpack.c.l.s8.bf16 %v792
        %v837 = vunpack.c.l.s8.bf16 %v793
        %v838 = vunpack.c.h.s8.bf16 %v790
        %v839 = vunpack.c.h.s8.bf16 %v791
        %v840 = vunpack.c.h.s8.bf16 %v792
        %v841 = vunpack.c.h.s8.bf16 %v793
        %v842 = vunpack.c.l.s8.bf16 %v794
        %v843 = vunpack.c.l.s8.bf16 %v795
        %v844 = vunpack.c.l.s8.bf16 %v796
        %v845 = vunpack.c.l.s8.bf16 %v797
        %v846 = vunpack.c.h.s8.bf16 %v794
        %v847 = vunpack.c.h.s8.bf16 %v795
        %v848 = vunpack.c.h.s8.bf16 %v796
        %v849 = vunpack.c.h.s8.bf16 %v797
        %v850 = vunpack.c.l.s8.bf16 %v798
        %v851 = vunpack.c.l.s8.bf16 %v799
        %v852 = vunpack.c.l.s8.bf16 %v800
        %v853 = vunpack.c.l.s8.bf16 %v801
        %v854 = vunpack.c.h.s8.bf16 %v798
        %v855 = vunpack.c.h.s8.bf16 %v799
        %v856 = vunpack.c.h.s8.bf16 %v800
        %v857 = vunpack.c.h.s8.bf16 %v801
        %v858 = vunpack.c.l.s8.bf16 %v802
        %v859 = vunpack.c.l.s8.bf16 %v803
        %v860 = vunpack.c.l.s8.bf16 %v804
        %v861 = vunpack.c.l.s8.bf16 %v805
        %v862 = vunpack.c.h.s8.bf16 %v802
        %v863 = vunpack.c.h.s8.bf16 %v803
        %v864 = vunpack.c.h.s8.bf16 %v804
        %v865 = vunpack.c.h.s8.bf16 %v805
        %v866 = vunpack.c.l.s8.bf16 %v806
        %v867 = vunpack.c.l.s8.bf16 %v807
        %v868 = vunpack.c.l.s8.bf16 %v808
        %v869 = vunpack.c.l.s8.bf16 %v809
        %v870 = vunpack.c.h.s8.bf16 %v806
        %v871 = vunpack.c.h.s8.bf16 %v807
        %v872 = vunpack.c.h.s8.bf16 %v808
        %v873 = vunpack.c.h.s8.bf16 %v809
        %s874 = smul.u32 %s20, 512
        %s875 = sshra.s32 %s874, 3
        %s876 = sand.u32 %s874, 7
        %s877 = smul.addr %s875, 4
        %s878 = scalar_lea.vmem [#allocation3], %s877
        %v879 = vld [vmem:[%s878] sm:$0xf]
        %v880 = vld [vmem:[%s878 + $0x4] sm:$0xf]
        %v881 = vld [vmem:[%s878 + $0x8] sm:$0xf]
        %v882 = vld [vmem:[%s878 + $0xc] sm:$0xf]
        %v883 = vld [vmem:[%s878 + $0x10] sm:$0xf]
        %v884 = vld [vmem:[%s878 + $0x14] sm:$0xf]
        %v885 = vld [vmem:[%s878 + $0x18] sm:$0xf]
        %v886 = vld [vmem:[%s878 + $0x1c] sm:$0xf]
        %v887 = vld [vmem:[%s878 + $0x20] sm:$0xf]
        %v888 = vld [vmem:[%s878 + $0x24] sm:$0xf]
        %v889 = vld [vmem:[%s878 + $0x28] sm:$0xf]
        %v890 = vld [vmem:[%s878 + $0x2c] sm:$0xf]
        %v891 = vld [vmem:[%s878 + $0x30] sm:$0xf]
        %v892 = vld [vmem:[%s878 + $0x34] sm:$0xf]
        %v893 = vld [vmem:[%s878 + $0x38] sm:$0xf]
        %v894 = vld [vmem:[%s878 + $0x3c] sm:$0xf]
        %v895 = vld [vmem:[%s878 + $0x40] sm:$0xf]
        %v896 = vld [vmem:[%s878 + $0x44] sm:$0xf]
        %v897 = vld [vmem:[%s878 + $0x48] sm:$0xf]
        %v898 = vld [vmem:[%s878 + $0x4c] sm:$0xf]
        %v899 = vld [vmem:[%s878 + $0x50] sm:$0xf]
        %v900 = vld [vmem:[%s878 + $0x54] sm:$0xf]
        %v901 = vld [vmem:[%s878 + $0x58] sm:$0xf]
        %v902 = vld [vmem:[%s878 + $0x5c] sm:$0xf]
        %v903 = vld [vmem:[%s878 + $0x60] sm:$0xf]
        %v904 = vld [vmem:[%s878 + $0x64] sm:$0xf]
        %v905 = vld [vmem:[%s878 + $0x68] sm:$0xf]
        %v906 = vld [vmem:[%s878 + $0x6c] sm:$0xf]
        %v907 = vld [vmem:[%s878 + $0x70] sm:$0xf]
        %v908 = vld [vmem:[%s878 + $0x74] sm:$0xf]
        %v909 = vld [vmem:[%s878 + $0x78] sm:$0xf]
        %v910 = vld [vmem:[%s878 + $0x7c] sm:$0xf]
        %v911 = vld [vmem:[%s878 + $0x80] sm:$0xf]
        %v912 = vld [vmem:[%s878 + $0x84] sm:$0xf]
        %v913 = vld [vmem:[%s878 + $0x88] sm:$0xf]
        %v914 = vld [vmem:[%s878 + $0x8c] sm:$0xf]
        %v915 = vld [vmem:[%s878 + $0x90] sm:$0xf]
        %v916 = vld [vmem:[%s878 + $0x94] sm:$0xf]
        %v917 = vld [vmem:[%s878 + $0x98] sm:$0xf]
        %v918 = vld [vmem:[%s878 + $0x9c] sm:$0xf]
        %v919 = vld [vmem:[%s878 + $0xa0] sm:$0xf]
        %v920 = vld [vmem:[%s878 + $0xa4] sm:$0xf]
        %v921 = vld [vmem:[%s878 + $0xa8] sm:$0xf]
        %v922 = vld [vmem:[%s878 + $0xac] sm:$0xf]
        %v923 = vld [vmem:[%s878 + $0xb0] sm:$0xf]
        %v924 = vld [vmem:[%s878 + $0xb4] sm:$0xf]
        %v925 = vld [vmem:[%s878 + $0xb8] sm:$0xf]
        %v926 = vld [vmem:[%s878 + $0xbc] sm:$0xf]
        %v927 = vld [vmem:[%s878 + $0xc0] sm:$0xf]
        %v928 = vld [vmem:[%s878 + $0xc4] sm:$0xf]
        %v929 = vld [vmem:[%s878 + $0xc8] sm:$0xf]
        %v930 = vld [vmem:[%s878 + $0xcc] sm:$0xf]
        %v931 = vld [vmem:[%s878 + $0xd0] sm:$0xf]
        %v932 = vld [vmem:[%s878 + $0xd4] sm:$0xf]
        %v933 = vld [vmem:[%s878 + $0xd8] sm:$0xf]
        %v934 = vld [vmem:[%s878 + $0xdc] sm:$0xf]
        %v935 = vld [vmem:[%s878 + $0xe0] sm:$0xf]
        %v936 = vld [vmem:[%s878 + $0xe4] sm:$0xf]
        %v937 = vld [vmem:[%s878 + $0xe8] sm:$0xf]
        %v938 = vld [vmem:[%s878 + $0xec] sm:$0xf]
        %v939 = vld [vmem:[%s878 + $0xf0] sm:$0xf]
        %v940 = vld [vmem:[%s878 + $0xf4] sm:$0xf]
        %v941 = vld [vmem:[%s878 + $0xf8] sm:$0xf]
        %v942 = vld [vmem:[%s878 + $0xfc] sm:$0xf]
        %v943 = vld [vmem:[#allocation2] sm:$0xff]
        %v944 = vld [vmem:[#allocation2 + $0x8] sm:$0xff]
        %v945 = vld [vmem:[#allocation2 + $0x10] sm:$0xff]
        %v946 = vld [vmem:[#allocation2 + $0x18] sm:$0xff]
        %v947 = vld [vmem:[#allocation2 + $0x20] sm:$0xff]
        %v948 = vld [vmem:[#allocation2 + $0x28] sm:$0xff]
        %v949 = vld [vmem:[#allocation2 + $0x30] sm:$0xff]
        %v950 = vld [vmem:[#allocation2 + $0x38] sm:$0xff]
        %v951 = vld [vmem:[#allocation2 + $0x40] sm:$0xff]
        %v952 = vld [vmem:[#allocation2 + $0x48] sm:$0xff]
        %v953 = vld [vmem:[#allocation2 + $0x50] sm:$0xff]
        %v954 = vld [vmem:[#allocation2 + $0x58] sm:$0xff]
        %v955 = vld [vmem:[#allocation2 + $0x60] sm:$0xff]
        %v956 = vld [vmem:[#allocation2 + $0x68] sm:$0xff]
        %v957 = vld [vmem:[#allocation2 + $0x70] sm:$0xff]
        %v958 = vld [vmem:[#allocation2 + $0x78] sm:$0xff]
        %v959 = vld [vmem:[#allocation2 + $0x80] sm:$0xff]
        %v960 = vld [vmem:[#allocation2 + $0x88] sm:$0xff]
        %v961 = vld [vmem:[#allocation2 + $0x90] sm:$0xff]
        %v962 = vld [vmem:[#allocation2 + $0x98] sm:$0xff]
        %v963 = vld [vmem:[#allocation2 + $0xa0] sm:$0xff]
        %v964 = vld [vmem:[#allocation2 + $0xa8] sm:$0xff]
        %v965 = vld [vmem:[#allocation2 + $0xb0] sm:$0xff]
        %v966 = vld [vmem:[#allocation2 + $0xb8] sm:$0xff]
        %v967 = vld [vmem:[#allocation2 + $0xc0] sm:$0xff]
        %v968 = vld [vmem:[#allocation2 + $0xc8] sm:$0xff]
        %v969 = vld [vmem:[#allocation2 + $0xd0] sm:$0xff]
        %v970 = vld [vmem:[#allocation2 + $0xd8] sm:$0xff]
        %v971 = vld [vmem:[#allocation2 + $0xe0] sm:$0xff]
        %v972 = vld [vmem:[#allocation2 + $0xe8] sm:$0xff]
        %v973 = vld [vmem:[#allocation2 + $0xf0] sm:$0xff]
        %v974 = vld [vmem:[#allocation2 + $0xf8] sm:$0xff]
        %v1039 = vunpack.c.l.b16 %v879
        %v1040 = vunpack.c.l.b16 %v880
        %v1041 = vunpack.c.l.b16 %v881
        %v1042 = vunpack.c.l.b16 %v882
        %v1043 = vunpack.c.l.b16 %v883
        %v1044 = vunpack.c.l.b16 %v884
        %v1045 = vunpack.c.l.b16 %v885
        %v1046 = vunpack.c.l.b16 %v886
        %v1047 = vunpack.c.l.b16 %v887
        %v1048 = vunpack.c.l.b16 %v888
        %v1049 = vunpack.c.l.b16 %v889
        %v1050 = vunpack.c.l.b16 %v890
        %v1051 = vunpack.c.l.b16 %v891
        %v1052 = vunpack.c.l.b16 %v892
        %v1053 = vunpack.c.l.b16 %v893
        %v1054 = vunpack.c.l.b16 %v894
        %v1055 = vunpack.c.l.b16 %v895
        %v1056 = vunpack.c.l.b16 %v896
        %v1057 = vunpack.c.l.b16 %v897
        %v1058 = vunpack.c.l.b16 %v898
        %v1059 = vunpack.c.l.b16 %v899
        %v1060 = vunpack.c.l.b16 %v900
        %v1061 = vunpack.c.l.b16 %v901
        %v1062 = vunpack.c.l.b16 %v902
        %v1063 = vunpack.c.l.b16 %v903
        %v1064 = vunpack.c.l.b16 %v904
        %v1065 = vunpack.c.l.b16 %v905
        %v1066 = vunpack.c.l.b16 %v906
        %v1067 = vunpack.c.l.b16 %v907
        %v1068 = vunpack.c.l.b16 %v908
        %v1069 = vunpack.c.l.b16 %v909
        %v1070 = vunpack.c.l.b16 %v910
        %v1071 = vunpack.c.l.b16 %v911
        %v1072 = vunpack.c.l.b16 %v912
        %v1073 = vunpack.c.l.b16 %v913
        %v1074 = vunpack.c.l.b16 %v914
        %v1075 = vunpack.c.l.b16 %v915
        %v1076 = vunpack.c.l.b16 %v916
        %v1077 = vunpack.c.l.b16 %v917
        %v1078 = vunpack.c.l.b16 %v918
        %v1079 = vunpack.c.l.b16 %v919
        %v1080 = vunpack.c.l.b16 %v920
        %v1081 = vunpack.c.l.b16 %v921
        %v1082 = vunpack.c.l.b16 %v922
        %v1083 = vunpack.c.l.b16 %v923
        %v1084 = vunpack.c.l.b16 %v924
        %v1085 = vunpack.c.l.b16 %v925
        %v1086 = vunpack.c.l.b16 %v926
        %v1087 = vunpack.c.l.b16 %v927
        %v1088 = vunpack.c.l.b16 %v928
        %v1089 = vunpack.c.l.b16 %v929
        %v1090 = vunpack.c.l.b16 %v930
        %v1091 = vunpack.c.l.b16 %v931
        %v1092 = vunpack.c.l.b16 %v932
        %v1093 = vunpack.c.l.b16 %v933
        %v1094 = vunpack.c.l.b16 %v934
        %v1095 = vunpack.c.l.b16 %v935
        %v1096 = vunpack.c.l.b16 %v936
        %v1097 = vunpack.c.l.b16 %v937
        %v1098 = vunpack.c.l.b16 %v938
        %v1099 = vunpack.c.l.b16 %v939
        %v1100 = vunpack.c.l.b16 %v940
        %v1101 = vunpack.c.l.b16 %v941
        %v1102 = vunpack.c.l.b16 %v942
        %v1103 = vpack.c.b16 %v1040, %v1039
        %v1104 = vpack.c.b16 %v1042, %v1041
        %v1105 = vpack.c.b16 %v1044, %v1043
        %v1106 = vpack.c.b16 %v1046, %v1045
        %v1107 = vpack.c.b16 %v1048, %v1047
        %v1108 = vpack.c.b16 %v1050, %v1049
        %v1109 = vpack.c.b16 %v1052, %v1051
        %v1110 = vpack.c.b16 %v1054, %v1053
        %v1111 = vpack.c.b16 %v1056, %v1055
        %v1112 = vpack.c.b16 %v1058, %v1057
        %v1113 = vpack.c.b16 %v1060, %v1059
        %v1114 = vpack.c.b16 %v1062, %v1061
        %v1115 = vpack.c.b16 %v1064, %v1063
        %v1116 = vpack.c.b16 %v1066, %v1065
        %v1117 = vpack.c.b16 %v1068, %v1067
        %v1118 = vpack.c.b16 %v1070, %v1069
        %v1119 = vpack.c.b16 %v1072, %v1071
        %v1120 = vpack.c.b16 %v1074, %v1073
        %v1121 = vpack.c.b16 %v1076, %v1075
        %v1122 = vpack.c.b16 %v1078, %v1077
        %v1123 = vpack.c.b16 %v1080, %v1079
        %v1124 = vpack.c.b16 %v1082, %v1081
        %v1125 = vpack.c.b16 %v1084, %v1083
        %v1126 = vpack.c.b16 %v1086, %v1085
        %v1127 = vpack.c.b16 %v1088, %v1087
        %v1128 = vpack.c.b16 %v1090, %v1089
        %v1129 = vpack.c.b16 %v1092, %v1091
        %v1130 = vpack.c.b16 %v1094, %v1093
        %v1131 = vpack.c.b16 %v1096, %v1095
        %v1132 = vpack.c.b16 %v1098, %v1097
        %v1133 = vpack.c.b16 %v1100, %v1099
        %v1134 = vpack.c.b16 %v1102, %v1101
        %1167 = vmatprep.subr.bf16.mxu0 0
        %1168 = vmatpush1.bf16.msra.mxu0 %v1110
        %1169 = vmatprep.subr.bf16.mxu0 0
        %1170 = vmatpush1.bf16.msra.mxu0 %v1109
        %1171 = vmatprep.subr.bf16.mxu0 0
        %1172 = vmatpush1.bf16.msra.mxu0 %v1108
        %1173 = vmatprep.subr.bf16.mxu0 0
        %1174 = vmatpush1.bf16.msra.mxu0 %v1107
        %1175 = vmatprep.subr.bf16.mxu0 0
        %1176 = vmatpush1.bf16.msra.mxu0 %v1106
        %1177 = vmatprep.subr.bf16.mxu0 0
        %1178 = vmatpush1.bf16.msra.mxu0 %v1105
        %1179 = vmatprep.subr.bf16.mxu0 0
        %1180 = vmatpush1.bf16.msra.mxu0 %v1104
        %1181 = vmatprep.subr.bf16.mxu0 0
        %1182 = vmatpush1.bf16.msra.mxu0 %v1103
        %1183 = vmatprep.subr.bf16.mxu0 0
        %1184 = vmatpush2.bf16.msra.mxu0 %v1118
        %1185 = vmatprep.subr.bf16.mxu0 0
        %1186 = vmatpush2.bf16.msra.mxu0 %v1117
        %1187 = vmatprep.subr.bf16.mxu0 0
        %1188 = vmatpush2.bf16.msra.mxu0 %v1116
        %1189 = vmatprep.subr.bf16.mxu0 0
        %1190 = vmatpush2.bf16.msra.mxu0 %v1115
        %1191 = vmatprep.subr.bf16.mxu0 0
        %1192 = vmatpush2.bf16.msra.mxu0 %v1114
        %1193 = vmatprep.subr.bf16.mxu0 0
        %1194 = vmatpush2.bf16.msra.mxu0 %v1113
        %1195 = vmatprep.subr.bf16.mxu0 0
        %1196 = vmatpush2.bf16.msra.mxu0 %v1112
        %1197 = vmatprep.subr.bf16.mxu0 0
        %1198 = vmatpush2.bf16.msra.mxu0 %v1111
        %1199 = vmatprep.mubr.bf16.mxu0 %v811
        %1200 = vmatmul.mubr.bf16.gmra.mxu0 %v810
        %v1201 = vpop.f32.mrf.mxu0
        %v1202 = vadd.f32 0.0, %v1201
        %v1203 = vpop.f32.mrf.mxu0
        %v1204 = vpop.f32.mrf.mxu0
        %v1205 = vadd.f32 0.0, %v1204
        %v1206 = vpop.f32.mrf.mxu0
        %1207 = vmatprep.mubr.bf16.mxu0 %v815
        %1208 = vmatmul.mubr.bf16.gmra.mxu0 %v814
        %v1209 = vpop.f32.mrf.mxu0
        %v1210 = vadd.f32 0.0, %v1209
        %v1211 = vpop.f32.mrf.mxu0
        %v1212 = vpop.f32.mrf.mxu0
        %v1213 = vadd.f32 0.0, %v1212
        %v1214 = vpop.f32.mrf.mxu0
        %1215 = vmatprep.mubr.bf16.mxu0 %v819
        %1216 = vmatmul.mubr.bf16.gmra.mxu0 %v818
        %v1217 = vpop.f32.mrf.mxu0
        %v1218 = vadd.f32 0.0, %v1217
        %v1219 = vpop.f32.mrf.mxu0
        %v1220 = vpop.f32.mrf.mxu0
        %v1221 = vadd.f32 0.0, %v1220
        %v1222 = vpop.f32.mrf.mxu0
        %1223 = vmatprep.mubr.bf16.mxu0 %v823
        %1224 = vmatmul.mubr.bf16.gmra.mxu0 %v822
        %v1225 = vpop.f32.mrf.mxu0
        %v1226 = vadd.f32 0.0, %v1225
        %v1227 = vpop.f32.mrf.mxu0
        %v1228 = vpop.f32.mrf.mxu0
        %v1229 = vadd.f32 0.0, %v1228
        %v1230 = vpop.f32.mrf.mxu0
        %1231 = vmatprep.mubr.bf16.mxu0 %v827
        %1232 = vmatmul.mubr.bf16.gmra.mxu0 %v826
        %v1233 = vpop.f32.mrf.mxu0
        %v1234 = vadd.f32 0.0, %v1233
        %v1235 = vpop.f32.mrf.mxu0
        %v1236 = vpop.f32.mrf.mxu0
        %v1237 = vadd.f32 0.0, %v1236
        %v1238 = vpop.f32.mrf.mxu0
        %1239 = vmatprep.mubr.bf16.mxu0 %v831
        %1240 = vmatmul.mubr.bf16.gmra.mxu0 %v830
        %v1241 = vpop.f32.mrf.mxu0
        %v1242 = vadd.f32 0.0, %v1241
        %v1243 = vpop.f32.mrf.mxu0
        %v1244 = vpop.f32.mrf.mxu0
        %v1245 = vadd.f32 0.0, %v1244
        %v1246 = vpop.f32.mrf.mxu0
        %1247 = vmatprep.mubr.bf16.mxu0 %v835
        %1248 = vmatmul.mubr.bf16.gmra.mxu0 %v834
        %v1249 = vpop.f32.mrf.mxu0
        %v1250 = vadd.f32 0.0, %v1249
        %v1251 = vpop.f32.mrf.mxu0
        %v1252 = vpop.f32.mrf.mxu0
        %v1253 = vadd.f32 0.0, %v1252
        %v1254 = vpop.f32.mrf.mxu0
        %1255 = vmatprep.mubr.bf16.mxu0 %v839
        %1256 = vmatmul.mubr.bf16.gmra.mxu0 %v838
        %v1257 = vpop.f32.mrf.mxu0
        %v1258 = vadd.f32 0.0, %v1257
        %v1259 = vpop.f32.mrf.mxu0
        %v1260 = vpop.f32.mrf.mxu0
        %v1261 = vadd.f32 0.0, %v1260
        %v1262 = vpop.f32.mrf.mxu0
        %1263 = vmatprep.mubr.bf16.mxu0 %v843
        %1264 = vmatmul.mubr.bf16.gmra.mxu0 %v842
        %v1265 = vpop.f32.mrf.mxu0
        %v1266 = vadd.f32 0.0, %v1265
        %v1267 = vpop.f32.mrf.mxu0
        %v1268 = vpop.f32.mrf.mxu0
        %v1269 = vadd.f32 0.0, %v1268
        %v1270 = vpop.f32.mrf.mxu0
        %1271 = vmatprep.mubr.bf16.mxu0 %v847
        %1272 = vmatmul.mubr.bf16.gmra.mxu0 %v846
        %v1273 = vpop.f32.mrf.mxu0
        %v1274 = vadd.f32 0.0, %v1273
        %v1275 = vpop.f32.mrf.mxu0
        %v1276 = vpop.f32.mrf.mxu0
        %v1277 = vadd.f32 0.0, %v1276
        %v1278 = vpop.f32.mrf.mxu0
        %1279 = vmatprep.mubr.bf16.mxu0 %v851
        %1280 = vmatmul.mubr.bf16.gmra.mxu0 %v850
        %v1281 = vpop.f32.mrf.mxu0
        %v1282 = vadd.f32 0.0, %v1281
        %v1283 = vpop.f32.mrf.mxu0
        %v1284 = vpop.f32.mrf.mxu0
        %v1285 = vadd.f32 0.0, %v1284
        %v1286 = vpop.f32.mrf.mxu0
        %1287 = vmatprep.mubr.bf16.mxu0 %v855
        %1288 = vmatmul.mubr.bf16.gmra.mxu0 %v854
        %v1289 = vpop.f32.mrf.mxu0
        %v1290 = vadd.f32 0.0, %v1289
        %v1291 = vpop.f32.mrf.mxu0
        %v1292 = vpop.f32.mrf.mxu0
        %v1293 = vadd.f32 0.0, %v1292
        %v1294 = vpop.f32.mrf.mxu0
        %1295 = vmatprep.mubr.bf16.mxu0 %v859
        %1296 = vmatmul.mubr.bf16.gmra.mxu0 %v858
        %v1297 = vpop.f32.mrf.mxu0
        %v1298 = vadd.f32 0.0, %v1297
        %v1299 = vpop.f32.mrf.mxu0
        %v1300 = vpop.f32.mrf.mxu0
        %v1301 = vadd.f32 0.0, %v1300
        %v1302 = vpop.f32.mrf.mxu0
        %1303 = vmatprep.mubr.bf16.mxu0 %v863
        %1304 = vmatmul.mubr.bf16.gmra.mxu0 %v862
        %v1305 = vpop.f32.mrf.mxu0
        %v1306 = vadd.f32 0.0, %v1305
        %v1307 = vpop.f32.mrf.mxu0
        %v1308 = vpop.f32.mrf.mxu0
        %v1309 = vadd.f32 0.0, %v1308
        %v1310 = vpop.f32.mrf.mxu0
        %1311 = vmatprep.mubr.bf16.mxu0 %v867
        %1312 = vmatmul.mubr.bf16.gmra.mxu0 %v866
        %v1313 = vpop.f32.mrf.mxu0
        %v1314 = vadd.f32 0.0, %v1313
        %v1315 = vpop.f32.mrf.mxu0
        %v1316 = vpop.f32.mrf.mxu0
        %v1317 = vadd.f32 0.0, %v1316
        %v1318 = vpop.f32.mrf.mxu0
        %1319 = vmatprep.mubr.bf16.mxu0 %v871
        %1320 = vmatmul.mubr.bf16.gmra.mxu0 %v870
        %v1321 = vpop.f32.mrf.mxu0
        %v1322 = vadd.f32 0.0, %v1321
        %v1323 = vpop.f32.mrf.mxu0
        %v1324 = vpop.f32.mrf.mxu0
        %v1325 = vadd.f32 0.0, %v1324
        %v1326 = vpop.f32.mrf.mxu0
        %1327 = vdwg.mxu0
        %1328 = vmatprep.subr.bf16.mxu0 0
        %1329 = vmatpush1.bf16.msra.mxu0 %v1126
        %1330 = vmatprep.subr.bf16.mxu0 0
        %1331 = vmatpush1.bf16.msra.mxu0 %v1125
        %1332 = vmatprep.subr.bf16.mxu0 0
        %1333 = vmatpush1.bf16.msra.mxu0 %v1124
        %1334 = vmatprep.subr.bf16.mxu0 0
        %1335 = vmatpush1.bf16.msra.mxu0 %v1123
        %1336 = vmatprep.subr.bf16.mxu0 0
        %1337 = vmatpush1.bf16.msra.mxu0 %v1122
        %1338 = vmatprep.subr.bf16.mxu0 0
        %1339 = vmatpush1.bf16.msra.mxu0 %v1121
        %1340 = vmatprep.subr.bf16.mxu0 0
        %1341 = vmatpush1.bf16.msra.mxu0 %v1120
        %1342 = vmatprep.subr.bf16.mxu0 0
        %1343 = vmatpush1.bf16.msra.mxu0 %v1119
        %1344 = vmatprep.subr.bf16.mxu0 0
        %1345 = vmatpush2.bf16.msra.mxu0 %v1134
        %1346 = vmatprep.subr.bf16.mxu0 0
        %1347 = vmatpush2.bf16.msra.mxu0 %v1133
        %1348 = vmatprep.subr.bf16.mxu0 0
        %1349 = vmatpush2.bf16.msra.mxu0 %v1132
        %1350 = vmatprep.subr.bf16.mxu0 0
        %1351 = vmatpush2.bf16.msra.mxu0 %v1131
        %1352 = vmatprep.subr.bf16.mxu0 0
        %1353 = vmatpush2.bf16.msra.mxu0 %v1130
        %1354 = vmatprep.subr.bf16.mxu0 0
        %1355 = vmatpush2.bf16.msra.mxu0 %v1129
        %1356 = vmatprep.subr.bf16.mxu0 0
        %1357 = vmatpush2.bf16.msra.mxu0 %v1128
        %1358 = vmatprep.subr.bf16.mxu0 0
        %1359 = vmatpush2.bf16.msra.mxu0 %v1127
        %1360 = vmatprep.mubr.bf16.mxu0 %v813
        %1361 = vmatmul.mubr.bf16.gmra.mxu0 %v812
        %v1362 = vpop.f32.mrf.mxu0
        %v1363 = vadd.f32 %v1202, %v1362
        %v1364 = vpop.f32.mrf.mxu0
        %v1365 = vpop.f32.mrf.mxu0
        %v1366 = vadd.f32 %v1205, %v1365
        %v1367 = vpop.f32.mrf.mxu0
        %1368 = vmatprep.mubr.bf16.mxu0 %v817
        %1369 = vmatmul.mubr.bf16.gmra.mxu0 %v816
        %v1370 = vpop.f32.mrf.mxu0
        %v1371 = vadd.f32 %v1210, %v1370
        %v1372 = vpop.f32.mrf.mxu0
        %v1373 = vpop.f32.mrf.mxu0
        %v1374 = vadd.f32 %v1213, %v1373
        %v1375 = vpop.f32.mrf.mxu0
        %1376 = vmatprep.mubr.bf16.mxu0 %v821
        %1377 = vmatmul.mubr.bf16.gmra.mxu0 %v820
        %v1378 = vpop.f32.mrf.mxu0
        %v1379 = vadd.f32 %v1218, %v1378
        %v1380 = vpop.f32.mrf.mxu0
        %v1381 = vpop.f32.mrf.mxu0
        %v1382 = vadd.f32 %v1221, %v1381
        %v1383 = vpop.f32.mrf.mxu0
        %1384 = vmatprep.mubr.bf16.mxu0 %v825
        %1385 = vmatmul.mubr.bf16.gmra.mxu0 %v824
        %v1386 = vpop.f32.mrf.mxu0
        %v1387 = vadd.f32 %v1226, %v1386
        %v1388 = vpop.f32.mrf.mxu0
        %v1389 = vpop.f32.mrf.mxu0
        %v1390 = vadd.f32 %v1229, %v1389
        %v1391 = vpop.f32.mrf.mxu0
        %1392 = vmatprep.mubr.bf16.mxu0 %v829
        %1393 = vmatmul.mubr.bf16.gmra.mxu0 %v828
        %v1394 = vpop.f32.mrf.mxu0
        %v1395 = vadd.f32 %v1234, %v1394
        %v1396 = vpop.f32.mrf.mxu0
        %v1397 = vpop.f32.mrf.mxu0
        %v1398 = vadd.f32 %v1237, %v1397
        %v1399 = vpop.f32.mrf.mxu0
        %1400 = vmatprep.mubr.bf16.mxu0 %v833
        %1401 = vmatmul.mubr.bf16.gmra.mxu0 %v832
        %v1402 = vpop.f32.mrf.mxu0
        %v1403 = vadd.f32 %v1242, %v1402
        %v1404 = vpop.f32.mrf.mxu0
        %v1405 = vpop.f32.mrf.mxu0
        %v1406 = vadd.f32 %v1245, %v1405
        %v1407 = vpop.f32.mrf.mxu0
        %1408 = vmatprep.mubr.bf16.mxu0 %v837
        %1409 = vmatmul.mubr.bf16.gmra.mxu0 %v836
        %v1410 = vpop.f32.mrf.mxu0
        %v1411 = vadd.f32 %v1250, %v1410
        %v1412 = vpop.f32.mrf.mxu0
        %v1413 = vpop.f32.mrf.mxu0
        %v1414 = vadd.f32 %v1253, %v1413
        %v1415 = vpop.f32.mrf.mxu0
        %1416 = vmatprep.mubr.bf16.mxu0 %v841
        %1417 = vmatmul.mubr.bf16.gmra.mxu0 %v840
        %v1418 = vpop.f32.mrf.mxu0
        %v1419 = vadd.f32 %v1258, %v1418
        %v1420 = vpop.f32.mrf.mxu0
        %v1421 = vpop.f32.mrf.mxu0
        %v1422 = vadd.f32 %v1261, %v1421
        %v1423 = vpop.f32.mrf.mxu0
        %1424 = vmatprep.mubr.bf16.mxu0 %v845
        %1425 = vmatmul.mubr.bf16.gmra.mxu0 %v844
        %v1426 = vpop.f32.mrf.mxu0
        %v1427 = vadd.f32 %v1266, %v1426
        %v1428 = vpop.f32.mrf.mxu0
        %v1429 = vpop.f32.mrf.mxu0
        %v1430 = vadd.f32 %v1269, %v1429
        %v1431 = vpop.f32.mrf.mxu0
        %1432 = vmatprep.mubr.bf16.mxu0 %v849
        %1433 = vmatmul.mubr.bf16.gmra.mxu0 %v848
        %v1434 = vpop.f32.mrf.mxu0
        %v1435 = vadd.f32 %v1274, %v1434
        %v1436 = vpop.f32.mrf.mxu0
        %v1437 = vpop.f32.mrf.mxu0
        %v1438 = vadd.f32 %v1277, %v1437
        %v1439 = vpop.f32.mrf.mxu0
        %1440 = vmatprep.mubr.bf16.mxu0 %v853
        %1441 = vmatmul.mubr.bf16.gmra.mxu0 %v852
        %v1442 = vpop.f32.mrf.mxu0
        %v1443 = vadd.f32 %v1282, %v1442
        %v1444 = vpop.f32.mrf.mxu0
        %v1445 = vpop.f32.mrf.mxu0
        %v1446 = vadd.f32 %v1285, %v1445
        %v1447 = vpop.f32.mrf.mxu0
        %1448 = vmatprep.mubr.bf16.mxu0 %v857
        %1449 = vmatmul.mubr.bf16.gmra.mxu0 %v856
        %v1450 = vpop.f32.mrf.mxu0
        %v1451 = vadd.f32 %v1290, %v1450
        %v1452 = vpop.f32.mrf.mxu0
        %v1453 = vpop.f32.mrf.mxu0
        %v1454 = vadd.f32 %v1293, %v1453
        %v1455 = vpop.f32.mrf.mxu0
        %1456 = vmatprep.mubr.bf16.mxu0 %v861
        %1457 = vmatmul.mubr.bf16.gmra.mxu0 %v860
        %v1458 = vpop.f32.mrf.mxu0
        %v1459 = vadd.f32 %v1298, %v1458
        %v1460 = vpop.f32.mrf.mxu0
        %v1461 = vpop.f32.mrf.mxu0
        %v1462 = vadd.f32 %v1301, %v1461
        %v1463 = vpop.f32.mrf.mxu0
        %1464 = vmatprep.mubr.bf16.mxu0 %v865
        %1465 = vmatmul.mubr.bf16.gmra.mxu0 %v864
        %v1466 = vpop.f32.mrf.mxu0
        %v1467 = vadd.f32 %v1306, %v1466
        %v1468 = vpop.f32.mrf.mxu0
        %v1469 = vpop.f32.mrf.mxu0
        %v1470 = vadd.f32 %v1309, %v1469
        %v1471 = vpop.f32.mrf.mxu0
        %1472 = vmatprep.mubr.bf16.mxu0 %v869
        %1473 = vmatmul.mubr.bf16.gmra.mxu0 %v868
        %v1474 = vpop.f32.mrf.mxu0
        %v1475 = vadd.f32 %v1314, %v1474
        %v1476 = vpop.f32.mrf.mxu0
        %v1477 = vpop.f32.mrf.mxu0
        %v1478 = vadd.f32 %v1317, %v1477
        %v1479 = vpop.f32.mrf.mxu0
        %1480 = vmatprep.mubr.bf16.mxu0 %v873
        %1481 = vmatmul.mubr.bf16.gmra.mxu0 %v872
        %v1482 = vpop.f32.mrf.mxu0
        %v1483 = vadd.f32 %v1322, %v1482
        %v1484 = vpop.f32.mrf.mxu0
        %v1485 = vpop.f32.mrf.mxu0
        %v1486 = vadd.f32 %v1325, %v1485
        %v1487 = vpop.f32.mrf.mxu0
        %1488 = vdwg.mxu0
        %v1489 = vadd.f32 %v943, %v1363
        %v1490 = vadd.f32 %v944, %v1366
        %v1491 = vadd.f32 %v945, %v1371
        %v1492 = vadd.f32 %v946, %v1374
        %v1493 = vadd.f32 %v947, %v1379
        %v1494 = vadd.f32 %v948, %v1382
        %v1495 = vadd.f32 %v949, %v1387
        %v1496 = vadd.f32 %v950, %v1390
        %v1497 = vadd.f32 %v951, %v1395
        %v1498 = vadd.f32 %v952, %v1398
        %v1499 = vadd.f32 %v953, %v1403
        %v1500 = vadd.f32 %v954, %v1406
        %v1501 = vadd.f32 %v955, %v1411
        %v1502 = vadd.f32 %v956, %v1414
        %v1503 = vadd.f32 %v957, %v1419
        %v1504 = vadd.f32 %v958, %v1422
        %v1505 = vadd.f32 %v959, %v1427
        %v1506 = vadd.f32 %v960, %v1430
        %v1507 = vadd.f32 %v961, %v1435
        %v1508 = vadd.f32 %v962, %v1438
        %v1509 = vadd.f32 %v963, %v1443
        %v1510 = vadd.f32 %v964, %v1446
        %v1511 = vadd.f32 %v965, %v1451
        %v1512 = vadd.f32 %v966, %v1454
        %v1513 = vadd.f32 %v967, %v1459
        %v1514 = vadd.f32 %v968, %v1462
        %v1515 = vadd.f32 %v969, %v1467
        %v1516 = vadd.f32 %v970, %v1470
        %v1517 = vadd.f32 %v971, %v1475
        %v1518 = vadd.f32 %v972, %v1478
        %v1519 = vadd.f32 %v973, %v1483
        %v1520 = vadd.f32 %v974, %v1486
        %1521 = vst [vmem:[#allocation2] sm:$0xff] %v1489
        %1522 = vst [vmem:[#allocation2 + $0x8] sm:$0xff] %v1490
        %1523 = vst [vmem:[#allocation2 + $0x10] sm:$0xff] %v1491
        %1524 = vst [vmem:[#allocation2 + $0x18] sm:$0xff] %v1492
        %1525 = vst [vmem:[#allocation2 + $0x20] sm:$0xff] %v1493
        %1526 = vst [vmem:[#allocation2 + $0x28] sm:$0xff] %v1494
        %1527 = vst [vmem:[#allocation2 + $0x30] sm:$0xff] %v1495
        %1528 = vst [vmem:[#allocation2 + $0x38] sm:$0xff] %v1496
        %1529 = vst [vmem:[#allocation2 + $0x40] sm:$0xff] %v1497
        %1530 = vst [vmem:[#allocation2 + $0x48] sm:$0xff] %v1498
        %1531 = vst [vmem:[#allocation2 + $0x50] sm:$0xff] %v1499
        %1532 = vst [vmem:[#allocation2 + $0x58] sm:$0xff] %v1500
        %1533 = vst [vmem:[#allocation2 + $0x60] sm:$0xff] %v1501
        %1534 = vst [vmem:[#allocation2 + $0x68] sm:$0xff] %v1502
        %1535 = vst [vmem:[#allocation2 + $0x70] sm:$0xff] %v1503
        %1536 = vst [vmem:[#allocation2 + $0x78] sm:$0xff] %v1504
        %1537 = vst [vmem:[#allocation2 + $0x80] sm:$0xff] %v1505
        %1538 = vst [vmem:[#allocation2 + $0x88] sm:$0xff] %v1506
        %1539 = vst [vmem:[#allocation2 + $0x90] sm:$0xff] %v1507
        %1540 = vst [vmem:[#allocation2 + $0x98] sm:$0xff] %v1508
        %1541 = vst [vmem:[#allocation2 + $0xa0] sm:$0xff] %v1509
        %1542 = vst [vmem:[#allocation2 + $0xa8] sm:$0xff] %v1510
        %1543 = vst [vmem:[#allocation2 + $0xb0] sm:$0xff] %v1511
        %1544 = vst [vmem:[#allocation2 + $0xb8] sm:$0xff] %v1512
        %1545 = vst [vmem:[#allocation2 + $0xc0] sm:$0xff] %v1513
        %1546 = vst [vmem:[#allocation2 + $0xc8] sm:$0xff] %v1514
        %1547 = vst [vmem:[#allocation2 + $0xd0] sm:$0xff] %v1515
        %1548 = vst [vmem:[#allocation2 + $0xd8] sm:$0xff] %v1516
        %1549 = vst [vmem:[#allocation2 + $0xe0] sm:$0xff] %v1517
        %1550 = vst [vmem:[#allocation2 + $0xe8] sm:$0xff] %v1518
        %1551 = vst [vmem:[#allocation2 + $0xf0] sm:$0xff] %v1519
        %1552 = vst [vmem:[#allocation2 + $0xf8] sm:$0xff] %v1520
        // Predicated region
        $region123: #{graphsage_forward.7} parent=109 // pred_check
          %p1553 = pneg %p742
        $region124: #{graphsage_forward.7} parent=109 // pred_check_branch
          %1555 = sbr.rel (%p1553) target = $region126
        $region125: #{graphsage_forward.7} parent=109 // pred_region
          %v1556 = vld [vmem:[#allocation2] sm:$0xff]
          %v1557 = vld [vmem:[#allocation2 + $0x8] sm:$0xff]
          %v1558 = vld [vmem:[#allocation2 + $0x10] sm:$0xff]
          %v1559 = vld [vmem:[#allocation2 + $0x18] sm:$0xff]
          %v1560 = vld [vmem:[#allocation2 + $0x20] sm:$0xff]
          %v1561 = vld [vmem:[#allocation2 + $0x28] sm:$0xff]
          %v1562 = vld [vmem:[#allocation2 + $0x30] sm:$0xff]
          %v1563 = vld [vmem:[#allocation2 + $0x38] sm:$0xff]
          %v1564 = vld [vmem:[#allocation2 + $0x40] sm:$0xff]
          %v1565 = vld [vmem:[#allocation2 + $0x48] sm:$0xff]
          %v1566 = vld [vmem:[#allocation2 + $0x50] sm:$0xff]
          %v1567 = vld [vmem:[#allocation2 + $0x58] sm:$0xff]
          %v1568 = vld [vmem:[#allocation2 + $0x60] sm:$0xff]
          %v1569 = vld [vmem:[#allocation2 + $0x68] sm:$0xff]
          %v1570 = vld [vmem:[#allocation2 + $0x70] sm:$0xff]
          %v1571 = vld [vmem:[#allocation2 + $0x78] sm:$0xff]
          %v1572 = vld [vmem:[#allocation2 + $0x80] sm:$0xff]
          %v1573 = vld [vmem:[#allocation2 + $0x88] sm:$0xff]
          %v1574 = vld [vmem:[#allocation2 + $0x90] sm:$0xff]
          %v1575 = vld [vmem:[#allocation2 + $0x98] sm:$0xff]
          %v1576 = vld [vmem:[#allocation2 + $0xa0] sm:$0xff]
          %v1577 = vld [vmem:[#allocation2 + $0xa8] sm:$0xff]
          %v1578 = vld [vmem:[#allocation2 + $0xb0] sm:$0xff]
          %v1579 = vld [vmem:[#allocation2 + $0xb8] sm:$0xff]
          %v1580 = vld [vmem:[#allocation2 + $0xc0] sm:$0xff]
          %v1581 = vld [vmem:[#allocation2 + $0xc8] sm:$0xff]
          %v1582 = vld [vmem:[#allocation2 + $0xd0] sm:$0xff]
          %v1583 = vld [vmem:[#allocation2 + $0xd8] sm:$0xff]
          %v1584 = vld [vmem:[#allocation2 + $0xe0] sm:$0xff]
          %v1585 = vld [vmem:[#allocation2 + $0xe8] sm:$0xff]
          %v1586 = vld [vmem:[#allocation2 + $0xf0] sm:$0xff]
          %v1587 = vld [vmem:[#allocation2 + $0xf8] sm:$0xff]
          %v1588 = vld [vmem:[%s733] sm:$0xff]
          %v1589 = vld [vmem:[%s733 + $0x8] sm:$0xff]
          %v1590 = vld [vmem:[%s733 + $0x10] sm:$0xff]
          %v1591 = vld [vmem:[%s733 + $0x18] sm:$0xff]
          %v1592 = vld [vmem:[%s733 + $0x20] sm:$0xff]
          %v1593 = vld [vmem:[%s733 + $0x28] sm:$0xff]
          %v1594 = vld [vmem:[%s733 + $0x30] sm:$0xff]
          %v1595 = vld [vmem:[%s733 + $0x38] sm:$0xff]
          %v1596 = vld [vmem:[%s733 + $0x40] sm:$0xff]
          %v1597 = vld [vmem:[%s733 + $0x48] sm:$0xff]
          %v1598 = vld [vmem:[%s733 + $0x50] sm:$0xff]
          %v1599 = vld [vmem:[%s733 + $0x58] sm:$0xff]
          %v1600 = vld [vmem:[%s733 + $0x60] sm:$0xff]
          %v1601 = vld [vmem:[%s733 + $0x68] sm:$0xff]
          %v1602 = vld [vmem:[%s733 + $0x70] sm:$0xff]
          %v1603 = vld [vmem:[%s733 + $0x78] sm:$0xff]
          %v1604 = vld [vmem:[%s733 + $0x80] sm:$0xff]
          %v1605 = vld [vmem:[%s733 + $0x88] sm:$0xff]
          %v1606 = vld [vmem:[%s733 + $0x90] sm:$0xff]
          %v1607 = vld [vmem:[%s733 + $0x98] sm:$0xff]
          %v1608 = vld [vmem:[%s733 + $0xa0] sm:$0xff]
          %v1609 = vld [vmem:[%s733 + $0xa8] sm:$0xff]
          %v1610 = vld [vmem:[%s733 + $0xb0] sm:$0xff]
          %v1611 = vld [vmem:[%s733 + $0xb8] sm:$0xff]
          %v1612 = vld [vmem:[%s733 + $0xc0] sm:$0xff]
          %v1613 = vld [vmem:[%s733 + $0xc8] sm:$0xff]
          %v1614 = vld [vmem:[%s733 + $0xd0] sm:$0xff]
          %v1615 = vld [vmem:[%s733 + $0xd8] sm:$0xff]
          %v1616 = vld [vmem:[%s733 + $0xe0] sm:$0xff]
          %v1617 = vld [vmem:[%s733 + $0xe8] sm:$0xff]
          %v1618 = vld [vmem:[%s733 + $0xf0] sm:$0xff]
          %v1619 = vld [vmem:[%s733 + $0xf8] sm:$0xff]
          %1621 = vset.pattern.permute.xlu0 0
          %1622 = vperm.xlu0 %1621, %v1588
          %v1623 = vpop.permute.xlu0 %1622
          %1626 = vset.pattern.permute.xlu0 0
          %1627 = vperm.xlu0 %1626, %v1589
          %v1628 = vpop.permute.xlu0 %1627
          %1631 = vset.pattern.permute.xlu0 0
          %1632 = vperm.xlu0 %1631, %v1590
          %v1633 = vpop.permute.xlu0 %1632
          %1636 = vset.pattern.permute.xlu0 0
          %1637 = vperm.xlu0 %1636, %v1591
          %v1638 = vpop.permute.xlu0 %1637
          %1641 = vset.pattern.permute.xlu0 0
          %1642 = vperm.xlu0 %1641, %v1592
          %v1643 = vpop.permute.xlu0 %1642
          %1646 = vset.pattern.permute.xlu0 0
          %1647 = vperm.xlu0 %1646, %v1593
          %v1648 = vpop.permute.xlu0 %1647
          %1651 = vset.pattern.permute.xlu0 0
          %1652 = vperm.xlu0 %1651, %v1594
          %v1653 = vpop.permute.xlu0 %1652
          %1656 = vset.pattern.permute.xlu0 0
          %1657 = vperm.xlu0 %1656, %v1595
          %v1658 = vpop.permute.xlu0 %1657
          %1661 = vset.pattern.permute.xlu0 0
          %1662 = vperm.xlu0 %1661, %v1596
          %v1663 = vpop.permute.xlu0 %1662
          %1666 = vset.pattern.permute.xlu0 0
          %1667 = vperm.xlu0 %1666, %v1597
          %v1668 = vpop.permute.xlu0 %1667
          %1671 = vset.pattern.permute.xlu0 0
          %1672 = vperm.xlu0 %1671, %v1598
          %v1673 = vpop.permute.xlu0 %1672
          %1676 = vset.pattern.permute.xlu0 0
          %1677 = vperm.xlu0 %1676, %v1599
          %v1678 = vpop.permute.xlu0 %1677
          %1681 = vset.pattern.permute.xlu0 0
          %1682 = vperm.xlu0 %1681, %v1600
          %v1683 = vpop.permute.xlu0 %1682
          %1686 = vset.pattern.permute.xlu0 0
          %1687 = vperm.xlu0 %1686, %v1601
          %v1688 = vpop.permute.xlu0 %1687
          %1691 = vset.pattern.permute.xlu0 0
          %1692 = vperm.xlu0 %1691, %v1602
          %v1693 = vpop.permute.xlu0 %1692
          %1696 = vset.pattern.permute.xlu0 0
          %1697 = vperm.xlu0 %1696, %v1603
          %v1698 = vpop.permute.xlu0 %1697
          %1701 = vset.pattern.permute.xlu0 0
          %1702 = vperm.xlu0 %1701, %v1604
          %v1703 = vpop.permute.xlu0 %1702
          %1706 = vset.pattern.permute.xlu0 0
          %1707 = vperm.xlu0 %1706, %v1605
          %v1708 = vpop.permute.xlu0 %1707
          %1711 = vset.pattern.permute.xlu0 0
          %1712 = vperm.xlu0 %1711, %v1606
          %v1713 = vpop.permute.xlu0 %1712
          %1716 = vset.pattern.permute.xlu0 0
          %1717 = vperm.xlu0 %1716, %v1607
          %v1718 = vpop.permute.xlu0 %1717
          %1721 = vset.pattern.permute.xlu0 0
          %1722 = vperm.xlu0 %1721, %v1608
          %v1723 = vpop.permute.xlu0 %1722
          %1726 = vset.pattern.permute.xlu0 0
          %1727 = vperm.xlu0 %1726, %v1609
          %v1728 = vpop.permute.xlu0 %1727
          %1731 = vset.pattern.permute.xlu0 0
          %1732 = vperm.xlu0 %1731, %v1610
          %v1733 = vpop.permute.xlu0 %1732
          %1736 = vset.pattern.permute.xlu0 0
          %1737 = vperm.xlu0 %1736, %v1611
          %v1738 = vpop.permute.xlu0 %1737
          %1741 = vset.pattern.permute.xlu0 0
          %1742 = vperm.xlu0 %1741, %v1612
          %v1743 = vpop.permute.xlu0 %1742
          %1746 = vset.pattern.permute.xlu0 0
          %1747 = vperm.xlu0 %1746, %v1613
          %v1748 = vpop.permute.xlu0 %1747
          %1751 = vset.pattern.permute.xlu0 0
          %1752 = vperm.xlu0 %1751, %v1614
          %v1753 = vpop.permute.xlu0 %1752
          %1756 = vset.pattern.permute.xlu0 0
          %1757 = vperm.xlu0 %1756, %v1615
          %v1758 = vpop.permute.xlu0 %1757
          %1761 = vset.pattern.permute.xlu0 0
          %1762 = vperm.xlu0 %1761, %v1616
          %v1763 = vpop.permute.xlu0 %1762
          %1766 = vset.pattern.permute.xlu0 0
          %1767 = vperm.xlu0 %1766, %v1617
          %v1768 = vpop.permute.xlu0 %1767
          %1771 = vset.pattern.permute.xlu0 0
          %1772 = vperm.xlu0 %1771, %v1618
          %v1773 = vpop.permute.xlu0 %1772
          %1776 = vset.pattern.permute.xlu0 0
          %1777 = vperm.xlu0 %1776, %v1619
          %v1778 = vpop.permute.xlu0 %1777
          %v1780 = vmul.f32 %v1556, %v1623
          %v1781 = vmul.f32 %v1557, %v1628
          %v1782 = vmul.f32 %v1558, %v1633
          %v1783 = vmul.f32 %v1559, %v1638
          %v1784 = vmul.f32 %v1560, %v1643
          %v1785 = vmul.f32 %v1561, %v1648
          %v1786 = vmul.f32 %v1562, %v1653
          %v1787 = vmul.f32 %v1563, %v1658
          %v1788 = vmul.f32 %v1564, %v1663
          %v1789 = vmul.f32 %v1565, %v1668
          %v1790 = vmul.f32 %v1566, %v1673
          %v1791 = vmul.f32 %v1567, %v1678
          %v1792 = vmul.f32 %v1568, %v1683
          %v1793 = vmul.f32 %v1569, %v1688
          %v1794 = vmul.f32 %v1570, %v1693
          %v1795 = vmul.f32 %v1571, %v1698
          %v1796 = vmul.f32 %v1572, %v1703
          %v1797 = vmul.f32 %v1573, %v1708
          %v1798 = vmul.f32 %v1574, %v1713
          %v1799 = vmul.f32 %v1575, %v1718
          %v1800 = vmul.f32 %v1576, %v1723
          %v1801 = vmul.f32 %v1577, %v1728
          %v1802 = vmul.f32 %v1578, %v1733
          %v1803 = vmul.f32 %v1579, %v1738
          %v1804 = vmul.f32 %v1580, %v1743
          %v1805 = vmul.f32 %v1581, %v1748
          %v1806 = vmul.f32 %v1582, %v1753
          %v1807 = vmul.f32 %v1583, %v1758
          %v1808 = vmul.f32 %v1584, %v1763
          %v1809 = vmul.f32 %v1585, %v1768
          %v1810 = vmul.f32 %v1586, %v1773
          %v1811 = vmul.f32 %v1587, %v1778
          %v1812 = vld [vmem:[%s678] sm:$0xf]
          %v1813 = vld [vmem:[%s678 + $0x4] sm:$0xf]
          %v1814 = vld [vmem:[%s678 + $0x8] sm:$0xf]
          %v1815 = vld [vmem:[%s678 + $0xc] sm:$0xf]
          %v1816 = vld [vmem:[%s678 + $0x10] sm:$0xf]
          %v1817 = vld [vmem:[%s678 + $0x14] sm:$0xf]
          %v1818 = vld [vmem:[%s678 + $0x18] sm:$0xf]
          %v1819 = vld [vmem:[%s678 + $0x1c] sm:$0xf]
          %v1820 = vld [vmem:[%s678 + $0x20] sm:$0xf]
          %v1821 = vld [vmem:[%s678 + $0x24] sm:$0xf]
          %v1822 = vld [vmem:[%s678 + $0x28] sm:$0xf]
          %v1823 = vld [vmem:[%s678 + $0x2c] sm:$0xf]
          %v1824 = vld [vmem:[%s678 + $0x30] sm:$0xf]
          %v1825 = vld [vmem:[%s678 + $0x34] sm:$0xf]
          %v1826 = vld [vmem:[%s678 + $0x38] sm:$0xf]
          %v1827 = vld [vmem:[%s678 + $0x3c] sm:$0xf]
          %v1828 = vld [vmem:[%s678 + $0x40] sm:$0xf]
          %v1829 = vld [vmem:[%s678 + $0x44] sm:$0xf]
          %v1830 = vld [vmem:[%s678 + $0x48] sm:$0xf]
          %v1831 = vld [vmem:[%s678 + $0x4c] sm:$0xf]
          %v1832 = vld [vmem:[%s678 + $0x50] sm:$0xf]
          %v1833 = vld [vmem:[%s678 + $0x54] sm:$0xf]
          %v1834 = vld [vmem:[%s678 + $0x58] sm:$0xf]
          %v1835 = vld [vmem:[%s678 + $0x5c] sm:$0xf]
          %v1836 = vld [vmem:[%s678 + $0x60] sm:$0xf]
          %v1837 = vld [vmem:[%s678 + $0x64] sm:$0xf]
          %v1838 = vld [vmem:[%s678 + $0x68] sm:$0xf]
          %v1839 = vld [vmem:[%s678 + $0x6c] sm:$0xf]
          %v1840 = vld [vmem:[%s678 + $0x70] sm:$0xf]
          %v1841 = vld [vmem:[%s678 + $0x74] sm:$0xf]
          %v1842 = vld [vmem:[%s678 + $0x78] sm:$0xf]
          %v1843 = vld [vmem:[%s678 + $0x7c] sm:$0xf]
          %v1844 = vunpack.c.l.bf16 %v1812
          %v1845 = vunpack.c.l.bf16 %v1813
          %v1846 = vunpack.c.l.bf16 %v1814
          %v1847 = vunpack.c.l.bf16 %v1815
          %v1848 = vunpack.c.l.bf16 %v1816
          %v1849 = vunpack.c.l.bf16 %v1817
          %v1850 = vunpack.c.l.bf16 %v1818
          %v1851 = vunpack.c.l.bf16 %v1819
          %v1852 = vunpack.c.l.bf16 %v1820
          %v1853 = vunpack.c.l.bf16 %v1821
          %v1854 = vunpack.c.l.bf16 %v1822
          %v1855 = vunpack.c.l.bf16 %v1823
          %v1856 = vunpack.c.l.bf16 %v1824
          %v1857 = vunpack.c.l.bf16 %v1825
          %v1858 = vunpack.c.l.bf16 %v1826
          %v1859 = vunpack.c.l.bf16 %v1827
          %v1860 = vunpack.c.l.bf16 %v1828
          %v1861 = vunpack.c.l.bf16 %v1829
          %v1862 = vunpack.c.l.bf16 %v1830
          %v1863 = vunpack.c.l.bf16 %v1831
          %v1864 = vunpack.c.l.bf16 %v1832
          %v1865 = vunpack.c.l.bf16 %v1833
          %v1866 = vunpack.c.l.bf16 %v1834
          %v1867 = vunpack.c.l.bf16 %v1835
          %v1868 = vunpack.c.l.bf16 %v1836
          %v1869 = vunpack.c.l.bf16 %v1837
          %v1870 = vunpack.c.l.bf16 %v1838
          %v1871 = vunpack.c.l.bf16 %v1839
          %v1872 = vunpack.c.l.bf16 %v1840
          %v1873 = vunpack.c.l.bf16 %v1841
          %v1874 = vunpack.c.l.bf16 %v1842
          %v1875 = vunpack.c.l.bf16 %v1843
          %v1876 = vadd.f32 %v1780, %v1844
          %v1877 = vadd.f32 %v1781, %v1845
          %v1878 = vadd.f32 %v1782, %v1846
          %v1879 = vadd.f32 %v1783, %v1847
          %v1880 = vadd.f32 %v1784, %v1848
          %v1881 = vadd.f32 %v1785, %v1849
          %v1882 = vadd.f32 %v1786, %v1850
          %v1883 = vadd.f32 %v1787, %v1851
          %v1884 = vadd.f32 %v1788, %v1852
          %v1885 = vadd.f32 %v1789, %v1853
          %v1886 = vadd.f32 %v1790, %v1854
          %v1887 = vadd.f32 %v1791, %v1855
          %v1888 = vadd.f32 %v1792, %v1856
          %v1889 = vadd.f32 %v1793, %v1857
          %v1890 = vadd.f32 %v1794, %v1858
          %v1891 = vadd.f32 %v1795, %v1859
          %v1892 = vadd.f32 %v1796, %v1860
          %v1893 = vadd.f32 %v1797, %v1861
          %v1894 = vadd.f32 %v1798, %v1862
          %v1895 = vadd.f32 %v1799, %v1863
          %v1896 = vadd.f32 %v1800, %v1864
          %v1897 = vadd.f32 %v1801, %v1865
          %v1898 = vadd.f32 %v1802, %v1866
          %v1899 = vadd.f32 %v1803, %v1867
          %v1900 = vadd.f32 %v1804, %v1868
          %v1901 = vadd.f32 %v1805, %v1869
          %v1902 = vadd.f32 %v1806, %v1870
          %v1903 = vadd.f32 %v1807, %v1871
          %v1904 = vadd.f32 %v1808, %v1872
          %v1905 = vadd.f32 %v1809, %v1873
          %v1906 = vadd.f32 %v1810, %v1874
          %v1907 = vadd.f32 %v1811, %v1875
          %v1908 = vmax.f32 %v1876, 0.0
          %v1909 = vmax.f32 %v1877, 0.0
          %v1910 = vmax.f32 %v1878, 0.0
          %v1911 = vmax.f32 %v1879, 0.0
          %v1912 = vmax.f32 %v1880, 0.0
          %v1913 = vmax.f32 %v1881, 0.0
          %v1914 = vmax.f32 %v1882, 0.0
          %v1915 = vmax.f32 %v1883, 0.0
          %v1916 = vmax.f32 %v1884, 0.0
          %v1917 = vmax.f32 %v1885, 0.0
          %v1918 = vmax.f32 %v1886, 0.0
          %v1919 = vmax.f32 %v1887, 0.0
          %v1920 = vmax.f32 %v1888, 0.0
          %v1921 = vmax.f32 %v1889, 0.0
          %v1922 = vmax.f32 %v1890, 0.0
          %v1923 = vmax.f32 %v1891, 0.0
          %v1924 = vmax.f32 %v1892, 0.0
          %v1925 = vmax.f32 %v1893, 0.0
          %v1926 = vmax.f32 %v1894, 0.0
          %v1927 = vmax.f32 %v1895, 0.0
          %v1928 = vmax.f32 %v1896, 0.0
          %v1929 = vmax.f32 %v1897, 0.0
          %v1930 = vmax.f32 %v1898, 0.0
          %v1931 = vmax.f32 %v1899, 0.0
          %v1932 = vmax.f32 %v1900, 0.0
          %v1933 = vmax.f32 %v1901, 0.0
          %v1934 = vmax.f32 %v1902, 0.0
          %v1935 = vmax.f32 %v1903, 0.0
          %v1936 = vmax.f32 %v1904, 0.0
          %v1937 = vmax.f32 %v1905, 0.0
          %v1938 = vmax.f32 %v1906, 0.0
          %v1939 = vmax.f32 %v1907, 0.0
          %v1940 = vpack.c.bf16 %v1909, %v1908
          %v1941 = vpack.c.bf16 %v1911, %v1910
          %v1942 = vpack.c.bf16 %v1913, %v1912
          %v1943 = vpack.c.bf16 %v1915, %v1914
          %v1944 = vpack.c.bf16 %v1917, %v1916
          %v1945 = vpack.c.bf16 %v1919, %v1918
          %v1946 = vpack.c.bf16 %v1921, %v1920
          %v1947 = vpack.c.bf16 %v1923, %v1922
          %v1948 = vpack.c.bf16 %v1925, %v1924
          %v1949 = vpack.c.bf16 %v1927, %v1926
          %v1950 = vpack.c.bf16 %v1929, %v1928
          %v1951 = vpack.c.bf16 %v1931, %v1930
          %v1952 = vpack.c.bf16 %v1933, %v1932
          %v1953 = vpack.c.bf16 %v1935, %v1934
          %v1954 = vpack.c.bf16 %v1937, %v1936
          %v1955 = vpack.c.bf16 %v1939, %v1938
          %v1972 = vunpack.c.l.b16 %v1940
          %v1973 = vunpack.c.h.b16 %v1940
          %v1974 = vunpack.c.l.b16 %v1941
          %v1975 = vunpack.c.h.b16 %v1941
          %v1976 = vunpack.c.l.b16 %v1942
          %v1977 = vunpack.c.h.b16 %v1942
          %v1978 = vunpack.c.l.b16 %v1943
          %v1979 = vunpack.c.h.b16 %v1943
          %v1980 = vunpack.c.l.b16 %v1944
          %v1981 = vunpack.c.h.b16 %v1944
          %v1982 = vunpack.c.l.b16 %v1945
          %v1983 = vunpack.c.h.b16 %v1945
          %v1984 = vunpack.c.l.b16 %v1946
          %v1985 = vunpack.c.h.b16 %v1946
          %v1986 = vunpack.c.l.b16 %v1947
          %v1987 = vunpack.c.h.b16 %v1947
          %v1988 = vunpack.c.l.b16 %v1948
          %v1989 = vunpack.c.h.b16 %v1948
          %v1990 = vunpack.c.l.b16 %v1949
          %v1991 = vunpack.c.h.b16 %v1949
          %v1992 = vunpack.c.l.b16 %v1950
          %v1993 = vunpack.c.h.b16 %v1950
          %v1994 = vunpack.c.l.b16 %v1951
          %v1995 = vunpack.c.h.b16 %v1951
          %v1996 = vunpack.c.l.b16 %v1952
          %v1997 = vunpack.c.h.b16 %v1952
          %v1998 = vunpack.c.l.b16 %v1953
          %v1999 = vunpack.c.h.b16 %v1953
          %v2000 = vunpack.c.l.b16 %v1954
          %v2001 = vunpack.c.h.b16 %v1954
          %v2002 = vunpack.c.l.b16 %v1955
          %v2003 = vunpack.c.h.b16 %v1955
          %v2004 = vpack.c.b16 %v1972, %v1972
          %v2005 = vpack.c.b16 %v1973, %v1973
          %v2006 = vpack.c.b16 %v1974, %v1974
          %v2007 = vpack.c.b16 %v1975, %v1975
          %v2008 = vpack.c.b16 %v1976, %v1976
          %v2009 = vpack.c.b16 %v1977, %v1977
          %v2010 = vpack.c.b16 %v1978, %v1978
          %v2011 = vpack.c.b16 %v1979, %v1979
          %v2012 = vpack.c.b16 %v1980, %v1980
          %v2013 = vpack.c.b16 %v1981, %v1981
          %v2014 = vpack.c.b16 %v1982, %v1982
          %v2015 = vpack.c.b16 %v1983, %v1983
          %v2016 = vpack.c.b16 %v1984, %v1984
          %v2017 = vpack.c.b16 %v1985, %v1985
          %v2018 = vpack.c.b16 %v1986, %v1986
          %v2019 = vpack.c.b16 %v1987, %v1987
          %v2020 = vpack.c.b16 %v1988, %v1988
          %v2021 = vpack.c.b16 %v1989, %v1989
          %v2022 = vpack.c.b16 %v1990, %v1990
          %v2023 = vpack.c.b16 %v1991, %v1991
          %v2024 = vpack.c.b16 %v1992, %v1992
          %v2025 = vpack.c.b16 %v1993, %v1993
          %v2026 = vpack.c.b16 %v1994, %v1994
          %v2027 = vpack.c.b16 %v1995, %v1995
          %v2028 = vpack.c.b16 %v1996, %v1996
          %v2029 = vpack.c.b16 %v1997, %v1997
          %v2030 = vpack.c.b16 %v1998, %v1998
          %v2031 = vpack.c.b16 %v1999, %v1999
          %v2032 = vpack.c.b16 %v2000, %v2000
          %v2033 = vpack.c.b16 %v2001, %v2001
          %v2034 = vpack.c.b16 %v2002, %v2002
          %v2035 = vpack.c.b16 %v2003, %v2003
          %2068 = vst [vmem:[%s739] sm:$0xf] %v2004
          %2069 = vst [vmem:[%s739 + $0x4] sm:$0xf] %v2005
          %2070 = vst [vmem:[%s739 + $0x8] sm:$0xf] %v2006
          %2071 = vst [vmem:[%s739 + $0xc] sm:$0xf] %v2007
          %2072 = vst [vmem:[%s739 + $0x10] sm:$0xf] %v2008
          %2073 = vst [vmem:[%s739 + $0x14] sm:$0xf] %v2009
          %2074 = vst [vmem:[%s739 + $0x18] sm:$0xf] %v2010
          %2075 = vst [vmem:[%s739 + $0x1c] sm:$0xf] %v2011
          %2076 = vst [vmem:[%s739 + $0x20] sm:$0xf] %v2012
          %2077 = vst [vmem:[%s739 + $0x24] sm:$0xf] %v2013
          %2078 = vst [vmem:[%s739 + $0x28] sm:$0xf] %v2014
          %2079 = vst [vmem:[%s739 + $0x2c] sm:$0xf] %v2015
          %2080 = vst [vmem:[%s739 + $0x30] sm:$0xf] %v2016
          %2081 = vst [vmem:[%s739 + $0x34] sm:$0xf] %v2017
          %2082 = vst [vmem:[%s739 + $0x38] sm:$0xf] %v2018
          %2083 = vst [vmem:[%s739 + $0x3c] sm:$0xf] %v2019
          %2084 = vst [vmem:[%s739 + $0x40] sm:$0xf] %v2020
          %2085 = vst [vmem:[%s739 + $0x44] sm:$0xf] %v2021
          %2086 = vst [vmem:[%s739 + $0x48] sm:$0xf] %v2022
          %2087 = vst [vmem:[%s739 + $0x4c] sm:$0xf] %v2023
          %2088 = vst [vmem:[%s739 + $0x50] sm:$0xf] %v2024
          %2089 = vst [vmem:[%s739 + $0x54] sm:$0xf] %v2025
          %2090 = vst [vmem:[%s739 + $0x58] sm:$0xf] %v2026
          %2091 = vst [vmem:[%s739 + $0x5c] sm:$0xf] %v2027
          %2092 = vst [vmem:[%s739 + $0x60] sm:$0xf] %v2028
          %2093 = vst [vmem:[%s739 + $0x64] sm:$0xf] %v2029
          %2094 = vst [vmem:[%s739 + $0x68] sm:$0xf] %v2030
          %2095 = vst [vmem:[%s739 + $0x6c] sm:$0xf] %v2031
          %2096 = vst [vmem:[%s739 + $0x70] sm:$0xf] %v2032
          %2097 = vst [vmem:[%s739 + $0x74] sm:$0xf] %v2033
          %2098 = vst [vmem:[%s739 + $0x78] sm:$0xf] %v2034
          %2099 = vst [vmem:[%s739 + $0x7c] sm:$0xf] %v2035
        $region126: #{graphsage_forward.7} parent=109 // pred_fallthru
          _
        %s2100 = smul.u32 32, %s19
        %p2101 = scmp.lt.s32.totalorder %s2100, 63
        %s2102 = scalar_select %p2101, %s2100, 63
        %s2103 = smul.addr %s2102, 4
        %s2104 = scalar_lea.vmem %s4, %s2103
        // Predicated region
        $region127: #{graphsage_forward.7} parent=109 // pred_check
          %p2105 = pneg %p146
        $region128: #{graphsage_forward.7} parent=109 // pred_check_branch
          %2107 = sbr.rel (%p2105) target = $region130
        $region129: #{graphsage_forward.7} parent=109 // pred_region
          %s2108 = smul.u32 32, %s19
        $region130: #{graphsage_forward.7} parent=109 // pred_fallthru
          _
      $region110: #{graphsage_forward.7} parent=5 // pred_fallthru
        _
      %p2109 = scmp.le.s32.totalorder 2, %s10
      // Predicated region
      $region131: #{graphsage_forward.7} parent=5 // pred_check
        %p2110 = pneg %p2109
      $region132: #{graphsage_forward.7} parent=5 // pred_check_branch
        %2112 = sbr.rel (%p2110) target = $region134
      $region133: #{graphsage_forward.7} parent=5 // pred_region
        %s2113 = ssub.s32 %s10, 2
        // Predicated region
        $region135: #{graphsage_forward.7} parent=133 // pred_check
          %p2114 = pneg %p152
        $region136: #{graphsage_forward.7} parent=133 // pred_check_branch
          %2116 = sbr.rel (%p2114) target = $region138
        $region137: #{graphsage_forward.7} parent=133 // pred_region
          %s2117 = smul.u32 32, %s21
          %p2118 = scmp.lt.s32.totalorder %s2117, 63
          %s2119 = scalar_select %p2118, %s2117, 63
          %s2120 = smul.addr %s2119, 4
          %s2121 = scalar_lea.vmem %s4, %s2120
        $region138: #{graphsage_forward.7} parent=133 // pred_fallthru
          _
      $region134: #{graphsage_forward.7} parent=5 // pred_fallthru
        _
    $region6: #{graphsage_forward.7} parent=1 // loop_footer
      %s14 = sadd.s32 1, %s10
    $region7: #{graphsage_forward.7} parent=1 // loop_footer_branch
      %9 = sbr.rel target = $region3
    $region8: #{graphsage_forward.7} parent=1 // loop_exit
      _

</llo_original>
